<compile_context>
chip_gen: v5e
topology: v5e:2x2
jax: 0.10.0
libtpu: 0.0.40
codegen_flags: <defaults>
</compile_context>

<pallas_src>
import functools

import jax
import jax.numpy as jnp
import numpy as np
from jax.experimental import pallas as pl
from jax.experimental.pallas import tpu as pltpu

IN_FEATURES = 16      # must be divisible by 8 (three 2x pools / three 2x upsamples)
HIDDEN_DIM = 32
NUM_CHANNEL = 8
BATCH = 2

_VMEM = pl.BlockSpec(memory_space=pltpu.MemorySpace.VMEM)


# ----------------------------------------------------------------------------
# One-time host-side parameter preprocessing (layout folding, 0/1 structure mats)
# ----------------------------------------------------------------------------
def _conv_tap_geometry(h, w):
    """Lane-roll amounts + destination-validity masks for the 9 taps of a 3x3/pad-1 conv."""
    shifts, masks = [], np.zeros((9, 1, h * w), np.float32)
    t = 0
    for ky in range(3):
        for kx in range(3):
            dy, dx = ky - 1, kx - 1
            shifts.append((-(dy * w + dx)) % (h * w))
            for y in range(h):
                for x in range(w):
                    if 0 <= y + dy < h and 0 <= x + dx < w:
                        masks[t, 0, y * w + x] = 1.0
            t += 1
    return tuple(shifts), masks


def _shift_mask_mats(h, w):
    """(9, hw, hw) right-multiply matrices: (A @ S_t)[:, y*w+x] = A[:, (y+dy)*w+(x+dx)] or 0."""
    n = h * w
    sm = np.zeros((9, n, n), np.float32)
    t = 0
    for ky in range(3):
        for kx in range(3):
            dy, dx = ky - 1, kx - 1
            for y in range(h):
                for x in range(w):
                    yy, xx = y + dy, x + dx
                    if 0 <= yy < h and 0 <= xx < w:
                        sm[t, yy * w + xx, y * w + x] = 1.0
            t += 1
    return sm


def _pool_select_mats(h, w):
    """(4, hw, hw/4): candidate q of the 2x2 pool, (Y @ P_q)[:, yo*wo+xo] = Y[:, (2yo+qy)*w+2xo+qx]."""
    ho, wo = h // 2, w // 2
    mats = np.zeros((4, h * w, ho * wo), np.float32)
    for q in range(4):
        qy, qx = divmod(q, 2)
        for yo in range(ho):
            for xo in range(wo):
                mats[q, (2 * yo + qy) * w + 2 * xo + qx, yo * wo + xo] = 1.0
    return mats


def _channel_mix_mats(wconv, batch):
    """(9, B*Cout, B*Cin) left-multiply per-tap channel mixing = kron(w_tap, I_B)."""
    wc = np.asarray(wconv, np.float32)            # (Cout, Cin, 3, 3)
    out = np.zeros((9, batch * wc.shape[0], batch * wc.shape[1]), np.float32)
    eye = np.eye(batch, dtype=np.float32)
    t = 0
    for ky in range(3):
        for kx in range(3):
            out[t] = np.kron(wc[:, :, ky, kx], eye)
            t += 1
    return out


def _bias_col(bias, batch):
    """(B*Cout, 1) per-row bias for channel-major rows (row = c*B + b)."""
    return np.repeat(np.asarray(bias, np.float32), batch).reshape(-1, 1)


def _enc_fc_mats(wenc, num_channel, fd):
    """(C, fd*fd, hidden): encoder fc weight split per channel (NCHW flatten order c,y,x)."""
    w = np.asarray(wenc, np.float32)              # (hidden, C*fd*fd)
    out = np.zeros((num_channel, fd * fd, w.shape[0]), np.float32)
    for c in range(num_channel):
        out[c] = w[:, c * fd * fd:(c + 1) * fd * fd].T
    return out


def _tconv_as_matrix(wt, h, w):
    """(Cin*h*w, Cout*2h*2w) dense matrix of a 2x2/stride-2 ConvTranspose2d, pixel-shuffle folded in."""
    wt = np.asarray(wt, np.float32)               # (Cin, Cout, 2, 2)
    cin, cout = wt.shape[0], wt.shape[1]
    big = np.zeros((cin * h * w, cout * 4 * h * w), np.float32)
    for i in range(cin):
        for o in range(cout):
            for ky in range(2):
                for kx in range(2):
                    v = wt[i, o, ky, kx]
                    for y in range(h):
                        for x in range(w):
                            big[i * h * w + y * w + x,
                                o * 4 * h * w + (2 * y + ky) * 2 * w + (2 * x + kx)] = v
    return big


def _tconv_bias_row(bias, h2w2):
    return np.repeat(np.asarray(bias, np.float32), h2w2).reshape(1, -1)


def preprocess_params(params, *, batch=BATCH, in_features=IN_FEATURES, num_channel=NUM_CHANNEL):
    f, c = in_features, num_channel
    fd = f // 8
    shifts1, masks1 = _conv_tap_geometry(f, f)

    l1 = _channel_mix_mats(params["conv1_w"], batch)                    # (9, B*C, B)
    l2 = _channel_mix_mats(params["conv2_w"], batch)                    # (9, B*C, B*C)
    l3 = _channel_mix_mats(params["conv3_w"], batch)

    # encoder-fc o decoder-fc o t_conv1 folding (three linear maps in a row).
    wtb1 = _tconv_as_matrix(params["tconv1_w"], fd, fd)                 # (32, 128)
    btb1 = _tconv_bias_row(params["tconv1_b"], (2 * fd) ** 2)           # (1, 128)
    wdec_t = np.asarray(params["dec_fc_w"], np.float32).T               # (hidden, 32)
    bdec = np.asarray(params["dec_fc_b"], np.float32).reshape(1, -1)    # (1, 32)
    wd1 = wdec_t @ wtb1                                                 # (hidden, 128)
    bd1 = bdec @ wtb1 + btb1                                            # (1, 128)
    wenc = _enc_fc_mats(params["enc_fc_w"], c, fd)                      # (C, fd*fd, hidden)
    benc = np.asarray(params["enc_fc_b"], np.float32).reshape(1, -1)    # (1, hidden)
    wcomb = np.einsum("cph,hk->cpk", wenc, wd1)                         # (C, fd*fd, 128)
    bcomb = benc @ wd1 + bd1                                            # (1, 128)

    prep = {
        "shifts1": shifts1,                                             # python ints (static)
        "lcat1": np.concatenate(list(l1), axis=1),                      # (B*C, 9*B)
        "m1": masks1,                                                   # (9, 1, 256)
        "b1": _bias_col(params["conv1_b"], batch),                      # (B*C, 1)
        "pcat1": np.concatenate(list(_pool_select_mats(f, f)), axis=1),             # (256, 256)
        "lv2": np.concatenate(list(l2), axis=0),                        # (9*B*C, B*C)
        "s2": _shift_mask_mats(f // 2, f // 2),                         # (9, 64, 64)
        "b2": _bias_col(params["conv2_b"], batch),
        "pcat2": np.concatenate(list(_pool_select_mats(f // 2, f // 2)), axis=1),    # (64, 64)
        "lv3": np.concatenate(list(l3), axis=0),                        # (9*B*C, B*C)
        "s3": _shift_mask_mats(f // 4, f // 4),                         # (9, 16, 16)
        "b3": _bias_col(params["conv3_b"], batch),
        "pcat3": np.concatenate(list(_pool_select_mats(f // 4, f // 4)), axis=1),    # (16, 16)
        "wcomb": wcomb,                                                 # (C, 4, 128)
        "bcomb": bcomb,                                                 # (1, 128)
        "wt2": _tconv_as_matrix(params["tconv2_w"], 2 * fd, 2 * fd),    # (128, 512)
        "bt2": _tconv_bias_row(params["tconv2_b"], (4 * fd) ** 2),
        "wt3": _tconv_as_matrix(params["tconv3_w"], 4 * fd, 4 * fd),    # (512, 256)
        "bt3": _tconv_bias_row(params["tconv3_b"], (8 * fd) ** 2),
    }
    return {k: (v if k == "shifts1" else jnp.asarray(v, jnp.float32)) for k, v in prep.items()}


# ----------------------------------------------------------------------------
# Fused Pallas kernel: whole forward pass, everything VMEM-resident
# ----------------------------------------------------------------------------
def _fused_geom_ae_kernel(
        x_ref,
        lcat1_ref, m1_ref, b1_ref, pcat1_ref,
        lv2_ref, s2_ref, b2_ref, pcat2_ref,
        lv3_ref, s3_ref, b3_ref, pcat3_ref,
        wcomb_ref, bcomb_ref, wt2_ref, bt2_ref, wt3_ref, bt3_ref,
        o_ref,
        *, shifts1, num_channel, batch):
    dot = functools.partial(jnp.dot, preferred_element_type=jnp.float32)
    bc = batch * num_channel

    def pool2x2_relu(y, pcat_ref):
        # one matmul computes all four 2x2-window candidates side by side in
        # lane blocks; max over the 4 blocks, then ReLU (VPU work only).
        hwo = y.shape[1] // 4
        m = dot(y, pcat_ref[...])                            # (B*C, HW)
        c0, c1 = m[:, 0:hwo], m[:, hwo:2 * hwo]
        c2, c3 = m[:, 2 * hwo:3 * hwo], m[:, 3 * hwo:4 * hwo]
        return jnp.maximum(jnp.maximum(jnp.maximum(c0, c1), jnp.maximum(c2, c3)), 0.0)

    # --- conv1: 3x3/pad-1 taps via lane rolls (XLU) + border masks (VPU); the 9
    #     tap copies are stacked on the contraction axis -> ONE channel-mix matmul.
    x = x_ref[...]                                           # (B, 256), lanes = y*16+x
    taps = []
    for t in range(9):
        taps.append(x if shifts1[t] == 0
                    else m1_ref[t] * pltpu.roll(x, shift=shifts1[t], axis=1))
    xt = jnp.concatenate(taps, axis=0)                       # (9*B, 256)
    y = b1_ref[...] + dot(lcat1_ref[...], xt)                # (B*C, 256)
    a = pool2x2_relu(y, pcat1_ref)                           # (B*C, 64)

    # --- conv2 / conv3: channel mixing for all 9 taps in one matmul (stacked
    #     kron(w_tap, I_B)), then one small shift+border matmul per tap.
    def conv_pool(a, lv_ref, s_ref, b_ref, pcat_ref):
        bbig = dot(lv_ref[...], a)                           # (9*B*C, HW)
        y = b_ref[...]
        for t in range(9):
            y = y + dot(bbig[t * bc:(t + 1) * bc, :], s_ref[t])
        return pool2x2_relu(y, pcat_ref)

    a = conv_pool(a, lv2_ref, s2_ref, b2_ref, pcat2_ref)     # (B*C, 16)
    a = conv_pool(a, lv3_ref, s3_ref, b3_ref, pcat3_ref)     # (B*C, 4)

    # TODO(synk): F.dropout depends on self.training (random in train mode);
    # implemented as eval-mode identity for determinism.

    # --- encoder fc + decoder fc + t_conv1 folded into one per-channel matrix
    #     (no nonlinearity between the three linear maps in the original module).
    d = bcomb_ref[...]                                       # (1, 128) -> broadcasts on first add
    for c in range(num_channel):
        d = d + dot(a[c * batch:(c + 1) * batch, :], wcomb_ref[c])   # (B, 4) @ (4, 128)
    d = jnp.maximum(d, 0.0)                                  # relu(t_conv1(...)), (B, 128)

    # --- remaining decoder: each t_conv (+ 2x2 pixel shuffle) is one dense
    #     lane-layout matrix -> the final store is a lane-dense (B, 256) block.
    d = jnp.maximum(dot(d, wt2_ref[...]) + bt2_ref[...], 0.0)        # (B, 512)
    logits = dot(d, wt3_ref[...]) + bt3_ref[...]                     # (B, 256)
    o_ref[...] = pl.reciprocal(1.0 + jnp.exp(-logits), approx=False).astype(o_ref.dtype)


def geom_autoencoder_forward(x, prep):
    operands = [
        x,
        prep["lcat1"], prep["m1"], prep["b1"], prep["pcat1"],
        prep["lv2"], prep["s2"], prep["b2"], prep["pcat2"],
        prep["lv3"], prep["s3"], prep["b3"], prep["pcat3"],
        prep["wcomb"], prep["bcomb"], prep["wt2"], prep["bt2"], prep["wt3"], prep["bt3"],
    ]
    kernel = functools.partial(
        _fused_geom_ae_kernel,
        shifts1=prep["shifts1"],
        num_channel=NUM_CHANNEL,
        batch=x.shape[0],
    )
    # Total footprint (params + activations) is ~1.5 MiB -> no grid / no tiling
    # needed; a batch-parallel grid would only matter for much larger BATCH.
    return pl.pallas_call(
        kernel,
        out_shape=jax.ShapeDtypeStruct((x.shape[0], IN_FEATURES * IN_FEATURES), jnp.float32),
        in_specs=[_VMEM] * len(operands),
        out_specs=_VMEM,
    )(*operands)


# ----------------------------------------------------------------------------
# Deterministic synthetic parameters (PyTorch shape conventions)
# ----------------------------------------------------------------------------
def init_params(key):
    c = NUM_CHANNEL
    fd = IN_FEATURES // 8
    shapes = {
        "conv1_w": (c, 1, 3, 3), "conv1_b": (c,),
        "conv2_w": (c, c, 3, 3), "conv2_b": (c,),
        "conv3_w": (c, c, 3, 3), "conv3_b": (c,),
        "enc_fc_w": (HIDDEN_DIM, fd * fd * c), "enc_fc_b": (HIDDEN_DIM,),
        "dec_fc_w": (fd * fd * c, HIDDEN_DIM), "dec_fc_b": (fd * fd * c,),
        "tconv1_w": (c, c, 2, 2), "tconv1_b": (c,),
        "tconv2_w": (c, c, 2, 2), "tconv2_b": (c,),
        "tconv3_w": (c, 1, 2, 2), "tconv3_b": (1,),
    }
    fan_in = {
        "conv1": 1 * 9, "conv2": c * 9, "conv3": c * 9,
        "enc_fc": fd * fd * c, "dec_fc": HIDDEN_DIM,
        "tconv1": c * 4, "tconv2": c * 4, "tconv3": c * 4,
    }
    names = sorted(shapes)
    keys = jax.random.split(key, len(names))
    params = {}
    for k, name in zip(keys, names):
        layer = name.rsplit("_", 1)[0]
        scale = float(fan_in[layer]) ** -0.5
        params[name] = scale * jax.random.normal(k, shapes[name], dtype=jnp.float32)
    return params


# ----------------------------------------------------------------------------
# Pure-JAX reference (mirrors the PyTorch NCHW forward) for validation
# ----------------------------------------------------------------------------
def reference_forward(x, p):
    hi = jax.lax.Precision.HIGHEST
    b = x.shape[0]
    f = IN_FEATURES
    c = NUM_CHANNEL
    fd = f // 8

    def conv3x3(h, w, bias):
        y = jax.lax.conv_general_dilated(
            h, w, window_strides=(1, 1), padding=((1, 1), (1, 1)),
            dimension_numbers=("NCHW", "OIHW", "NCHW"), precision=hi)
        return y + bias[None, :, None, None]

    def maxpool2(h):
        bb, cc, hh, ww = h.shape
        return h.reshape(bb, cc, hh // 2, 2, ww // 2, 2).max(axis=(3, 5))

    def tconv2x2(h, w, bias):
        y = jnp.einsum("bihw,iokl->bohkwl", h, w, precision=hi)
        bb, co, hh, _, ww, _ = y.shape
        return y.reshape(bb, co, 2 * hh, 2 * ww) + bias[None, :, None, None]

    relu = jax.nn.relu
    h = x.reshape(b, 1, f, f)
    h = relu(maxpool2(conv3x3(h, p["conv1_w"], p["conv1_b"])))
    h = relu(maxpool2(conv3x3(h, p["conv2_w"], p["conv2_b"])))
    h = relu(maxpool2(conv3x3(h, p["conv3_w"], p["conv3_b"])))
    h = h.reshape(b, c * fd * fd)
    z = jnp.dot(h, p["enc_fc_w"].T, precision=hi) + p["enc_fc_b"]
    d = jnp.dot(z, p["dec_fc_w"].T, precision=hi) + p["dec_fc_b"]
    d = d.reshape(b, c, fd, fd)
    d = relu(tconv2x2(d, p["tconv1_w"], p["tconv1_b"]))
    d = relu(tconv2x2(d, p["tconv2_w"], p["tconv2_b"]))
    d = jax.nn.sigmoid(tconv2x2(d, p["tconv3_w"], p["tconv3_b"]))
    return d.reshape(b, f * f)


if __name__ == "__main__":
    key = jax.random.PRNGKey(0)
    pkey, xkey = jax.random.split(key)
    params = init_params(pkey)
    x = jax.random.uniform(xkey, (BATCH, IN_FEATURES * IN_FEATURES), dtype=jnp.float32)

    prep = preprocess_params(params)              # one-time weight/layout preprocessing
    out = jax.block_until_ready(geom_autoencoder_forward(x, prep))
    assert out.shape == (BATCH, IN_FEATURES * IN_FEATURES), out.shape

    ref = jax.block_until_ready(reference_forward(x, params))
    max_err = float(jnp.max(jnp.abs(out - ref)))
    assert max_err < 2e-3, f"mismatch vs reference: {max_err}"

    print("KERNEL_OK")
</pallas_src>

<mosaic_0001>
module attributes {stable_mosaic.version = 11 : i64} {
  func.func @_fused_geom_ae_kernel(%arg0: memref<2x256xf32, #tpu.memory_space<vmem>>, %arg1: memref<16x18xf32, #tpu.memory_space<vmem>>, %arg2: memref<9x1x256xf32, #tpu.memory_space<vmem>>, %arg3: memref<16x1xf32, #tpu.memory_space<vmem>>, %arg4: memref<256x256xf32, #tpu.memory_space<vmem>>, %arg5: memref<144x16xf32, #tpu.memory_space<vmem>>, %arg6: memref<9x64x64xf32, #tpu.memory_space<vmem>>, %arg7: memref<16x1xf32, #tpu.memory_space<vmem>>, %arg8: memref<64x64xf32, #tpu.memory_space<vmem>>, %arg9: memref<144x16xf32, #tpu.memory_space<vmem>>, %arg10: memref<9x16x16xf32, #tpu.memory_space<vmem>>, %arg11: memref<16x1xf32, #tpu.memory_space<vmem>>, %arg12: memref<16x16xf32, #tpu.memory_space<vmem>>, %arg13: memref<8x4x128xf32, #tpu.memory_space<vmem>>, %arg14: memref<1x128xf32, #tpu.memory_space<vmem>>, %arg15: memref<128x512xf32, #tpu.memory_space<vmem>>, %arg16: memref<1x512xf32, #tpu.memory_space<vmem>>, %arg17: memref<512x256xf32, #tpu.memory_space<vmem>>, %arg18: memref<1x256xf32, #tpu.memory_space<vmem>>, %arg19: memref<2x256xf32, #tpu.memory_space<vmem>>) attributes {dimension_semantics = [], scalar_prefetch = 0 : i64, scratch_operands = 0 : i64, tpu.core_type = #tpu.core_type<tc>} {
    %c0 = arith.constant 0 : index
    %c0_0 = arith.constant 0 : index
    %0 = vector.load %arg0[%c0, %c0_0] : memref<2x256xf32, #tpu.memory_space<vmem>>, vector<2x256xf32>
    %c0_1 = arith.constant 0 : index
    %c0_2 = arith.constant 0 : index
    %c0_3 = arith.constant 0 : index
    %1 = vector.load %arg2[%c0_1, %c0_2, %c0_3] : memref<9x1x256xf32, #tpu.memory_space<vmem>>, vector<1x1x256xf32>
    %2 = vector.shape_cast %1 : vector<1x1x256xf32> to vector<1x256xf32>
    %c17_i32 = arith.constant 17 : i32
    %3 = tpu.dynamic_rotate %0 by %c17_i32 dim 1 : vector<2x256xf32>, i32 -> vector<2x256xf32>
    %4 = vector.broadcast %2 : vector<1x256xf32> to vector<2x256xf32>
    %5 = arith.mulf %4, %3 : vector<2x256xf32>
    %c1 = arith.constant 1 : index
    %c0_4 = arith.constant 0 : index
    %c0_5 = arith.constant 0 : index
    %6 = vector.load %arg2[%c1, %c0_4, %c0_5] : memref<9x1x256xf32, #tpu.memory_space<vmem>>, vector<1x1x256xf32>
    %7 = vector.shape_cast %6 : vector<1x1x256xf32> to vector<1x256xf32>
    %c16_i32 = arith.constant 16 : i32
    %8 = tpu.dynamic_rotate %0 by %c16_i32 dim 1 : vector<2x256xf32>, i32 -> vector<2x256xf32>
    %9 = vector.broadcast %7 : vector<1x256xf32> to vector<2x256xf32>
    %10 = arith.mulf %9, %8 : vector<2x256xf32>
    %c2 = arith.constant 2 : index
    %c0_6 = arith.constant 0 : index
    %c0_7 = arith.constant 0 : index
    %11 = vector.load %arg2[%c2, %c0_6, %c0_7] : memref<9x1x256xf32, #tpu.memory_space<vmem>>, vector<1x1x256xf32>
    %12 = vector.shape_cast %11 : vector<1x1x256xf32> to vector<1x256xf32>
    %c15_i32 = arith.constant 15 : i32
    %13 = tpu.dynamic_rotate %0 by %c15_i32 dim 1 : vector<2x256xf32>, i32 -> vector<2x256xf32>
    %14 = vector.broadcast %12 : vector<1x256xf32> to vector<2x256xf32>
    %15 = arith.mulf %14, %13 : vector<2x256xf32>
    %c3 = arith.constant 3 : index
    %c0_8 = arith.constant 0 : index
    %c0_9 = arith.constant 0 : index
    %16 = vector.load %arg2[%c3, %c0_8, %c0_9] : memref<9x1x256xf32, #tpu.memory_space<vmem>>, vector<1x1x256xf32>
    %17 = vector.shape_cast %16 : vector<1x1x256xf32> to vector<1x256xf32>
    %c1_i32 = arith.constant 1 : i32
    %18 = tpu.dynamic_rotate %0 by %c1_i32 dim 1 : vector<2x256xf32>, i32 -> vector<2x256xf32>
    %19 = vector.broadcast %17 : vector<1x256xf32> to vector<2x256xf32>
    %20 = arith.mulf %19, %18 : vector<2x256xf32>
    %c5 = arith.constant 5 : index
    %c0_10 = arith.constant 0 : index
    %c0_11 = arith.constant 0 : index
    %21 = vector.load %arg2[%c5, %c0_10, %c0_11] : memref<9x1x256xf32, #tpu.memory_space<vmem>>, vector<1x1x256xf32>
    %22 = vector.shape_cast %21 : vector<1x1x256xf32> to vector<1x256xf32>
    %c255_i32 = arith.constant 255 : i32
    %23 = tpu.dynamic_rotate %0 by %c255_i32 dim 1 : vector<2x256xf32>, i32 -> vector<2x256xf32>
    %24 = vector.broadcast %22 : vector<1x256xf32> to vector<2x256xf32>
    %25 = arith.mulf %24, %23 : vector<2x256xf32>
    %c6 = arith.constant 6 : index
    %c0_12 = arith.constant 0 : index
    %c0_13 = arith.constant 0 : index
    %26 = vector.load %arg2[%c6, %c0_12, %c0_13] : memref<9x1x256xf32, #tpu.memory_space<vmem>>, vector<1x1x256xf32>
    %27 = vector.shape_cast %26 : vector<1x1x256xf32> to vector<1x256xf32>
    %c241_i32 = arith.constant 241 : i32
    %28 = tpu.dynamic_rotate %0 by %c241_i32 dim 1 : vector<2x256xf32>, i32 -> vector<2x256xf32>
    %29 = vector.broadcast %27 : vector<1x256xf32> to vector<2x256xf32>
    %30 = arith.mulf %29, %28 : vector<2x256xf32>
    %c7 = arith.constant 7 : index
    %c0_14 = arith.constant 0 : index
    %c0_15 = arith.constant 0 : index
    %31 = vector.load %arg2[%c7, %c0_14, %c0_15] : memref<9x1x256xf32, #tpu.memory_space<vmem>>, vector<1x1x256xf32>
    %32 = vector.shape_cast %31 : vector<1x1x256xf32> to vector<1x256xf32>
    %c240_i32 = arith.constant 240 : i32
    %33 = tpu.dynamic_rotate %0 by %c240_i32 dim 1 : vector<2x256xf32>, i32 -> vector<2x256xf32>
    %34 = vector.broadcast %32 : vector<1x256xf32> to vector<2x256xf32>
    %35 = arith.mulf %34, %33 : vector<2x256xf32>
    %c8 = arith.constant 8 : index
    %c0_16 = arith.constant 0 : index
    %c0_17 = arith.constant 0 : index
    %36 = vector.load %arg2[%c8, %c0_16, %c0_17] : memref<9x1x256xf32, #tpu.memory_space<vmem>>, vector<1x1x256xf32>
    %37 = vector.shape_cast %36 : vector<1x1x256xf32> to vector<1x256xf32>
    %c239_i32 = arith.constant 239 : i32
    %38 = tpu.dynamic_rotate %0 by %c239_i32 dim 1 : vector<2x256xf32>, i32 -> vector<2x256xf32>
    %39 = vector.broadcast %37 : vector<1x256xf32> to vector<2x256xf32>
    %40 = arith.mulf %39, %38 : vector<2x256xf32>
    %41 = tpu.concatenate %5, %10, %15, %20, %0, %25, %30, %35, %40 in 0 : vector<2x256xf32>, vector<2x256xf32>, vector<2x256xf32>, vector<2x256xf32>, vector<2x256xf32>, vector<2x256xf32>, vector<2x256xf32>, vector<2x256xf32>, vector<2x256xf32> -> vector<18x256xf32>
    %c0_18 = arith.constant 0 : index
    %c0_19 = arith.constant 0 : index
    %42 = vector.load %arg3[%c0_18, %c0_19] : memref<16x1xf32, #tpu.memory_space<vmem>>, vector<16x1xf32>
    %c0_20 = arith.constant 0 : index
    %c0_21 = arith.constant 0 : index
    %43 = vector.load %arg1[%c0_20, %c0_21] : memref<16x18xf32, #tpu.memory_space<vmem>>, vector<16x18xf32>
    %cst = arith.constant dense<0.000000e+00> : vector<16x256xf32>
    %44 = tpu.matmul %43, %41, %cst {dimension_numbers = #tpu.dot_dimension_numbers<[1], [0], [0], [1], [0, 0, 1, 1], [], []>} : vector<16x18xf32>, vector<18x256xf32>, vector<16x256xf32> -> vector<16x256xf32>
    %45 = vector.broadcast %42 : vector<16x1xf32> to vector<16x256xf32>
    %46 = arith.addf %45, %44 : vector<16x256xf32>
    %c0_22 = arith.constant 0 : index
    %c0_23 = arith.constant 0 : index
    %47 = vector.load %arg4[%c0_22, %c0_23] : memref<256x256xf32, #tpu.memory_space<vmem>>, vector<256x256xf32>
    %cst_24 = arith.constant dense<0.000000e+00> : vector<16x256xf32>
    %48 = tpu.matmul %46, %47, %cst_24 {dimension_numbers = #tpu.dot_dimension_numbers<[1], [0], [0], [1], [0, 0, 1, 1], [], []>} : vector<16x256xf32>, vector<256x256xf32>, vector<16x256xf32> -> vector<16x256xf32>
    %49 = vector.extract_strided_slice %48 {offsets = [0, 0], sizes = [16, 64], strides = [1, 1]} : vector<16x256xf32> to vector<16x64xf32>
    %50 = vector.extract_strided_slice %48 {offsets = [0, 64], sizes = [16, 64], strides = [1, 1]} : vector<16x256xf32> to vector<16x64xf32>
    %51 = vector.extract_strided_slice %48 {offsets = [0, 128], sizes = [16, 64], strides = [1, 1]} : vector<16x256xf32> to vector<16x64xf32>
    %52 = vector.extract_strided_slice %48 {offsets = [0, 192], sizes = [16, 64], strides = [1, 1]} : vector<16x256xf32> to vector<16x64xf32>
    %53 = arith.maximumf %49, %50 : vector<16x64xf32>
    %54 = arith.maximumf %51, %52 : vector<16x64xf32>
    %55 = arith.maximumf %53, %54 : vector<16x64xf32>
    %cst_25 = arith.constant 0.000000e+00 : f32
    %56 = vector.broadcast %cst_25 : f32 to vector<16x64xf32>
    %57 = arith.maximumf %55, %56 : vector<16x64xf32>
    %c0_26 = arith.constant 0 : index
    %c0_27 = arith.constant 0 : index
    %58 = vector.load %arg5[%c0_26, %c0_27] : memref<144x16xf32, #tpu.memory_space<vmem>>, vector<144x16xf32>
    %cst_28 = arith.constant dense<0.000000e+00> : vector<144x64xf32>
    %59 = tpu.matmul %58, %57, %cst_28 {dimension_numbers = #tpu.dot_dimension_numbers<[1], [0], [0], [1], [0, 0, 1, 1], [], []>} : vector<144x16xf32>, vector<16x64xf32>, vector<144x64xf32> -> vector<144x64xf32>
    %c0_29 = arith.constant 0 : index
    %c0_30 = arith.constant 0 : index
    %60 = vector.load %arg7[%c0_29, %c0_30] : memref<16x1xf32, #tpu.memory_space<vmem>>, vector<16x1xf32>
    %61 = vector.extract_strided_slice %59 {offsets = [0, 0], sizes = [16, 64], strides = [1, 1]} : vector<144x64xf32> to vector<16x64xf32>
    %c0_31 = arith.constant 0 : index
    %c0_32 = arith.constant 0 : index
    %c0_33 = arith.constant 0 : index
    %62 = vector.load %arg6[%c0_31, %c0_32, %c0_33] : memref<9x64x64xf32, #tpu.memory_space<vmem>>, vector<1x64x64xf32>
    %63 = vector.shape_cast %62 : vector<1x64x64xf32> to vector<64x64xf32>
    %cst_34 = arith.constant dense<0.000000e+00> : vector<16x64xf32>
    %64 = tpu.matmul %61, %63, %cst_34 {dimension_numbers = #tpu.dot_dimension_numbers<[1], [0], [0], [1], [0, 0, 1, 1], [], []>} : vector<16x64xf32>, vector<64x64xf32>, vector<16x64xf32> -> vector<16x64xf32>
    %65 = vector.broadcast %60 : vector<16x1xf32> to vector<16x64xf32>
    %66 = arith.addf %65, %64 : vector<16x64xf32>
    %67 = vector.extract_strided_slice %59 {offsets = [16, 0], sizes = [16, 64], strides = [1, 1]} : vector<144x64xf32> to vector<16x64xf32>
    %c1_35 = arith.constant 1 : index
    %c0_36 = arith.constant 0 : index
    %c0_37 = arith.constant 0 : index
    %68 = vector.load %arg6[%c1_35, %c0_36, %c0_37] : memref<9x64x64xf32, #tpu.memory_space<vmem>>, vector<1x64x64xf32>
    %69 = vector.shape_cast %68 : vector<1x64x64xf32> to vector<64x64xf32>
    %cst_38 = arith.constant dense<0.000000e+00> : vector<16x64xf32>
    %70 = tpu.matmul %67, %69, %cst_38 {dimension_numbers = #tpu.dot_dimension_numbers<[1], [0], [0], [1], [0, 0, 1, 1], [], []>} : vector<16x64xf32>, vector<64x64xf32>, vector<16x64xf32> -> vector<16x64xf32>
    %71 = arith.addf %66, %70 : vector<16x64xf32>
    %72 = vector.extract_strided_slice %59 {offsets = [32, 0], sizes = [16, 64], strides = [1, 1]} : vector<144x64xf32> to vector<16x64xf32>
    %c2_39 = arith.constant 2 : index
    %c0_40 = arith.constant 0 : index
    %c0_41 = arith.constant 0 : index
    %73 = vector.load %arg6[%c2_39, %c0_40, %c0_41] : memref<9x64x64xf32, #tpu.memory_space<vmem>>, vector<1x64x64xf32>
    %74 = vector.shape_cast %73 : vector<1x64x64xf32> to vector<64x64xf32>
    %cst_42 = arith.constant dense<0.000000e+00> : vector<16x64xf32>
    %75 = tpu.matmul %72, %74, %cst_42 {dimension_numbers = #tpu.dot_dimension_numbers<[1], [0], [0], [1], [0, 0, 1, 1], [], []>} : vector<16x64xf32>, vector<64x64xf32>, vector<16x64xf32> -> vector<16x64xf32>
    %76 = arith.addf %71, %75 : vector<16x64xf32>
    %77 = vector.extract_strided_slice %59 {offsets = [48, 0], sizes = [16, 64], strides = [1, 1]} : vector<144x64xf32> to vector<16x64xf32>
    %c3_43 = arith.constant 3 : index
    %c0_44 = arith.constant 0 : index
    %c0_45 = arith.constant 0 : index
    %78 = vector.load %arg6[%c3_43, %c0_44, %c0_45] : memref<9x64x64xf32, #tpu.memory_space<vmem>>, vector<1x64x64xf32>
    %79 = vector.shape_cast %78 : vector<1x64x64xf32> to vector<64x64xf32>
    %cst_46 = arith.constant dense<0.000000e+00> : vector<16x64xf32>
    %80 = tpu.matmul %77, %79, %cst_46 {dimension_numbers = #tpu.dot_dimension_numbers<[1], [0], [0], [1], [0, 0, 1, 1], [], []>} : vector<16x64xf32>, vector<64x64xf32>, vector<16x64xf32> -> vector<16x64xf32>
    %81 = arith.addf %76, %80 : vector<16x64xf32>
    %82 = vector.extract_strided_slice %59 {offsets = [64, 0], sizes = [16, 64], strides = [1, 1]} : vector<144x64xf32> to vector<16x64xf32>
    %c4 = arith.constant 4 : index
    %c0_47 = arith.constant 0 : index
    %c0_48 = arith.constant 0 : index
    %83 = vector.load %arg6[%c4, %c0_47, %c0_48] : memref<9x64x64xf32, #tpu.memory_space<vmem>>, vector<1x64x64xf32>
    %84 = vector.shape_cast %83 : vector<1x64x64xf32> to vector<64x64xf32>
    %cst_49 = arith.constant dense<0.000000e+00> : vector<16x64xf32>
    %85 = tpu.matmul %82, %84, %cst_49 {dimension_numbers = #tpu.dot_dimension_numbers<[1], [0], [0], [1], [0, 0, 1, 1], [], []>} : vector<16x64xf32>, vector<64x64xf32>, vector<16x64xf32> -> vector<16x64xf32>
    %86 = arith.addf %81, %85 : vector<16x64xf32>
    %87 = vector.extract_strided_slice %59 {offsets = [80, 0], sizes = [16, 64], strides = [1, 1]} : vector<144x64xf32> to vector<16x64xf32>
    %c5_50 = arith.constant 5 : index
    %c0_51 = arith.constant 0 : index
    %c0_52 = arith.constant 0 : index
    %88 = vector.load %arg6[%c5_50, %c0_51, %c0_52] : memref<9x64x64xf32, #tpu.memory_space<vmem>>, vector<1x64x64xf32>
    %89 = vector.shape_cast %88 : vector<1x64x64xf32> to vector<64x64xf32>
    %cst_53 = arith.constant dense<0.000000e+00> : vector<16x64xf32>
    %90 = tpu.matmul %87, %89, %cst_53 {dimension_numbers = #tpu.dot_dimension_numbers<[1], [0], [0], [1], [0, 0, 1, 1], [], []>} : vector<16x64xf32>, vector<64x64xf32>, vector<16x64xf32> -> vector<16x64xf32>
    %91 = arith.addf %86, %90 : vector<16x64xf32>
    %92 = vector.extract_strided_slice %59 {offsets = [96, 0], sizes = [16, 64], strides = [1, 1]} : vector<144x64xf32> to vector<16x64xf32>
    %c6_54 = arith.constant 6 : index
    %c0_55 = arith.constant 0 : index
    %c0_56 = arith.constant 0 : index
    %93 = vector.load %arg6[%c6_54, %c0_55, %c0_56] : memref<9x64x64xf32, #tpu.memory_space<vmem>>, vector<1x64x64xf32>
    %94 = vector.shape_cast %93 : vector<1x64x64xf32> to vector<64x64xf32>
    %cst_57 = arith.constant dense<0.000000e+00> : vector<16x64xf32>
    %95 = tpu.matmul %92, %94, %cst_57 {dimension_numbers = #tpu.dot_dimension_numbers<[1], [0], [0], [1], [0, 0, 1, 1], [], []>} : vector<16x64xf32>, vector<64x64xf32>, vector<16x64xf32> -> vector<16x64xf32>
    %96 = arith.addf %91, %95 : vector<16x64xf32>
    %97 = vector.extract_strided_slice %59 {offsets = [112, 0], sizes = [16, 64], strides = [1, 1]} : vector<144x64xf32> to vector<16x64xf32>
    %c7_58 = arith.constant 7 : index
    %c0_59 = arith.constant 0 : index
    %c0_60 = arith.constant 0 : index
    %98 = vector.load %arg6[%c7_58, %c0_59, %c0_60] : memref<9x64x64xf32, #tpu.memory_space<vmem>>, vector<1x64x64xf32>
    %99 = vector.shape_cast %98 : vector<1x64x64xf32> to vector<64x64xf32>
    %cst_61 = arith.constant dense<0.000000e+00> : vector<16x64xf32>
    %100 = tpu.matmul %97, %99, %cst_61 {dimension_numbers = #tpu.dot_dimension_numbers<[1], [0], [0], [1], [0, 0, 1, 1], [], []>} : vector<16x64xf32>, vector<64x64xf32>, vector<16x64xf32> -> vector<16x64xf32>
    %101 = arith.addf %96, %100 : vector<16x64xf32>
    %102 = vector.extract_strided_slice %59 {offsets = [128, 0], sizes = [16, 64], strides = [1, 1]} : vector<144x64xf32> to vector<16x64xf32>
    %c8_62 = arith.constant 8 : index
    %c0_63 = arith.constant 0 : index
    %c0_64 = arith.constant 0 : index
    %103 = vector.load %arg6[%c8_62, %c0_63, %c0_64] : memref<9x64x64xf32, #tpu.memory_space<vmem>>, vector<1x64x64xf32>
    %104 = vector.shape_cast %103 : vector<1x64x64xf32> to vector<64x64xf32>
    %cst_65 = arith.constant dense<0.000000e+00> : vector<16x64xf32>
    %105 = tpu.matmul %102, %104, %cst_65 {dimension_numbers = #tpu.dot_dimension_numbers<[1], [0], [0], [1], [0, 0, 1, 1], [], []>} : vector<16x64xf32>, vector<64x64xf32>, vector<16x64xf32> -> vector<16x64xf32>
    %106 = arith.addf %101, %105 : vector<16x64xf32>
    %c0_66 = arith.constant 0 : index
    %c0_67 = arith.constant 0 : index
    %107 = vector.load %arg8[%c0_66, %c0_67] : memref<64x64xf32, #tpu.memory_space<vmem>>, vector<64x64xf32>
    %cst_68 = arith.constant dense<0.000000e+00> : vector<16x64xf32>
    %108 = tpu.matmul %106, %107, %cst_68 {dimension_numbers = #tpu.dot_dimension_numbers<[1], [0], [0], [1], [0, 0, 1, 1], [], []>} : vector<16x64xf32>, vector<64x64xf32>, vector<16x64xf32> -> vector<16x64xf32>
    %109 = vector.extract_strided_slice %108 {offsets = [0, 0], sizes = [16, 16], strides = [1, 1]} : vector<16x64xf32> to vector<16x16xf32>
    %110 = vector.extract_strided_slice %108 {offsets = [0, 16], sizes = [16, 16], strides = [1, 1]} : vector<16x64xf32> to vector<16x16xf32>
    %111 = vector.extract_strided_slice %108 {offsets = [0, 32], sizes = [16, 16], strides = [1, 1]} : vector<16x64xf32> to vector<16x16xf32>
    %112 = vector.extract_strided_slice %108 {offsets = [0, 48], sizes = [16, 16], strides = [1, 1]} : vector<16x64xf32> to vector<16x16xf32>
    %113 = arith.maximumf %109, %110 : vector<16x16xf32>
    %114 = arith.maximumf %111, %112 : vector<16x16xf32>
    %115 = arith.maximumf %113, %114 : vector<16x16xf32>
    %cst_69 = arith.constant 0.000000e+00 : f32
    %116 = vector.broadcast %cst_69 : f32 to vector<16x16xf32>
    %117 = arith.maximumf %115, %116 : vector<16x16xf32>
    %c0_70 = arith.constant 0 : index
    %c0_71 = arith.constant 0 : index
    %118 = vector.load %arg9[%c0_70, %c0_71] : memref<144x16xf32, #tpu.memory_space<vmem>>, vector<144x16xf32>
    %cst_72 = arith.constant dense<0.000000e+00> : vector<144x16xf32>
    %119 = tpu.matmul %118, %117, %cst_72 {dimension_numbers = #tpu.dot_dimension_numbers<[1], [0], [0], [1], [0, 0, 1, 1], [], []>} : vector<144x16xf32>, vector<16x16xf32>, vector<144x16xf32> -> vector<144x16xf32>
    %c0_73 = arith.constant 0 : index
    %c0_74 = arith.constant 0 : index
    %120 = vector.load %arg11[%c0_73, %c0_74] : memref<16x1xf32, #tpu.memory_space<vmem>>, vector<16x1xf32>
    %121 = vector.extract_strided_slice %119 {offsets = [0, 0], sizes = [16, 16], strides = [1, 1]} : vector<144x16xf32> to vector<16x16xf32>
    %c0_75 = arith.constant 0 : index
    %c0_76 = arith.constant 0 : index
    %c0_77 = arith.constant 0 : index
    %122 = vector.load %arg10[%c0_75, %c0_76, %c0_77] : memref<9x16x16xf32, #tpu.memory_space<vmem>>, vector<1x16x16xf32>
    %123 = vector.shape_cast %122 : vector<1x16x16xf32> to vector<16x16xf32>
    %cst_78 = arith.constant dense<0.000000e+00> : vector<16x16xf32>
    %124 = tpu.matmul %121, %123, %cst_78 {dimension_numbers = #tpu.dot_dimension_numbers<[1], [0], [0], [1], [0, 0, 1, 1], [], []>} : vector<16x16xf32>, vector<16x16xf32>, vector<16x16xf32> -> vector<16x16xf32>
    %125 = vector.broadcast %120 : vector<16x1xf32> to vector<16x16xf32>
    %126 = arith.addf %125, %124 : vector<16x16xf32>
    %127 = vector.extract_strided_slice %119 {offsets = [16, 0], sizes = [16, 16], strides = [1, 1]} : vector<144x16xf32> to vector<16x16xf32>
    %c1_79 = arith.constant 1 : index
    %c0_80 = arith.constant 0 : index
    %c0_81 = arith.constant 0 : index
    %128 = vector.load %arg10[%c1_79, %c0_80, %c0_81] : memref<9x16x16xf32, #tpu.memory_space<vmem>>, vector<1x16x16xf32>
    %129 = vector.shape_cast %128 : vector<1x16x16xf32> to vector<16x16xf32>
    %cst_82 = arith.constant dense<0.000000e+00> : vector<16x16xf32>
    %130 = tpu.matmul %127, %129, %cst_82 {dimension_numbers = #tpu.dot_dimension_numbers<[1], [0], [0], [1], [0, 0, 1, 1], [], []>} : vector<16x16xf32>, vector<16x16xf32>, vector<16x16xf32> -> vector<16x16xf32>
    %131 = arith.addf %126, %130 : vector<16x16xf32>
    %132 = vector.extract_strided_slice %119 {offsets = [32, 0], sizes = [16, 16], strides = [1, 1]} : vector<144x16xf32> to vector<16x16xf32>
    %c2_83 = arith.constant 2 : index
    %c0_84 = arith.constant 0 : index
    %c0_85 = arith.constant 0 : index
    %133 = vector.load %arg10[%c2_83, %c0_84, %c0_85] : memref<9x16x16xf32, #tpu.memory_space<vmem>>, vector<1x16x16xf32>
    %134 = vector.shape_cast %133 : vector<1x16x16xf32> to vector<16x16xf32>
    %cst_86 = arith.constant dense<0.000000e+00> : vector<16x16xf32>
    %135 = tpu.matmul %132, %134, %cst_86 {dimension_numbers = #tpu.dot_dimension_numbers<[1], [0], [0], [1], [0, 0, 1, 1], [], []>} : vector<16x16xf32>, vector<16x16xf32>, vector<16x16xf32> -> vector<16x16xf32>
    %136 = arith.addf %131, %135 : vector<16x16xf32>
    %137 = vector.extract_strided_slice %119 {offsets = [48, 0], sizes = [16, 16], strides = [1, 1]} : vector<144x16xf32> to vector<16x16xf32>
    %c3_87 = arith.constant 3 : index
    %c0_88 = arith.constant 0 : index
    %c0_89 = arith.constant 0 : index
    %138 = vector.load %arg10[%c3_87, %c0_88, %c0_89] : memref<9x16x16xf32, #tpu.memory_space<vmem>>, vector<1x16x16xf32>
    %139 = vector.shape_cast %138 : vector<1x16x16xf32> to vector<16x16xf32>
    %cst_90 = arith.constant dense<0.000000e+00> : vector<16x16xf32>
    %140 = tpu.matmul %137, %139, %cst_90 {dimension_numbers = #tpu.dot_dimension_numbers<[1], [0], [0], [1], [0, 0, 1, 1], [], []>} : vector<16x16xf32>, vector<16x16xf32>, vector<16x16xf32> -> vector<16x16xf32>
    %141 = arith.addf %136, %140 : vector<16x16xf32>
    %142 = vector.extract_strided_slice %119 {offsets = [64, 0], sizes = [16, 16], strides = [1, 1]} : vector<144x16xf32> to vector<16x16xf32>
    %c4_91 = arith.constant 4 : index
    %c0_92 = arith.constant 0 : index
    %c0_93 = arith.constant 0 : index
    %143 = vector.load %arg10[%c4_91, %c0_92, %c0_93] : memref<9x16x16xf32, #tpu.memory_space<vmem>>, vector<1x16x16xf32>
    %144 = vector.shape_cast %143 : vector<1x16x16xf32> to vector<16x16xf32>
    %cst_94 = arith.constant dense<0.000000e+00> : vector<16x16xf32>
    %145 = tpu.matmul %142, %144, %cst_94 {dimension_numbers = #tpu.dot_dimension_numbers<[1], [0], [0], [1], [0, 0, 1, 1], [], []>} : vector<16x16xf32>, vector<16x16xf32>, vector<16x16xf32> -> vector<16x16xf32>
    %146 = arith.addf %141, %145 : vector<16x16xf32>
    %147 = vector.extract_strided_slice %119 {offsets = [80, 0], sizes = [16, 16], strides = [1, 1]} : vector<144x16xf32> to vector<16x16xf32>
    %c5_95 = arith.constant 5 : index
    %c0_96 = arith.constant 0 : index
    %c0_97 = arith.constant 0 : index
    %148 = vector.load %arg10[%c5_95, %c0_96, %c0_97] : memref<9x16x16xf32, #tpu.memory_space<vmem>>, vector<1x16x16xf32>
    %149 = vector.shape_cast %148 : vector<1x16x16xf32> to vector<16x16xf32>
    %cst_98 = arith.constant dense<0.000000e+00> : vector<16x16xf32>
    %150 = tpu.matmul %147, %149, %cst_98 {dimension_numbers = #tpu.dot_dimension_numbers<[1], [0], [0], [1], [0, 0, 1, 1], [], []>} : vector<16x16xf32>, vector<16x16xf32>, vector<16x16xf32> -> vector<16x16xf32>
    %151 = arith.addf %146, %150 : vector<16x16xf32>
    %152 = vector.extract_strided_slice %119 {offsets = [96, 0], sizes = [16, 16], strides = [1, 1]} : vector<144x16xf32> to vector<16x16xf32>
    %c6_99 = arith.constant 6 : index
    %c0_100 = arith.constant 0 : index
    %c0_101 = arith.constant 0 : index
    %153 = vector.load %arg10[%c6_99, %c0_100, %c0_101] : memref<9x16x16xf32, #tpu.memory_space<vmem>>, vector<1x16x16xf32>
    %154 = vector.shape_cast %153 : vector<1x16x16xf32> to vector<16x16xf32>
    %cst_102 = arith.constant dense<0.000000e+00> : vector<16x16xf32>
    %155 = tpu.matmul %152, %154, %cst_102 {dimension_numbers = #tpu.dot_dimension_numbers<[1], [0], [0], [1], [0, 0, 1, 1], [], []>} : vector<16x16xf32>, vector<16x16xf32>, vector<16x16xf32> -> vector<16x16xf32>
    %156 = arith.addf %151, %155 : vector<16x16xf32>
    %157 = vector.extract_strided_slice %119 {offsets = [112, 0], sizes = [16, 16], strides = [1, 1]} : vector<144x16xf32> to vector<16x16xf32>
    %c7_103 = arith.constant 7 : index
    %c0_104 = arith.constant 0 : index
    %c0_105 = arith.constant 0 : index
    %158 = vector.load %arg10[%c7_103, %c0_104, %c0_105] : memref<9x16x16xf32, #tpu.memory_space<vmem>>, vector<1x16x16xf32>
    %159 = vector.shape_cast %158 : vector<1x16x16xf32> to vector<16x16xf32>
    %cst_106 = arith.constant dense<0.000000e+00> : vector<16x16xf32>
    %160 = tpu.matmul %157, %159, %cst_106 {dimension_numbers = #tpu.dot_dimension_numbers<[1], [0], [0], [1], [0, 0, 1, 1], [], []>} : vector<16x16xf32>, vector<16x16xf32>, vector<16x16xf32> -> vector<16x16xf32>
    %161 = arith.addf %156, %160 : vector<16x16xf32>
    %162 = vector.extract_strided_slice %119 {offsets = [128, 0], sizes = [16, 16], strides = [1, 1]} : vector<144x16xf32> to vector<16x16xf32>
    %c8_107 = arith.constant 8 : index
    %c0_108 = arith.constant 0 : index
    %c0_109 = arith.constant 0 : index
    %163 = vector.load %arg10[%c8_107, %c0_108, %c0_109] : memref<9x16x16xf32, #tpu.memory_space<vmem>>, vector<1x16x16xf32>
    %164 = vector.shape_cast %163 : vector<1x16x16xf32> to vector<16x16xf32>
    %cst_110 = arith.constant dense<0.000000e+00> : vector<16x16xf32>
    %165 = tpu.matmul %162, %164, %cst_110 {dimension_numbers = #tpu.dot_dimension_numbers<[1], [0], [0], [1], [0, 0, 1, 1], [], []>} : vector<16x16xf32>, vector<16x16xf32>, vector<16x16xf32> -> vector<16x16xf32>
    %166 = arith.addf %161, %165 : vector<16x16xf32>
    %c0_111 = arith.constant 0 : index
    %c0_112 = arith.constant 0 : index
    %167 = vector.load %arg12[%c0_111, %c0_112] : memref<16x16xf32, #tpu.memory_space<vmem>>, vector<16x16xf32>
    %cst_113 = arith.constant dense<0.000000e+00> : vector<16x16xf32>
    %168 = tpu.matmul %166, %167, %cst_113 {dimension_numbers = #tpu.dot_dimension_numbers<[1], [0], [0], [1], [0, 0, 1, 1], [], []>} : vector<16x16xf32>, vector<16x16xf32>, vector<16x16xf32> -> vector<16x16xf32>
    %169 = vector.extract_strided_slice %168 {offsets = [0, 0], sizes = [16, 4], strides = [1, 1]} : vector<16x16xf32> to vector<16x4xf32>
    %170 = vector.extract_strided_slice %168 {offsets = [0, 4], sizes = [16, 4], strides = [1, 1]} : vector<16x16xf32> to vector<16x4xf32>
    %171 = vector.extract_strided_slice %168 {offsets = [0, 8], sizes = [16, 4], strides = [1, 1]} : vector<16x16xf32> to vector<16x4xf32>
    %172 = vector.extract_strided_slice %168 {offsets = [0, 12], sizes = [16, 4], strides = [1, 1]} : vector<16x16xf32> to vector<16x4xf32>
    %173 = arith.maximumf %169, %170 : vector<16x4xf32>
    %174 = arith.maximumf %171, %172 : vector<16x4xf32>
    %175 = arith.maximumf %173, %174 : vector<16x4xf32>
    %cst_114 = arith.constant 0.000000e+00 : f32
    %176 = vector.broadcast %cst_114 : f32 to vector<16x4xf32>
    %177 = arith.maximumf %175, %176 : vector<16x4xf32>
    %c0_115 = arith.constant 0 : index
    %c0_116 = arith.constant 0 : index
    %178 = vector.load %arg14[%c0_115, %c0_116] : memref<1x128xf32, #tpu.memory_space<vmem>>, vector<1x128xf32>
    %179 = vector.extract_strided_slice %177 {offsets = [0, 0], sizes = [2, 4], strides = [1, 1]} : vector<16x4xf32> to vector<2x4xf32>
    %c0_117 = arith.constant 0 : index
    %c0_118 = arith.constant 0 : index
    %c0_119 = arith.constant 0 : index
    %180 = vector.load %arg13[%c0_117, %c0_118, %c0_119] : memref<8x4x128xf32, #tpu.memory_space<vmem>>, vector<1x4x128xf32>
    %181 = vector.shape_cast %180 : vector<1x4x128xf32> to vector<4x128xf32>
    %cst_120 = arith.constant dense<0.000000e+00> : vector<2x128xf32>
    %182 = tpu.matmul %179, %181, %cst_120 {dimension_numbers = #tpu.dot_dimension_numbers<[1], [0], [0], [1], [0, 0, 1, 1], [], []>} : vector<2x4xf32>, vector<4x128xf32>, vector<2x128xf32> -> vector<2x128xf32>
    %183 = vector.broadcast %178 : vector<1x128xf32> to vector<2x128xf32>
    %184 = arith.addf %183, %182 : vector<2x128xf32>
    %185 = vector.extract_strided_slice %177 {offsets = [2, 0], sizes = [2, 4], strides = [1, 1]} : vector<16x4xf32> to vector<2x4xf32>
    %c1_121 = arith.constant 1 : index
    %c0_122 = arith.constant 0 : index
    %c0_123 = arith.constant 0 : index
    %186 = vector.load %arg13[%c1_121, %c0_122, %c0_123] : memref<8x4x128xf32, #tpu.memory_space<vmem>>, vector<1x4x128xf32>
    %187 = vector.shape_cast %186 : vector<1x4x128xf32> to vector<4x128xf32>
    %cst_124 = arith.constant dense<0.000000e+00> : vector<2x128xf32>
    %188 = tpu.matmul %185, %187, %cst_124 {dimension_numbers = #tpu.dot_dimension_numbers<[1], [0], [0], [1], [0, 0, 1, 1], [], []>} : vector<2x4xf32>, vector<4x128xf32>, vector<2x128xf32> -> vector<2x128xf32>
    %189 = arith.addf %184, %188 : vector<2x128xf32>
    %190 = vector.extract_strided_slice %177 {offsets = [4, 0], sizes = [2, 4], strides = [1, 1]} : vector<16x4xf32> to vector<2x4xf32>
    %c2_125 = arith.constant 2 : index
    %c0_126 = arith.constant 0 : index
    %c0_127 = arith.constant 0 : index
    %191 = vector.load %arg13[%c2_125, %c0_126, %c0_127] : memref<8x4x128xf32, #tpu.memory_space<vmem>>, vector<1x4x128xf32>
    %192 = vector.shape_cast %191 : vector<1x4x128xf32> to vector<4x128xf32>
    %cst_128 = arith.constant dense<0.000000e+00> : vector<2x128xf32>
    %193 = tpu.matmul %190, %192, %cst_128 {dimension_numbers = #tpu.dot_dimension_numbers<[1], [0], [0], [1], [0, 0, 1, 1], [], []>} : vector<2x4xf32>, vector<4x128xf32>, vector<2x128xf32> -> vector<2x128xf32>
    %194 = arith.addf %189, %193 : vector<2x128xf32>
    %195 = vector.extract_strided_slice %177 {offsets = [6, 0], sizes = [2, 4], strides = [1, 1]} : vector<16x4xf32> to vector<2x4xf32>
    %c3_129 = arith.constant 3 : index
    %c0_130 = arith.constant 0 : index
    %c0_131 = arith.constant 0 : index
    %196 = vector.load %arg13[%c3_129, %c0_130, %c0_131] : memref<8x4x128xf32, #tpu.memory_space<vmem>>, vector<1x4x128xf32>
    %197 = vector.shape_cast %196 : vector<1x4x128xf32> to vector<4x128xf32>
    %cst_132 = arith.constant dense<0.000000e+00> : vector<2x128xf32>
    %198 = tpu.matmul %195, %197, %cst_132 {dimension_numbers = #tpu.dot_dimension_numbers<[1], [0], [0], [1], [0, 0, 1, 1], [], []>} : vector<2x4xf32>, vector<4x128xf32>, vector<2x128xf32> -> vector<2x128xf32>
    %199 = arith.addf %194, %198 : vector<2x128xf32>
    %200 = vector.extract_strided_slice %177 {offsets = [8, 0], sizes = [2, 4], strides = [1, 1]} : vector<16x4xf32> to vector<2x4xf32>
    %c4_133 = arith.constant 4 : index
    %c0_134 = arith.constant 0 : index
    %c0_135 = arith.constant 0 : index
    %201 = vector.load %arg13[%c4_133, %c0_134, %c0_135] : memref<8x4x128xf32, #tpu.memory_space<vmem>>, vector<1x4x128xf32>
    %202 = vector.shape_cast %201 : vector<1x4x128xf32> to vector<4x128xf32>
    %cst_136 = arith.constant dense<0.000000e+00> : vector<2x128xf32>
    %203 = tpu.matmul %200, %202, %cst_136 {dimension_numbers = #tpu.dot_dimension_numbers<[1], [0], [0], [1], [0, 0, 1, 1], [], []>} : vector<2x4xf32>, vector<4x128xf32>, vector<2x128xf32> -> vector<2x128xf32>
    %204 = arith.addf %199, %203 : vector<2x128xf32>
    %205 = vector.extract_strided_slice %177 {offsets = [10, 0], sizes = [2, 4], strides = [1, 1]} : vector<16x4xf32> to vector<2x4xf32>
    %c5_137 = arith.constant 5 : index
    %c0_138 = arith.constant 0 : index
    %c0_139 = arith.constant 0 : index
    %206 = vector.load %arg13[%c5_137, %c0_138, %c0_139] : memref<8x4x128xf32, #tpu.memory_space<vmem>>, vector<1x4x128xf32>
    %207 = vector.shape_cast %206 : vector<1x4x128xf32> to vector<4x128xf32>
    %cst_140 = arith.constant dense<0.000000e+00> : vector<2x128xf32>
    %208 = tpu.matmul %205, %207, %cst_140 {dimension_numbers = #tpu.dot_dimension_numbers<[1], [0], [0], [1], [0, 0, 1, 1], [], []>} : vector<2x4xf32>, vector<4x128xf32>, vector<2x128xf32> -> vector<2x128xf32>
    %209 = arith.addf %204, %208 : vector<2x128xf32>
    %210 = vector.extract_strided_slice %177 {offsets = [12, 0], sizes = [2, 4], strides = [1, 1]} : vector<16x4xf32> to vector<2x4xf32>
    %c6_141 = arith.constant 6 : index
    %c0_142 = arith.constant 0 : index
    %c0_143 = arith.constant 0 : index
    %211 = vector.load %arg13[%c6_141, %c0_142, %c0_143] : memref<8x4x128xf32, #tpu.memory_space<vmem>>, vector<1x4x128xf32>
    %212 = vector.shape_cast %211 : vector<1x4x128xf32> to vector<4x128xf32>
    %cst_144 = arith.constant dense<0.000000e+00> : vector<2x128xf32>
    %213 = tpu.matmul %210, %212, %cst_144 {dimension_numbers = #tpu.dot_dimension_numbers<[1], [0], [0], [1], [0, 0, 1, 1], [], []>} : vector<2x4xf32>, vector<4x128xf32>, vector<2x128xf32> -> vector<2x128xf32>
    %214 = arith.addf %209, %213 : vector<2x128xf32>
    %215 = vector.extract_strided_slice %177 {offsets = [14, 0], sizes = [2, 4], strides = [1, 1]} : vector<16x4xf32> to vector<2x4xf32>
    %c7_145 = arith.constant 7 : index
    %c0_146 = arith.constant 0 : index
    %c0_147 = arith.constant 0 : index
    %216 = vector.load %arg13[%c7_145, %c0_146, %c0_147] : memref<8x4x128xf32, #tpu.memory_space<vmem>>, vector<1x4x128xf32>
    %217 = vector.shape_cast %216 : vector<1x4x128xf32> to vector<4x128xf32>
    %cst_148 = arith.constant dense<0.000000e+00> : vector<2x128xf32>
    %218 = tpu.matmul %215, %217, %cst_148 {dimension_numbers = #tpu.dot_dimension_numbers<[1], [0], [0], [1], [0, 0, 1, 1], [], []>} : vector<2x4xf32>, vector<4x128xf32>, vector<2x128xf32> -> vector<2x128xf32>
    %219 = arith.addf %214, %218 : vector<2x128xf32>
    %cst_149 = arith.constant 0.000000e+00 : f32
    %220 = vector.broadcast %cst_149 : f32 to vector<2x128xf32>
    %221 = arith.maximumf %219, %220 : vector<2x128xf32>
    %c0_150 = arith.constant 0 : index
    %c0_151 = arith.constant 0 : index
    %222 = vector.load %arg15[%c0_150, %c0_151] : memref<128x512xf32, #tpu.memory_space<vmem>>, vector<128x512xf32>
    %cst_152 = arith.constant dense<0.000000e+00> : vector<2x512xf32>
    %223 = tpu.matmul %221, %222, %cst_152 {dimension_numbers = #tpu.dot_dimension_numbers<[1], [0], [0], [1], [0, 0, 1, 1], [], []>} : vector<2x128xf32>, vector<128x512xf32>, vector<2x512xf32> -> vector<2x512xf32>
    %c0_153 = arith.constant 0 : index
    %c0_154 = arith.constant 0 : index
    %224 = vector.load %arg16[%c0_153, %c0_154] : memref<1x512xf32, #tpu.memory_space<vmem>>, vector<1x512xf32>
    %225 = vector.broadcast %224 : vector<1x512xf32> to vector<2x512xf32>
    %226 = arith.addf %223, %225 : vector<2x512xf32>
    %cst_155 = arith.constant 0.000000e+00 : f32
    %227 = vector.broadcast %cst_155 : f32 to vector<2x512xf32>
    %228 = arith.maximumf %226, %227 : vector<2x512xf32>
    %c0_156 = arith.constant 0 : index
    %c0_157 = arith.constant 0 : index
    %229 = vector.load %arg17[%c0_156, %c0_157] : memref<512x256xf32, #tpu.memory_space<vmem>>, vector<512x256xf32>
    %cst_158 = arith.constant dense<0.000000e+00> : vector<2x256xf32>
    %230 = tpu.matmul %228, %229, %cst_158 {dimension_numbers = #tpu.dot_dimension_numbers<[1], [0], [0], [1], [0, 0, 1, 1], [], []>} : vector<2x512xf32>, vector<512x256xf32>, vector<2x256xf32> -> vector<2x256xf32>
    %c0_159 = arith.constant 0 : index
    %c0_160 = arith.constant 0 : index
    %231 = vector.load %arg18[%c0_159, %c0_160] : memref<1x256xf32, #tpu.memory_space<vmem>>, vector<1x256xf32>
    %232 = vector.broadcast %231 : vector<1x256xf32> to vector<2x256xf32>
    %233 = arith.addf %230, %232 : vector<2x256xf32>
    %cst_161 = arith.constant 0.000000e+00 : f32
    %234 = vector.broadcast %cst_161 : f32 to vector<2x256xf32>
    %235 = arith.subf %234, %233 : vector<2x256xf32>
    %236 = math.exp %235 : vector<2x256xf32>
    %cst_162 = arith.constant 1.000000e+00 : f32
    %237 = vector.broadcast %cst_162 : f32 to vector<2x256xf32>
    %238 = arith.addf %237, %236 : vector<2x256xf32>
    %239 = tpu.reciprocal %238 : vector<2x256xf32> -> vector<2x256xf32>
    %c0_163 = arith.constant 0 : index
    %c0_164 = arith.constant 0 : index
    %240 = vector.load %arg19[%c0_163, %c0_164] : memref<2x256xf32, #tpu.memory_space<vmem>>, vector<2x256xf32>
    tpu.vector_store %arg19[%c0_163, %c0_164], %239 {strides = array<i32>} : memref<2x256xf32, #tpu.memory_space<vmem>>, vector<2x256xf32>,
    return
  }
}

</mosaic_0001>

<llo_original>
// kernel: tpu_custom_call.1
$region0: #{tpu_custom_call.1}
  #allocation0 [shape = 'u32[]', space=smem, size = 0x4, offset = 0x4, fixed_abs, tag = 'smem constant byte address 0x4 - core index']
  #allocation1 [shape = 'u32[72,128]{1,0:T(1,128)}', space=vmem, size = 0x9000, scoped, tag = 'internal scratch']
  %s0 = inlined_call_operand.vmem [shape: f32[2,256], index: 0, kind: input, shape index: {}]
  %s1 = inlined_call_operand.vmem [shape: f32[16,18], index: 1, kind: input, shape index: {}]
  %s2 = inlined_call_operand.vmem [shape: f32[9,1,256], index: 2, kind: input, shape index: {}]
  %s3 = inlined_call_operand.vmem [shape: f32[16,1], index: 3, kind: input, shape index: {}]
  %s4 = inlined_call_operand.hbm [shape: f32[256,256], index: 4, kind: input, shape index: {}]
  %s5 = inlined_call_operand.vmem [shape: f32[144,16], index: 5, kind: input, shape index: {}]
  %s6 = inlined_call_operand.hbm [shape: f32[9,64,64], index: 6, kind: input, shape index: {}]
  %s7 = inlined_call_operand.vmem [shape: f32[16,1], index: 7, kind: input, shape index: {}]
  %s8 = inlined_call_operand.vmem [shape: f32[64,64], index: 8, kind: input, shape index: {}]
  %s9 = inlined_call_operand.vmem [shape: f32[144,16], index: 9, kind: input, shape index: {}]
  %s10 = inlined_call_operand.vmem [shape: f32[9,16,16], index: 10, kind: input, shape index: {}]
  %s11 = inlined_call_operand.vmem [shape: f32[16,1], index: 11, kind: input, shape index: {}]
  %s12 = inlined_call_operand.vmem [shape: f32[16,16], index: 12, kind: input, shape index: {}]
  %s13 = inlined_call_operand.vmem [shape: f32[8,4,128], index: 13, kind: input, shape index: {}]
  %s14 = inlined_call_operand.vmem [shape: f32[1,128], index: 14, kind: input, shape index: {}]
  %s15 = inlined_call_operand.hbm [shape: f32[128,512], index: 15, kind: input, shape index: {}]
  %s16 = inlined_call_operand.vmem [shape: f32[1,512], index: 16, kind: input, shape index: {}]
  %s17 = inlined_call_operand.hbm [shape: f32[512,256], index: 17, kind: input, shape index: {}]
  %s18 = inlined_call_operand.vmem [shape: f32[1,256], index: 18, kind: input, shape index: {}]
  %s19 = inlined_call_operand.hbm [shape: f32[2,256], index: 19, kind: output, shape index: {}]
  %s20 = sld [smem:[#allocation0]]
  $region102: #{tpu_custom_call.1} parent=0
    _
  %s22 = ssub.s32 1, %s20
  %s23 = scalar_select 0, %s22, %s20
  $region1: #{tpu_custom_call.1} parent=0
    #allocation2 [shape = 'u8[262144]{0}', space=vmem, size = 0x40000, scoped, tag = 'input window, operand 4, single buffered']
    #allocation3 [shape = 's32[1]{0}', space=sflag, size = 0x4, scoped, tag = 'scoped memory for tpu_custom_call.1']
    #allocation4 [shape = 's32[1]{0}', space=sflag, size = 0x4, scoped, tag = 'scoped memory for tpu_custom_call.1']
    #allocation5 [shape = 'u8[294912]{0}', space=vmem, size = 0x48000, scoped, tag = 'input window, operand 6, single buffered']
    #allocation6 [shape = 's32[1]{0}', space=sflag, size = 0x4, scoped, tag = 'scoped memory for tpu_custom_call.1']
    #allocation7 [shape = 'u8[262144]{0}', space=vmem, size = 0x40000, scoped, tag = 'input window, operand 15, single buffered']
    #allocation8 [shape = 'u8[524288]{0}', space=vmem, size = 0x80000, scoped, tag = 'input window, operand 17, single buffered']
    #allocation9 [shape = 's32[1]{0}', space=sflag, size = 0x4, scoped, tag = 'scoped memory for tpu_custom_call.1']
    #allocation10 [shape = 'u8[2048]{0}', space=vmem, size = 0x800, scoped, tag = 'output window, operand 0, single buffered']
    %24 = vsyncpa [#allocation3], 0
    %25 = vsyncpa [#allocation6], 0
    %26 = vsyncpa [#allocation9], 0
    %27 = vsyncpa [#allocation4], 0
    // Predicated region
    $region2: #{tpu_custom_call.1} parent=1 // pred_check
      _
    $region3: #{tpu_custom_call.1} parent=1 // pred_check_branch
      %29 = sbr.rel (0) target = $region5
    $region4: #{tpu_custom_call.1} parent=1 // pred_region
      _
    $region5: #{tpu_custom_call.1} parent=1 // pred_fallthru
      _
    // Predicated region
    $region6: #{tpu_custom_call.1} parent=1 // pred_check
      _
    $region7: #{tpu_custom_call.1} parent=1 // pred_check_branch
      %31 = sbr.rel (0) target = $region9
    $region8: #{tpu_custom_call.1} parent=1 // pred_region
      _
    $region9: #{tpu_custom_call.1} parent=1 // pred_fallthru
      _
    // Predicated region
    $region10: #{tpu_custom_call.1} parent=1 // pred_check
      _
    $region11: #{tpu_custom_call.1} parent=1 // pred_check_branch
      %33 = sbr.rel (0) target = $region13
    $region12: #{tpu_custom_call.1} parent=1 // pred_region
      _
    $region13: #{tpu_custom_call.1} parent=1 // pred_fallthru
      _
    // Predicated region
    $region14: #{tpu_custom_call.1} parent=1 // pred_check
      _
    $region15: #{tpu_custom_call.1} parent=1 // pred_check_branch
      %35 = sbr.rel (0) target = $region17
    $region16: #{tpu_custom_call.1} parent=1 // pred_region
      _
    $region17: #{tpu_custom_call.1} parent=1 // pred_fallthru
      _
    // Predicated region
    $region18: #{tpu_custom_call.1} parent=1 // pred_check
      _
    $region19: #{tpu_custom_call.1} parent=1 // pred_check_branch
      %37 = sbr.rel (0) target = $region21
    $region20: #{tpu_custom_call.1} parent=1 // pred_region
      %39 = vsyncadd [#allocation3], 0
      %s40 = sshll.u32 %s4, 4
      %s41 = int_to_ptr.hbm [resolvable:$true] %s40
      %s42 = sshll.u32 [#allocation2], 4
      %s43 = int_to_ptr.vmem [resolvable:$true] %s42
      %48 = dma.hbm_to_vmem [thread:$0]  %s41, 8192, %s43, [#allocation3], 256, 256, 16
    $region21: #{tpu_custom_call.1} parent=1 // pred_fallthru
      _
    // Predicated region
    $region22: #{tpu_custom_call.1} parent=1 // pred_check
      _
    $region23: #{tpu_custom_call.1} parent=1 // pred_check_branch
      %50 = sbr.rel (0) target = $region25
    $region24: #{tpu_custom_call.1} parent=1 // pred_region
      _
    $region25: #{tpu_custom_call.1} parent=1 // pred_fallthru
      _
    // Predicated region
    $region26: #{tpu_custom_call.1} parent=1 // pred_check
      _
    $region27: #{tpu_custom_call.1} parent=1 // pred_check_branch
      %52 = sbr.rel (0) target = $region29
    $region28: #{tpu_custom_call.1} parent=1 // pred_region
      %54 = vsyncadd [#allocation6], 0
      %s55 = sshll.u32 %s6, 4
      %s56 = int_to_ptr.hbm [resolvable:$true] %s55
      %s57 = sshll.u32 [#allocation5], 4
      %s58 = int_to_ptr.vmem [resolvable:$true] %s57
      %63 = dma.hbm_to_vmem [thread:$0]  %s56, 9216, %s58, [#allocation6], 128, 128, 8
    $region29: #{tpu_custom_call.1} parent=1 // pred_fallthru
      _
    // Predicated region
    $region30: #{tpu_custom_call.1} parent=1 // pred_check
      _
    $region31: #{tpu_custom_call.1} parent=1 // pred_check_branch
      %65 = sbr.rel (0) target = $region33
    $region32: #{tpu_custom_call.1} parent=1 // pred_region
      _
    $region33: #{tpu_custom_call.1} parent=1 // pred_fallthru
      _
    // Predicated region
    $region34: #{tpu_custom_call.1} parent=1 // pred_check
      _
    $region35: #{tpu_custom_call.1} parent=1 // pred_check_branch
      %67 = sbr.rel (0) target = $region37
    $region36: #{tpu_custom_call.1} parent=1 // pred_region
      _
    $region37: #{tpu_custom_call.1} parent=1 // pred_fallthru
      _
    // Predicated region
    $region38: #{tpu_custom_call.1} parent=1 // pred_check
      _
    $region39: #{tpu_custom_call.1} parent=1 // pred_check_branch
      %69 = sbr.rel (0) target = $region41
    $region40: #{tpu_custom_call.1} parent=1 // pred_region
      _
    $region41: #{tpu_custom_call.1} parent=1 // pred_fallthru
      _
    // Predicated region
    $region42: #{tpu_custom_call.1} parent=1 // pred_check
      _
    $region43: #{tpu_custom_call.1} parent=1 // pred_check_branch
      %71 = sbr.rel (0) target = $region45
    $region44: #{tpu_custom_call.1} parent=1 // pred_region
      _
    $region45: #{tpu_custom_call.1} parent=1 // pred_fallthru
      _
    // Predicated region
    $region46: #{tpu_custom_call.1} parent=1 // pred_check
      _
    $region47: #{tpu_custom_call.1} parent=1 // pred_check_branch
      %73 = sbr.rel (0) target = $region49
    $region48: #{tpu_custom_call.1} parent=1 // pred_region
      _
    $region49: #{tpu_custom_call.1} parent=1 // pred_fallthru
      _
    // Predicated region
    $region50: #{tpu_custom_call.1} parent=1 // pred_check
      _
    $region51: #{tpu_custom_call.1} parent=1 // pred_check_branch
      %75 = sbr.rel (0) target = $region53
    $region52: #{tpu_custom_call.1} parent=1 // pred_region
      _
    $region53: #{tpu_custom_call.1} parent=1 // pred_fallthru
      _
    // Predicated region
    $region54: #{tpu_custom_call.1} parent=1 // pred_check
      _
    $region55: #{tpu_custom_call.1} parent=1 // pred_check_branch
      %77 = sbr.rel (0) target = $region57
    $region56: #{tpu_custom_call.1} parent=1 // pred_region
      _
    $region57: #{tpu_custom_call.1} parent=1 // pred_fallthru
      _
    // Predicated region
    $region58: #{tpu_custom_call.1} parent=1 // pred_check
      _
    $region59: #{tpu_custom_call.1} parent=1 // pred_check_branch
      %79 = sbr.rel (0) target = $region61
    $region60: #{tpu_custom_call.1} parent=1 // pred_region
      _
    $region61: #{tpu_custom_call.1} parent=1 // pred_fallthru
      _
    // Predicated region
    $region62: #{tpu_custom_call.1} parent=1 // pred_check
      _
    $region63: #{tpu_custom_call.1} parent=1 // pred_check_branch
      %81 = sbr.rel (0) target = $region65
    $region64: #{tpu_custom_call.1} parent=1 // pred_region
      %83 = vsyncadd [#allocation6], 0
      %s84 = sshll.u32 %s15, 4
      %s85 = int_to_ptr.hbm [resolvable:$true] %s84
      %s86 = sshll.u32 [#allocation7], 4
      %s87 = int_to_ptr.vmem [resolvable:$true] %s86
      %92 = dma.hbm_to_vmem [thread:$0]  %s85, 8192, %s87, [#allocation6], 512, 512, 32
    $region65: #{tpu_custom_call.1} parent=1 // pred_fallthru
      _
    // Predicated region
    $region66: #{tpu_custom_call.1} parent=1 // pred_check
      _
    $region67: #{tpu_custom_call.1} parent=1 // pred_check_branch
      %94 = sbr.rel (0) target = $region69
    $region68: #{tpu_custom_call.1} parent=1 // pred_region
      _
    $region69: #{tpu_custom_call.1} parent=1 // pred_fallthru
      _
    // Predicated region
    $region70: #{tpu_custom_call.1} parent=1 // pred_check
      _
    $region71: #{tpu_custom_call.1} parent=1 // pred_check_branch
      %96 = sbr.rel (0) target = $region73
    $region72: #{tpu_custom_call.1} parent=1 // pred_region
      %98 = vsyncadd [#allocation9], 0
      %s99 = sshll.u32 %s17, 4
      %s100 = int_to_ptr.hbm [resolvable:$true] %s99
      %s101 = sshll.u32 [#allocation8], 4
      %s102 = int_to_ptr.vmem [resolvable:$true] %s101
      %107 = dma.hbm_to_vmem [thread:$0]  %s100, 16384, %s102, [#allocation9], 256, 256, 16
    $region73: #{tpu_custom_call.1} parent=1 // pred_fallthru
      _
    // Predicated region
    $region74: #{tpu_custom_call.1} parent=1 // pred_check
      _
    $region75: #{tpu_custom_call.1} parent=1 // pred_check_branch
      %109 = sbr.rel (0) target = $region77
    $region76: #{tpu_custom_call.1} parent=1 // pred_region
      _
    $region77: #{tpu_custom_call.1} parent=1 // pred_fallthru
      _
    // Predicated region
    $region78: #{tpu_custom_call.1} parent=1 // pred_check
      _
    $region79: #{tpu_custom_call.1} parent=1 // pred_check_branch
      %111 = sbr.rel (0) target = $region81
    $region80: #{tpu_custom_call.1} parent=1 // pred_region
      %113 = dma.done [#allocation3], 8192
    $region81: #{tpu_custom_call.1} parent=1 // pred_fallthru
      _
    // Predicated region
    $region82: #{tpu_custom_call.1} parent=1 // pred_check
      _
    $region83: #{tpu_custom_call.1} parent=1 // pred_check_branch
      %115 = sbr.rel (0) target = $region85
    $region84: #{tpu_custom_call.1} parent=1 // pred_region
      %117 = dma.done [#allocation6], 9216
    $region85: #{tpu_custom_call.1} parent=1 // pred_fallthru
      _
    // Predicated region
    $region86: #{tpu_custom_call.1} parent=1 // pred_check
      _
    $region87: #{tpu_custom_call.1} parent=1 // pred_check_branch
      %119 = sbr.rel (0) target = $region89
    $region88: #{tpu_custom_call.1} parent=1 // pred_region
      %121 = dma.done [#allocation6], 8192
    $region89: #{tpu_custom_call.1} parent=1 // pred_fallthru
      _
    // Predicated region
    $region90: #{tpu_custom_call.1} parent=1 // pred_check
      _
    $region91: #{tpu_custom_call.1} parent=1 // pred_check_branch
      %123 = sbr.rel (0) target = $region93
    $region92: #{tpu_custom_call.1} parent=1 // pred_region
      %125 = dma.done [#allocation9], 16384
    $region93: #{tpu_custom_call.1} parent=1 // pred_fallthru
      _
    %v126 = vld [vmem:[%s0] sm:$0xf]
    %v127 = vld [vmem:[%s2] sm:$0x3]
    %129 = vst [vmem:[#allocation1] ss:$4 sm:$0xff] %v126
    %v130 = vld.sshfl [vmem:[#allocation1] sm:$0xff pattern:$0x73625140]
    %v131 = vld.sshfl [vmem:[#allocation1 + $0x8] sm:$0xff pattern:$0x73625140]
    %134 = vrot.lane.b32.xlu0 %v130, 17
    %v135 = vpop.permute.xlu0 %134
    %136 = vrot.lane.b32.xlu0 %v131, 17
    %v137 = vpop.permute.xlu0 %136
    %v138 = vlaneseq
    %v139 = vand.u32 %v138, 127
    %vm140 = vcmp.lt.s32.totalorder %v139, 17
    %v141 = vsel %vm140, %v135, %v137
    %v142 = vsel %vm140, %v137, %v135
    %v144 = vperm.slane %v127, 0
    %v145 = vperm.slane %v127, 1
    %v148 = vmul.f32 %v144, %v142
    %v149 = vmul.f32 %v145, %v141
    %s150 = scalar_lea.vmem %s2, 2
    %v151 = vld [vmem:[%s150] sm:$0x3]
    %152 = vst [vmem:[#allocation1] ss:$4 sm:$0xff] %v126
    %v153 = vld.sshfl [vmem:[#allocation1] sm:$0xff pattern:$0x73625140]
    %v154 = vld.sshfl [vmem:[#allocation1 + $0x8] sm:$0xff pattern:$0x73625140]
    %157 = vrot.lane.b32.xlu0 %v153, 16
    %v158 = vpop.permute.xlu0 %157
    %159 = vrot.lane.b32.xlu0 %v154, 16
    %v160 = vpop.permute.xlu0 %159
    %vm161 = vcmp.lt.s32.totalorder %v139, 16
    %v162 = vsel %vm161, %v158, %v160
    %v163 = vsel %vm161, %v160, %v158
    %v165 = vperm.slane %v151, 0
    %v166 = vperm.slane %v151, 1
    %v169 = vmul.f32 %v165, %v163
    %v170 = vmul.f32 %v166, %v162
    %s171 = scalar_lea.vmem %s2, 4
    %v172 = vld [vmem:[%s171] sm:$0x3]
    %173 = vst [vmem:[#allocation1] ss:$4 sm:$0xff] %v126
    %v174 = vld.sshfl [vmem:[#allocation1] sm:$0xff pattern:$0x73625140]
    %v175 = vld.sshfl [vmem:[#allocation1 + $0x8] sm:$0xff pattern:$0x73625140]
    %178 = vrot.lane.b32.xlu0 %v174, 15
    %v179 = vpop.permute.xlu0 %178
    %180 = vrot.lane.b32.xlu0 %v175, 15
    %v181 = vpop.permute.xlu0 %180
    %vm182 = vcmp.lt.s32.totalorder %v139, 15
    %v183 = vsel %vm182, %v179, %v181
    %v184 = vsel %vm182, %v181, %v179
    %v186 = vperm.slane %v172, 0
    %v187 = vperm.slane %v172, 1
    %v190 = vmul.f32 %v186, %v184
    %v191 = vmul.f32 %v187, %v183
    %s192 = scalar_lea.vmem %s2, 6
    %v193 = vld [vmem:[%s192] sm:$0x3]
    %194 = vst [vmem:[#allocation1] ss:$4 sm:$0xff] %v126
    %v195 = vld.sshfl [vmem:[#allocation1] sm:$0xff pattern:$0x73625140]
    %v196 = vld.sshfl [vmem:[#allocation1 + $0x8] sm:$0xff pattern:$0x73625140]
    %199 = vrot.lane.b32.xlu0 %v195, 1
    %v200 = vpop.permute.xlu0 %199
    %201 = vrot.lane.b32.xlu0 %v196, 1
    %v202 = vpop.permute.xlu0 %201
    %vm203 = vcmp.lt.s32.totalorder %v139, 1
    %v204 = vsel %vm203, %v200, %v202
    %v205 = vsel %vm203, %v202, %v200
    %v207 = vperm.slane %v193, 0
    %v208 = vperm.slane %v193, 1
    %v211 = vmul.f32 %v207, %v205
    %v212 = vmul.f32 %v208, %v204
    %s213 = scalar_lea.vmem %s2, 10
    %v214 = vld [vmem:[%s213] sm:$0x3]
    %215 = vst [vmem:[#allocation1] ss:$4 sm:$0xff] %v126
    %v216 = vld.sshfl [vmem:[#allocation1] sm:$0xff pattern:$0x73625140]
    %v217 = vld.sshfl [vmem:[#allocation1 + $0x8] sm:$0xff pattern:$0x73625140]
    %220 = vrot.lane.b32.xlu0 %v216, 127
    %v221 = vpop.permute.xlu0 %220
    %222 = vrot.lane.b32.xlu0 %v217, 127
    %v223 = vpop.permute.xlu0 %222
    %vm224 = vcmp.lt.s32.totalorder %v139, 127
    %v225 = vsel %vm224, %v221, %v223
    %v226 = vsel %vm224, %v223, %v221
    %v228 = vperm.slane %v214, 0
    %v229 = vperm.slane %v214, 1
    %v232 = vmul.f32 %v228, %v225
    %v233 = vmul.f32 %v229, %v226
    %s234 = scalar_lea.vmem %s2, 12
    %v235 = vld [vmem:[%s234] sm:$0x3]
    %236 = vst [vmem:[#allocation1] ss:$4 sm:$0xff] %v126
    %v237 = vld.sshfl [vmem:[#allocation1] sm:$0xff pattern:$0x73625140]
    %v238 = vld.sshfl [vmem:[#allocation1 + $0x8] sm:$0xff pattern:$0x73625140]
    %241 = vrot.lane.b32.xlu0 %v237, 113
    %v242 = vpop.permute.xlu0 %241
    %243 = vrot.lane.b32.xlu0 %v238, 113
    %v244 = vpop.permute.xlu0 %243
    %vm245 = vcmp.lt.s32.totalorder %v139, 113
    %v246 = vsel %vm245, %v242, %v244
    %v247 = vsel %vm245, %v244, %v242
    %v249 = vperm.slane %v235, 0
    %v250 = vperm.slane %v235, 1
    %v253 = vmul.f32 %v249, %v246
    %v254 = vmul.f32 %v250, %v247
    %s255 = scalar_lea.vmem %s2, 14
    %v256 = vld [vmem:[%s255] sm:$0x3]
    %257 = vst [vmem:[#allocation1] ss:$4 sm:$0xff] %v126
    %v258 = vld.sshfl [vmem:[#allocation1] sm:$0xff pattern:$0x73625140]
    %v259 = vld.sshfl [vmem:[#allocation1 + $0x8] sm:$0xff pattern:$0x73625140]
    %262 = vrot.lane.b32.xlu0 %v258, 112
    %v263 = vpop.permute.xlu0 %262
    %264 = vrot.lane.b32.xlu0 %v259, 112
    %v265 = vpop.permute.xlu0 %264
    %vm266 = vcmp.lt.s32.totalorder %v139, 112
    %v267 = vsel %vm266, %v263, %v265
    %v268 = vsel %vm266, %v265, %v263
    %v270 = vperm.slane %v256, 0
    %v271 = vperm.slane %v256, 1
    %v274 = vmul.f32 %v270, %v267
    %v275 = vmul.f32 %v271, %v268
    %s276 = scalar_lea.vmem %s2, 16
    %v277 = vld [vmem:[%s276] sm:$0x3]
    %278 = vst [vmem:[#allocation1] ss:$4 sm:$0xff] %v126
    %v279 = vld.sshfl [vmem:[#allocation1] sm:$0xff pattern:$0x73625140]
    %v280 = vld.sshfl [vmem:[#allocation1 + $0x8] sm:$0xff pattern:$0x73625140]
    %283 = vrot.lane.b32.xlu0 %v279, 111
    %v284 = vpop.permute.xlu0 %283
    %285 = vrot.lane.b32.xlu0 %v280, 111
    %v286 = vpop.permute.xlu0 %285
    %vm287 = vcmp.lt.s32.totalorder %v139, 111
    %v288 = vsel %vm287, %v284, %v286
    %v289 = vsel %vm287, %v286, %v284
    %v291 = vperm.slane %v277, 0
    %v292 = vperm.slane %v277, 1
    %v295 = vmul.f32 %v291, %v288
    %v296 = vmul.f32 %v292, %v289
    %v299 = vrot.slane %v169, 6
    %v300 = vrot.slane %v170, 6
    %v305 = vrot.slane %v190, 4
    %v306 = vrot.slane %v191, 4
    %v311 = vrot.slane %v211, 2
    %v312 = vrot.slane %v212, 2
    %315 = vst [vmem:[#allocation1] ss:$4 sm:$0xff] %v126
    %v316 = vld.sshfl [vmem:[#allocation1] sm:$0xff pattern:$0x73625140]
    %v317 = vld.sshfl [vmem:[#allocation1 + $0x8] sm:$0xff pattern:$0x73625140]
    %v322 = vrot.slane %v232, 6
    %v323 = vrot.slane %v233, 6
    %v328 = vrot.slane %v253, 4
    %v329 = vrot.slane %v254, 4
    %v334 = vrot.slane %v274, 2
    %v335 = vrot.slane %v275, 2
    %vm338 = vcmask 1041408
    %v339 = vsel %vm338, %v148, %v299
    %v340 = vsel %vm338, %v149, %v300
    %vm341 = vcmask 1043456
    %v342 = vsel %vm341, %v339, %v305
    %v343 = vsel %vm341, %v340, %v306
    %vm344 = vcmask 1045504
    %v345 = vsel %vm344, %v342, %v311
    %v346 = vsel %vm344, %v343, %v312
    %v347 = vsel %vm338, %v316, %v322
    %v348 = vsel %vm338, %v317, %v323
    %v349 = vsel %vm341, %v347, %v328
    %v350 = vsel %vm341, %v348, %v329
    %v351 = vsel %vm344, %v349, %v334
    %v352 = vsel %vm344, %v350, %v335
    %v353 = vld [vmem:[%s3] sm:$0xff]
    %v354 = vld [vmem:[%s3 + $0x8] sm:$0xff]
    %v355 = vld [vmem:[%s1] sm:$0xff]
    %v356 = vld [vmem:[%s1 + $0x8] sm:$0xff]
    %vm357 = vcmask 146432
    %v359 = vsel %vm357, %v355, 0
    %v362 = vsel %vm357, %v356, 0
    %v365 = vsel %vm338, %v295, 0
    %v368 = vsel %vm338, %v296, 0
    %370 = vmatpush.msra.mxu0 0.0
    %371 = vmatpush.msra.mxu0 0.0
    %372 = vmatpush.msra.mxu0 0.0
    %373 = vmatpush.msra.mxu0 0.0
    %374 = vmatpush.msra.mxu0 0.0
    %375 = vmatpush.msra.mxu0 0.0
    %376 = vmatpush.msra.mxu0 0.0
    %377 = vmatpush.msra.mxu0 0.0
    %378 = vmatpush.msra.mxu0 0.0
    %379 = vmatpush.msra.mxu0 0.0
    %380 = vmatpush.msra.mxu0 0.0
    %381 = vmatpush.msra.mxu0 0.0
    %382 = vmatpush.msra.mxu0 0.0
    %383 = vmatpush.msra.mxu0 %v365
    %384 = vmatpush.msra.mxu0 %v351
    %385 = vmatpush.msra.mxu0 %v345
    %386 = vmatmul.f32.gmra.mxu0 %v359
    %v387 = vpop.f32.mrf.mxu0
    %v388 = vadd.f32 0.0, %v387
    %389 = vmatmul.f32.gmra.mxu0 %v362
    %v390 = vpop.f32.mrf.mxu0
    %v391 = vadd.f32 0.0, %v390
    %392 = vdwg.mxu0
    %393 = vmatpush.msra.mxu0 0.0
    %394 = vmatpush.msra.mxu0 0.0
    %395 = vmatpush.msra.mxu0 0.0
    %396 = vmatpush.msra.mxu0 0.0
    %397 = vmatpush.msra.mxu0 0.0
    %398 = vmatpush.msra.mxu0 0.0
    %399 = vmatpush.msra.mxu0 0.0
    %400 = vmatpush.msra.mxu0 0.0
    %401 = vmatpush.msra.mxu0 0.0
    %402 = vmatpush.msra.mxu0 0.0
    %403 = vmatpush.msra.mxu0 0.0
    %404 = vmatpush.msra.mxu0 0.0
    %405 = vmatpush.msra.mxu0 0.0
    %406 = vmatpush.msra.mxu0 %v368
    %407 = vmatpush.msra.mxu0 %v352
    %408 = vmatpush.msra.mxu0 %v346
    %409 = vmatmul.f32.gmra.mxu0 %v359
    %v410 = vpop.f32.mrf.mxu0
    %v411 = vadd.f32 0.0, %v410
    %412 = vmatmul.f32.gmra.mxu0 %v362
    %v413 = vpop.f32.mrf.mxu0
    %v414 = vadd.f32 0.0, %v413
    %415 = vdwg.mxu0
    %417 = vset.pattern.permute.xlu0 0
    %418 = vperm.xlu0 %417, %v353
    %v419 = vpop.permute.xlu0 %418
    %422 = vset.pattern.permute.xlu0 0
    %423 = vperm.xlu0 %422, %v354
    %v424 = vpop.permute.xlu0 %423
    %v426 = vadd.f32 %v419, %v388
    %v427 = vadd.f32 %v419, %v411
    %v428 = vadd.f32 %v424, %v391
    %v429 = vadd.f32 %v424, %v414
    %v430 = vld [vmem:[#allocation2] sm:$0xff]
    %v431 = vld [vmem:[#allocation2 + $0x8] sm:$0xff]
    %v432 = vld [vmem:[#allocation2 + $0x10] sm:$0xff]
    %v433 = vld [vmem:[#allocation2 + $0x18] sm:$0xff]
    %v434 = vld [vmem:[#allocation2 + $0x20] sm:$0xff]
    %v435 = vld [vmem:[#allocation2 + $0x28] sm:$0xff]
    %v436 = vld [vmem:[#allocation2 + $0x30] sm:$0xff]
    %v437 = vld [vmem:[#allocation2 + $0x38] sm:$0xff]
    %v438 = vld [vmem:[#allocation2 + $0x40] sm:$0xff]
    %v439 = vld [vmem:[#allocation2 + $0x48] sm:$0xff]
    %v440 = vld [vmem:[#allocation2 + $0x50] sm:$0xff]
    %v441 = vld [vmem:[#allocation2 + $0x58] sm:$0xff]
    %v442 = vld [vmem:[#allocation2 + $0x60] sm:$0xff]
    %v443 = vld [vmem:[#allocation2 + $0x68] sm:$0xff]
    %v444 = vld [vmem:[#allocation2 + $0x70] sm:$0xff]
    %v445 = vld [vmem:[#allocation2 + $0x78] sm:$0xff]
    %v446 = vld [vmem:[#allocation2 + $0x80] sm:$0xff]
    %v447 = vld [vmem:[#allocation2 + $0x88] sm:$0xff]
    %v448 = vld [vmem:[#allocation2 + $0x90] sm:$0xff]
    %v449 = vld [vmem:[#allocation2 + $0x98] sm:$0xff]
    %v450 = vld [vmem:[#allocation2 + $0xa0] sm:$0xff]
    %v451 = vld [vmem:[#allocation2 + $0xa8] sm:$0xff]
    %v452 = vld [vmem:[#allocation2 + $0xb0] sm:$0xff]
    %v453 = vld [vmem:[#allocation2 + $0xb8] sm:$0xff]
    %v454 = vld [vmem:[#allocation2 + $0xc0] sm:$0xff]
    %v455 = vld [vmem:[#allocation2 + $0xc8] sm:$0xff]
    %v456 = vld [vmem:[#allocation2 + $0xd0] sm:$0xff]
    %v457 = vld [vmem:[#allocation2 + $0xd8] sm:$0xff]
    %v458 = vld [vmem:[#allocation2 + $0xe0] sm:$0xff]
    %v459 = vld [vmem:[#allocation2 + $0xe8] sm:$0xff]
    %v460 = vld [vmem:[#allocation2 + $0xf0] sm:$0xff]
    %v461 = vld [vmem:[#allocation2 + $0xf8] sm:$0xff]
    %v462 = vld [vmem:[#allocation2 + $0x100] sm:$0xff]
    %v463 = vld [vmem:[#allocation2 + $0x108] sm:$0xff]
    %v464 = vld [vmem:[#allocation2 + $0x110] sm:$0xff]
    %v465 = vld [vmem:[#allocation2 + $0x118] sm:$0xff]
    %v466 = vld [vmem:[#allocation2 + $0x120] sm:$0xff]
    %v467 = vld [vmem:[#allocation2 + $0x128] sm:$0xff]
    %v468 = vld [vmem:[#allocation2 + $0x130] sm:$0xff]
    %v469 = vld [vmem:[#allocation2 + $0x138] sm:$0xff]
    %v470 = vld [vmem:[#allocation2 + $0x140] sm:$0xff]
    %v471 = vld [vmem:[#allocation2 + $0x148] sm:$0xff]
    %v472 = vld [vmem:[#allocation2 + $0x150] sm:$0xff]
    %v473 = vld [vmem:[#allocation2 + $0x158] sm:$0xff]
    %v474 = vld [vmem:[#allocation2 + $0x160] sm:$0xff]
    %v475 = vld [vmem:[#allocation2 + $0x168] sm:$0xff]
    %v476 = vld [vmem:[#allocation2 + $0x170] sm:$0xff]
    %v477 = vld [vmem:[#allocation2 + $0x178] sm:$0xff]
    %v478 = vld [vmem:[#allocation2 + $0x180] sm:$0xff]
    %v479 = vld [vmem:[#allocation2 + $0x188] sm:$0xff]
    %v480 = vld [vmem:[#allocation2 + $0x190] sm:$0xff]
    %v481 = vld [vmem:[#allocation2 + $0x198] sm:$0xff]
    %v482 = vld [vmem:[#allocation2 + $0x1a0] sm:$0xff]
    %v483 = vld [vmem:[#allocation2 + $0x1a8] sm:$0xff]
    %v484 = vld [vmem:[#allocation2 + $0x1b0] sm:$0xff]
    %v485 = vld [vmem:[#allocation2 + $0x1b8] sm:$0xff]
    %v486 = vld [vmem:[#allocation2 + $0x1c0] sm:$0xff]
    %v487 = vld [vmem:[#allocation2 + $0x1c8] sm:$0xff]
    %v488 = vld [vmem:[#allocation2 + $0x1d0] sm:$0xff]
    %v489 = vld [vmem:[#allocation2 + $0x1d8] sm:$0xff]
    %v490 = vld [vmem:[#allocation2 + $0x1e0] sm:$0xff]
    %v491 = vld [vmem:[#allocation2 + $0x1e8] sm:$0xff]
    %v492 = vld [vmem:[#allocation2 + $0x1f0] sm:$0xff]
    %v493 = vld [vmem:[#allocation2 + $0x1f8] sm:$0xff]
    %494 = vmatpush.msra.mxu0 %v460
    %495 = vmatpush.msra.mxu0 %v458
    %496 = vmatpush.msra.mxu0 %v456
    %497 = vmatpush.msra.mxu0 %v454
    %498 = vmatpush.msra.mxu0 %v452
    %499 = vmatpush.msra.mxu0 %v450
    %500 = vmatpush.msra.mxu0 %v448
    %501 = vmatpush.msra.mxu0 %v446
    %502 = vmatpush.msra.mxu0 %v444
    %503 = vmatpush.msra.mxu0 %v442
    %504 = vmatpush.msra.mxu0 %v440
    %505 = vmatpush.msra.mxu0 %v438
    %506 = vmatpush.msra.mxu0 %v436
    %507 = vmatpush.msra.mxu0 %v434
    %508 = vmatpush.msra.mxu0 %v432
    %509 = vmatpush.msra.mxu0 %v430
    %510 = vmatmul.f32.gmra.mxu0 %v426
    %v511 = vpop.f32.mrf.mxu0
    %v512 = vadd.f32 0.0, %v511
    %513 = vmatmul.f32.gmra.mxu0 %v428
    %v514 = vpop.f32.mrf.mxu0
    %v515 = vadd.f32 0.0, %v514
    %516 = vdwg.mxu0
    %517 = vmatpush.msra.mxu0 %v492
    %518 = vmatpush.msra.mxu0 %v490
    %519 = vmatpush.msra.mxu0 %v488
    %520 = vmatpush.msra.mxu0 %v486
    %521 = vmatpush.msra.mxu0 %v484
    %522 = vmatpush.msra.mxu0 %v482
    %523 = vmatpush.msra.mxu0 %v480
    %524 = vmatpush.msra.mxu0 %v478
    %525 = vmatpush.msra.mxu0 %v476
    %526 = vmatpush.msra.mxu0 %v474
    %527 = vmatpush.msra.mxu0 %v472
    %528 = vmatpush.msra.mxu0 %v470
    %529 = vmatpush.msra.mxu0 %v468
    %530 = vmatpush.msra.mxu0 %v466
    %531 = vmatpush.msra.mxu0 %v464
    %532 = vmatpush.msra.mxu0 %v462
    %533 = vmatmul.f32.gmra.mxu0 %v427
    %v534 = vpop.f32.mrf.mxu0
    %v535 = vadd.f32 %v512, %v534
    %536 = vmatmul.f32.gmra.mxu0 %v429
    %v537 = vpop.f32.mrf.mxu0
    %v538 = vadd.f32 %v515, %v537
    %539 = vdwg.mxu0
    %540 = vmatpush.msra.mxu0 %v461
    %541 = vmatpush.msra.mxu0 %v459
    %542 = vmatpush.msra.mxu0 %v457
    %543 = vmatpush.msra.mxu0 %v455
    %544 = vmatpush.msra.mxu0 %v453
    %545 = vmatpush.msra.mxu0 %v451
    %546 = vmatpush.msra.mxu0 %v449
    %547 = vmatpush.msra.mxu0 %v447
    %548 = vmatpush.msra.mxu0 %v445
    %549 = vmatpush.msra.mxu0 %v443
    %550 = vmatpush.msra.mxu0 %v441
    %551 = vmatpush.msra.mxu0 %v439
    %552 = vmatpush.msra.mxu0 %v437
    %553 = vmatpush.msra.mxu0 %v435
    %554 = vmatpush.msra.mxu0 %v433
    %555 = vmatpush.msra.mxu0 %v431
    %556 = vmatmul.f32.gmra.mxu0 %v426
    %v557 = vpop.f32.mrf.mxu0
    %v558 = vadd.f32 0.0, %v557
    %559 = vmatmul.f32.gmra.mxu0 %v428
    %v560 = vpop.f32.mrf.mxu0
    %v561 = vadd.f32 0.0, %v560
    %562 = vdwg.mxu0
    %563 = vmatpush.msra.mxu0 %v493
    %564 = vmatpush.msra.mxu0 %v491
    %565 = vmatpush.msra.mxu0 %v489
    %566 = vmatpush.msra.mxu0 %v487
    %567 = vmatpush.msra.mxu0 %v485
    %568 = vmatpush.msra.mxu0 %v483
    %569 = vmatpush.msra.mxu0 %v481
    %570 = vmatpush.msra.mxu0 %v479
    %571 = vmatpush.msra.mxu0 %v477
    %572 = vmatpush.msra.mxu0 %v475
    %573 = vmatpush.msra.mxu0 %v473
    %574 = vmatpush.msra.mxu0 %v471
    %575 = vmatpush.msra.mxu0 %v469
    %576 = vmatpush.msra.mxu0 %v467
    %577 = vmatpush.msra.mxu0 %v465
    %578 = vmatpush.msra.mxu0 %v463
    %579 = vmatmul.f32.gmra.mxu0 %v427
    %v580 = vpop.f32.mrf.mxu0
    %v581 = vadd.f32 %v558, %v580
    %582 = vmatmul.f32.gmra.mxu0 %v429
    %v583 = vpop.f32.mrf.mxu0
    %v584 = vadd.f32 %v561, %v583
    %585 = vdwg.mxu0
    %588 = vrot.lane.b32.xlu0 %v535, 64
    %v589 = vpop.permute.xlu0 %588
    %590 = vrot.lane.b32.xlu0 %v538, 64
    %v591 = vpop.permute.xlu0 %590
    %v594 = vmax.f32 %v535, %v589
    %v595 = vmax.f32 %v538, %v591
    %598 = vrot.lane.b32.xlu0 %v581, 64
    %v599 = vpop.permute.xlu0 %598
    %600 = vrot.lane.b32.xlu0 %v584, 64
    %v601 = vpop.permute.xlu0 %600
    %v604 = vmax.f32 %v581, %v599
    %v605 = vmax.f32 %v584, %v601
    %v606 = vmax.f32 %v594, %v604
    %v607 = vmax.f32 %v595, %v605
    %v608 = vmax.f32 %v606, 0.0
    %v609 = vmax.f32 %v607, 0.0
    %v610 = vld [vmem:[%s5] sm:$0xff]
    %v611 = vld [vmem:[%s5 + $0x8] sm:$0xff]
    %v612 = vld [vmem:[%s5 + $0x10] sm:$0xff]
    %v613 = vld [vmem:[%s5 + $0x18] sm:$0xff]
    %v614 = vld [vmem:[%s5 + $0x20] sm:$0xff]
    %v615 = vld [vmem:[%s5 + $0x28] sm:$0xff]
    %v616 = vld [vmem:[%s5 + $0x30] sm:$0xff]
    %v617 = vld [vmem:[%s5 + $0x38] sm:$0xff]
    %v618 = vld [vmem:[%s5 + $0x40] sm:$0xff]
    %v619 = vld [vmem:[%s5 + $0x48] sm:$0xff]
    %v620 = vld [vmem:[%s5 + $0x50] sm:$0xff]
    %v621 = vld [vmem:[%s5 + $0x58] sm:$0xff]
    %v622 = vld [vmem:[%s5 + $0x60] sm:$0xff]
    %v623 = vld [vmem:[%s5 + $0x68] sm:$0xff]
    %v624 = vld [vmem:[%s5 + $0x70] sm:$0xff]
    %v625 = vld [vmem:[%s5 + $0x78] sm:$0xff]
    %v626 = vld [vmem:[%s5 + $0x80] sm:$0xff]
    %v627 = vld [vmem:[%s5 + $0x88] sm:$0xff]
    %vm628 = vcmask 130048
    %v630 = vsel %vm628, %v610, 0
    %v633 = vsel %vm628, %v611, 0
    %v636 = vsel %vm628, %v612, 0
    %v639 = vsel %vm628, %v613, 0
    %v642 = vsel %vm628, %v614, 0
    %v645 = vsel %vm628, %v615, 0
    %v648 = vsel %vm628, %v616, 0
    %v651 = vsel %vm628, %v617, 0
    %v654 = vsel %vm628, %v618, 0
    %v657 = vsel %vm628, %v619, 0
    %v660 = vsel %vm628, %v620, 0
    %v663 = vsel %vm628, %v621, 0
    %v666 = vsel %vm628, %v622, 0
    %v669 = vsel %vm628, %v623, 0
    %v672 = vsel %vm628, %v624, 0
    %v675 = vsel %vm628, %v625, 0
    %v678 = vsel %vm628, %v626, 0
    %v681 = vsel %vm628, %v627, 0
    %683 = vmatpush.msra.mxu0 0.0
    %684 = vmatpush.msra.mxu0 0.0
    %685 = vmatpush.msra.mxu0 0.0
    %686 = vmatpush.msra.mxu0 0.0
    %687 = vmatpush.msra.mxu0 0.0
    %688 = vmatpush.msra.mxu0 0.0
    %689 = vmatpush.msra.mxu0 0.0
    %690 = vmatpush.msra.mxu0 0.0
    %691 = vmatpush.msra.mxu0 0.0
    %692 = vmatpush.msra.mxu0 0.0
    %693 = vmatpush.msra.mxu0 0.0
    %694 = vmatpush.msra.mxu0 0.0
    %695 = vmatpush.msra.mxu0 0.0
    %696 = vmatpush.msra.mxu0 0.0
    %697 = vmatpush.msra.mxu0 %v609
    %698 = vmatpush.msra.mxu0 %v608
    %699 = vmatmul.f32.gmra.mxu0 %v630
    %v700 = vpop.f32.mrf.mxu0
    %v701 = vadd.f32 0.0, %v700
    %702 = vmatmul.f32.gmra.mxu0 %v633
    %v703 = vpop.f32.mrf.mxu0
    %v704 = vadd.f32 0.0, %v703
    %705 = vmatmul.f32.gmra.mxu0 %v636
    %v706 = vpop.f32.mrf.mxu0
    %v707 = vadd.f32 0.0, %v706
    %708 = vmatmul.f32.gmra.mxu0 %v639
    %v709 = vpop.f32.mrf.mxu0
    %v710 = vadd.f32 0.0, %v709
    %711 = vmatmul.f32.gmra.mxu0 %v642
    %v712 = vpop.f32.mrf.mxu0
    %v713 = vadd.f32 0.0, %v712
    %714 = vmatmul.f32.gmra.mxu0 %v645
    %v715 = vpop.f32.mrf.mxu0
    %v716 = vadd.f32 0.0, %v715
    %717 = vmatmul.f32.gmra.mxu0 %v648
    %v718 = vpop.f32.mrf.mxu0
    %v719 = vadd.f32 0.0, %v718
    %720 = vmatmul.f32.gmra.mxu0 %v651
    %v721 = vpop.f32.mrf.mxu0
    %v722 = vadd.f32 0.0, %v721
    %723 = vmatmul.f32.gmra.mxu0 %v654
    %v724 = vpop.f32.mrf.mxu0
    %v725 = vadd.f32 0.0, %v724
    %726 = vmatmul.f32.gmra.mxu0 %v657
    %v727 = vpop.f32.mrf.mxu0
    %v728 = vadd.f32 0.0, %v727
    %729 = vmatmul.f32.gmra.mxu0 %v660
    %v730 = vpop.f32.mrf.mxu0
    %v731 = vadd.f32 0.0, %v730
    %732 = vmatmul.f32.gmra.mxu0 %v663
    %v733 = vpop.f32.mrf.mxu0
    %v734 = vadd.f32 0.0, %v733
    %735 = vmatmul.f32.gmra.mxu0 %v666
    %v736 = vpop.f32.mrf.mxu0
    %v737 = vadd.f32 0.0, %v736
    %738 = vmatmul.f32.gmra.mxu0 %v669
    %v739 = vpop.f32.mrf.mxu0
    %v740 = vadd.f32 0.0, %v739
    %741 = vmatmul.f32.gmra.mxu0 %v672
    %v742 = vpop.f32.mrf.mxu0
    %v743 = vadd.f32 0.0, %v742
    %744 = vmatmul.f32.gmra.mxu0 %v675
    %v745 = vpop.f32.mrf.mxu0
    %v746 = vadd.f32 0.0, %v745
    %747 = vmatmul.f32.gmra.mxu0 %v678
    %v748 = vpop.f32.mrf.mxu0
    %v749 = vadd.f32 0.0, %v748
    %750 = vmatmul.f32.gmra.mxu0 %v681
    %v751 = vpop.f32.mrf.mxu0
    %v752 = vadd.f32 0.0, %v751
    %753 = vdwg.mxu0
    %v754 = vld [vmem:[%s7] sm:$0xff]
    %v755 = vld [vmem:[%s7 + $0x8] sm:$0xff]
    %v756 = vld [vmem:[#allocation5] sm:$0xff]
    %v757 = vld [vmem:[#allocation5 + $0x8] sm:$0xff]
    %v758 = vld [vmem:[#allocation5 + $0x10] sm:$0xff]
    %v759 = vld [vmem:[#allocation5 + $0x18] sm:$0xff]
    %v760 = vld [vmem:[#allocation5 + $0x20] sm:$0xff]
    %v761 = vld [vmem:[#allocation5 + $0x28] sm:$0xff]
    %v762 = vld [vmem:[#allocation5 + $0x30] sm:$0xff]
    %v763 = vld [vmem:[#allocation5 + $0x38] sm:$0xff]
    %vm764 = vcmask 523264
    %v766 = vsel %vm764, %v701, 0
    %v769 = vsel %vm764, %v704, 0
    %771 = vmatpush.msra.mxu0 0.0
    %772 = vmatpush.msra.mxu0 0.0
    %773 = vmatpush.msra.mxu0 0.0
    %774 = vmatpush.msra.mxu0 0.0
    %775 = vmatpush.msra.mxu0 0.0
    %776 = vmatpush.msra.mxu0 0.0
    %777 = vmatpush.msra.mxu0 0.0
    %778 = vmatpush.msra.mxu0 0.0
    %779 = vmatpush.msra.mxu0 %v763
    %780 = vmatpush.msra.mxu0 %v762
    %781 = vmatpush.msra.mxu0 %v761
    %782 = vmatpush.msra.mxu0 %v760
    %783 = vmatpush.msra.mxu0 %v759
    %784 = vmatpush.msra.mxu0 %v758
    %785 = vmatpush.msra.mxu0 %v757
    %786 = vmatpush.msra.mxu0 %v756
    %787 = vmatmul.f32.gmra.mxu0 %v766
    %v788 = vpop.f32.mrf.mxu0
    %v789 = vadd.f32 0.0, %v788
    %790 = vmatmul.f32.gmra.mxu0 %v769
    %v791 = vpop.f32.mrf.mxu0
    %v792 = vadd.f32 0.0, %v791
    %793 = vdwg.mxu0
    %795 = vset.pattern.permute.xlu0 0
    %796 = vperm.xlu0 %795, %v754
    %v797 = vpop.permute.xlu0 %796
    %800 = vset.pattern.permute.xlu0 0
    %801 = vperm.xlu0 %800, %v755
    %v802 = vpop.permute.xlu0 %801
    %v804 = vadd.f32 %v797, %v789
    %v805 = vadd.f32 %v802, %v792
    %s806 = scalar_lea.vmem [#allocation5], 64
    %v807 = vld [vmem:[%s806] sm:$0xff]
    %v808 = vld [vmem:[%s806 + $0x8] sm:$0xff]
    %v809 = vld [vmem:[%s806 + $0x10] sm:$0xff]
    %v810 = vld [vmem:[%s806 + $0x18] sm:$0xff]
    %v811 = vld [vmem:[%s806 + $0x20] sm:$0xff]
    %v812 = vld [vmem:[%s806 + $0x28] sm:$0xff]
    %v813 = vld [vmem:[%s806 + $0x30] sm:$0xff]
    %v814 = vld [vmem:[%s806 + $0x38] sm:$0xff]
    %v816 = vsel %vm764, %v707, 0
    %v819 = vsel %vm764, %v710, 0
    %821 = vmatpush.msra.mxu0 0.0
    %822 = vmatpush.msra.mxu0 0.0
    %823 = vmatpush.msra.mxu0 0.0
    %824 = vmatpush.msra.mxu0 0.0
    %825 = vmatpush.msra.mxu0 0.0
    %826 = vmatpush.msra.mxu0 0.0
    %827 = vmatpush.msra.mxu0 0.0
    %828 = vmatpush.msra.mxu0 0.0
    %829 = vmatpush.msra.mxu0 %v814
    %830 = vmatpush.msra.mxu0 %v813
    %831 = vmatpush.msra.mxu0 %v812
    %832 = vmatpush.msra.mxu0 %v811
    %833 = vmatpush.msra.mxu0 %v810
    %834 = vmatpush.msra.mxu0 %v809
    %835 = vmatpush.msra.mxu0 %v808
    %836 = vmatpush.msra.mxu0 %v807
    %837 = vmatmul.f32.gmra.mxu0 %v816
    %v838 = vpop.f32.mrf.mxu0
    %v839 = vadd.f32 0.0, %v838
    %840 = vmatmul.f32.gmra.mxu0 %v819
    %v841 = vpop.f32.mrf.mxu0
    %v842 = vadd.f32 0.0, %v841
    %843 = vdwg.mxu0
    %v844 = vadd.f32 %v804, %v839
    %v845 = vadd.f32 %v805, %v842
    %s846 = scalar_lea.vmem [#allocation5], 128
    %v847 = vld [vmem:[%s846] sm:$0xff]
    %v848 = vld [vmem:[%s846 + $0x8] sm:$0xff]
    %v849 = vld [vmem:[%s846 + $0x10] sm:$0xff]
    %v850 = vld [vmem:[%s846 + $0x18] sm:$0xff]
    %v851 = vld [vmem:[%s846 + $0x20] sm:$0xff]
    %v852 = vld [vmem:[%s846 + $0x28] sm:$0xff]
    %v853 = vld [vmem:[%s846 + $0x30] sm:$0xff]
    %v854 = vld [vmem:[%s846 + $0x38] sm:$0xff]
    %v856 = vsel %vm764, %v713, 0
    %v859 = vsel %vm764, %v716, 0
    %861 = vmatpush.msra.mxu0 0.0
    %862 = vmatpush.msra.mxu0 0.0
    %863 = vmatpush.msra.mxu0 0.0
    %864 = vmatpush.msra.mxu0 0.0
    %865 = vmatpush.msra.mxu0 0.0
    %866 = vmatpush.msra.mxu0 0.0
    %867 = vmatpush.msra.mxu0 0.0
    %868 = vmatpush.msra.mxu0 0.0
    %869 = vmatpush.msra.mxu0 %v854
    %870 = vmatpush.msra.mxu0 %v853
    %871 = vmatpush.msra.mxu0 %v852
    %872 = vmatpush.msra.mxu0 %v851
    %873 = vmatpush.msra.mxu0 %v850
    %874 = vmatpush.msra.mxu0 %v849
    %875 = vmatpush.msra.mxu0 %v848
    %876 = vmatpush.msra.mxu0 %v847
    %877 = vmatmul.f32.gmra.mxu0 %v856
    %v878 = vpop.f32.mrf.mxu0
    %v879 = vadd.f32 0.0, %v878
    %880 = vmatmul.f32.gmra.mxu0 %v859
    %v881 = vpop.f32.mrf.mxu0
    %v882 = vadd.f32 0.0, %v881
    %883 = vdwg.mxu0
    %v884 = vadd.f32 %v844, %v879
    %v885 = vadd.f32 %v845, %v882
    %s886 = scalar_lea.vmem [#allocation5], 192
    %v887 = vld [vmem:[%s886] sm:$0xff]
    %v888 = vld [vmem:[%s886 + $0x8] sm:$0xff]
    %v889 = vld [vmem:[%s886 + $0x10] sm:$0xff]
    %v890 = vld [vmem:[%s886 + $0x18] sm:$0xff]
    %v891 = vld [vmem:[%s886 + $0x20] sm:$0xff]
    %v892 = vld [vmem:[%s886 + $0x28] sm:$0xff]
    %v893 = vld [vmem:[%s886 + $0x30] sm:$0xff]
    %v894 = vld [vmem:[%s886 + $0x38] sm:$0xff]
    %v896 = vsel %vm764, %v719, 0
    %v899 = vsel %vm764, %v722, 0
    %901 = vmatpush.msra.mxu0 0.0
    %902 = vmatpush.msra.mxu0 0.0
    %903 = vmatpush.msra.mxu0 0.0
    %904 = vmatpush.msra.mxu0 0.0
    %905 = vmatpush.msra.mxu0 0.0
    %906 = vmatpush.msra.mxu0 0.0
    %907 = vmatpush.msra.mxu0 0.0
    %908 = vmatpush.msra.mxu0 0.0
    %909 = vmatpush.msra.mxu0 %v894
    %910 = vmatpush.msra.mxu0 %v893
    %911 = vmatpush.msra.mxu0 %v892
    %912 = vmatpush.msra.mxu0 %v891
    %913 = vmatpush.msra.mxu0 %v890
    %914 = vmatpush.msra.mxu0 %v889
    %915 = vmatpush.msra.mxu0 %v888
    %916 = vmatpush.msra.mxu0 %v887
    %917 = vmatmul.f32.gmra.mxu0 %v896
    %v918 = vpop.f32.mrf.mxu0
    %v919 = vadd.f32 0.0, %v918
    %920 = vmatmul.f32.gmra.mxu0 %v899
    %v921 = vpop.f32.mrf.mxu0
    %v922 = vadd.f32 0.0, %v921
    %923 = vdwg.mxu0
    %v924 = vadd.f32 %v884, %v919
    %v925 = vadd.f32 %v885, %v922
    %s926 = scalar_lea.vmem [#allocation5], 256
    %v927 = vld [vmem:[%s926] sm:$0xff]
    %v928 = vld [vmem:[%s926 + $0x8] sm:$0xff]
    %v929 = vld [vmem:[%s926 + $0x10] sm:$0xff]
    %v930 = vld [vmem:[%s926 + $0x18] sm:$0xff]
    %v931 = vld [vmem:[%s926 + $0x20] sm:$0xff]
    %v932 = vld [vmem:[%s926 + $0x28] sm:$0xff]
    %v933 = vld [vmem:[%s926 + $0x30] sm:$0xff]
    %v934 = vld [vmem:[%s926 + $0x38] sm:$0xff]
    %v936 = vsel %vm764, %v725, 0
    %v939 = vsel %vm764, %v728, 0
    %941 = vmatpush.msra.mxu0 0.0
    %942 = vmatpush.msra.mxu0 0.0
    %943 = vmatpush.msra.mxu0 0.0
    %944 = vmatpush.msra.mxu0 0.0
    %945 = vmatpush.msra.mxu0 0.0
    %946 = vmatpush.msra.mxu0 0.0
    %947 = vmatpush.msra.mxu0 0.0
    %948 = vmatpush.msra.mxu0 0.0
    %949 = vmatpush.msra.mxu0 %v934
    %950 = vmatpush.msra.mxu0 %v933
    %951 = vmatpush.msra.mxu0 %v932
    %952 = vmatpush.msra.mxu0 %v931
    %953 = vmatpush.msra.mxu0 %v930
    %954 = vmatpush.msra.mxu0 %v929
    %955 = vmatpush.msra.mxu0 %v928
    %956 = vmatpush.msra.mxu0 %v927
    %957 = vmatmul.f32.gmra.mxu0 %v936
    %v958 = vpop.f32.mrf.mxu0
    %v959 = vadd.f32 0.0, %v958
    %960 = vmatmul.f32.gmra.mxu0 %v939
    %v961 = vpop.f32.mrf.mxu0
    %v962 = vadd.f32 0.0, %v961
    %963 = vdwg.mxu0
    %v964 = vadd.f32 %v924, %v959
    %v965 = vadd.f32 %v925, %v962
    %s966 = scalar_lea.vmem [#allocation5], 320
    %v967 = vld [vmem:[%s966] sm:$0xff]
    %v968 = vld [vmem:[%s966 + $0x8] sm:$0xff]
    %v969 = vld [vmem:[%s966 + $0x10] sm:$0xff]
    %v970 = vld [vmem:[%s966 + $0x18] sm:$0xff]
    %v971 = vld [vmem:[%s966 + $0x20] sm:$0xff]
    %v972 = vld [vmem:[%s966 + $0x28] sm:$0xff]
    %v973 = vld [vmem:[%s966 + $0x30] sm:$0xff]
    %v974 = vld [vmem:[%s966 + $0x38] sm:$0xff]
    %v976 = vsel %vm764, %v731, 0
    %v979 = vsel %vm764, %v734, 0
    %981 = vmatpush.msra.mxu0 0.0
    %982 = vmatpush.msra.mxu0 0.0
    %983 = vmatpush.msra.mxu0 0.0
    %984 = vmatpush.msra.mxu0 0.0
    %985 = vmatpush.msra.mxu0 0.0
    %986 = vmatpush.msra.mxu0 0.0
    %987 = vmatpush.msra.mxu0 0.0
    %988 = vmatpush.msra.mxu0 0.0
    %989 = vmatpush.msra.mxu0 %v974
    %990 = vmatpush.msra.mxu0 %v973
    %991 = vmatpush.msra.mxu0 %v972
    %992 = vmatpush.msra.mxu0 %v971
    %993 = vmatpush.msra.mxu0 %v970
    %994 = vmatpush.msra.mxu0 %v969
    %995 = vmatpush.msra.mxu0 %v968
    %996 = vmatpush.msra.mxu0 %v967
    %997 = vmatmul.f32.gmra.mxu0 %v976
    %v998 = vpop.f32.mrf.mxu0
    %v999 = vadd.f32 0.0, %v998
    %1000 = vmatmul.f32.gmra.mxu0 %v979
    %v1001 = vpop.f32.mrf.mxu0
    %v1002 = vadd.f32 0.0, %v1001
    %1003 = vdwg.mxu0
    %v1004 = vadd.f32 %v964, %v999
    %v1005 = vadd.f32 %v965, %v1002
    %s1006 = scalar_lea.vmem [#allocation5], 384
    %v1007 = vld [vmem:[%s1006] sm:$0xff]
    %v1008 = vld [vmem:[%s1006 + $0x8] sm:$0xff]
    %v1009 = vld [vmem:[%s1006 + $0x10] sm:$0xff]
    %v1010 = vld [vmem:[%s1006 + $0x18] sm:$0xff]
    %v1011 = vld [vmem:[%s1006 + $0x20] sm:$0xff]
    %v1012 = vld [vmem:[%s1006 + $0x28] sm:$0xff]
    %v1013 = vld [vmem:[%s1006 + $0x30] sm:$0xff]
    %v1014 = vld [vmem:[%s1006 + $0x38] sm:$0xff]
    %v1016 = vsel %vm764, %v737, 0
    %v1019 = vsel %vm764, %v740, 0
    %1021 = vmatpush.msra.mxu0 0.0
    %1022 = vmatpush.msra.mxu0 0.0
    %1023 = vmatpush.msra.mxu0 0.0
    %1024 = vmatpush.msra.mxu0 0.0
    %1025 = vmatpush.msra.mxu0 0.0
    %1026 = vmatpush.msra.mxu0 0.0
    %1027 = vmatpush.msra.mxu0 0.0
    %1028 = vmatpush.msra.mxu0 0.0
    %1029 = vmatpush.msra.mxu0 %v1014
    %1030 = vmatpush.msra.mxu0 %v1013
    %1031 = vmatpush.msra.mxu0 %v1012
    %1032 = vmatpush.msra.mxu0 %v1011
    %1033 = vmatpush.msra.mxu0 %v1010
    %1034 = vmatpush.msra.mxu0 %v1009
    %1035 = vmatpush.msra.mxu0 %v1008
    %1036 = vmatpush.msra.mxu0 %v1007
    %1037 = vmatmul.f32.gmra.mxu0 %v1016
    %v1038 = vpop.f32.mrf.mxu0
    %v1039 = vadd.f32 0.0, %v1038
    %1040 = vmatmul.f32.gmra.mxu0 %v1019
    %v1041 = vpop.f32.mrf.mxu0
    %v1042 = vadd.f32 0.0, %v1041
    %1043 = vdwg.mxu0
    %v1044 = vadd.f32 %v1004, %v1039
    %v1045 = vadd.f32 %v1005, %v1042
    %s1046 = scalar_lea.vmem [#allocation5], 448
    %v1047 = vld [vmem:[%s1046] sm:$0xff]
    %v1048 = vld [vmem:[%s1046 + $0x8] sm:$0xff]
    %v1049 = vld [vmem:[%s1046 + $0x10] sm:$0xff]
    %v1050 = vld [vmem:[%s1046 + $0x18] sm:$0xff]
    %v1051 = vld [vmem:[%s1046 + $0x20] sm:$0xff]
    %v1052 = vld [vmem:[%s1046 + $0x28] sm:$0xff]
    %v1053 = vld [vmem:[%s1046 + $0x30] sm:$0xff]
    %v1054 = vld [vmem:[%s1046 + $0x38] sm:$0xff]
    %v1056 = vsel %vm764, %v743, 0
    %v1059 = vsel %vm764, %v746, 0
    %1061 = vmatpush.msra.mxu0 0.0
    %1062 = vmatpush.msra.mxu0 0.0
    %1063 = vmatpush.msra.mxu0 0.0
    %1064 = vmatpush.msra.mxu0 0.0
    %1065 = vmatpush.msra.mxu0 0.0
    %1066 = vmatpush.msra.mxu0 0.0
    %1067 = vmatpush.msra.mxu0 0.0
    %1068 = vmatpush.msra.mxu0 0.0
    %1069 = vmatpush.msra.mxu0 %v1054
    %1070 = vmatpush.msra.mxu0 %v1053
    %1071 = vmatpush.msra.mxu0 %v1052
    %1072 = vmatpush.msra.mxu0 %v1051
    %1073 = vmatpush.msra.mxu0 %v1050
    %1074 = vmatpush.msra.mxu0 %v1049
    %1075 = vmatpush.msra.mxu0 %v1048
    %1076 = vmatpush.msra.mxu0 %v1047
    %1077 = vmatmul.f32.gmra.mxu0 %v1056
    %v1078 = vpop.f32.mrf.mxu0
    %v1079 = vadd.f32 0.0, %v1078
    %1080 = vmatmul.f32.gmra.mxu0 %v1059
    %v1081 = vpop.f32.mrf.mxu0
    %v1082 = vadd.f32 0.0, %v1081
    %1083 = vdwg.mxu0
    %v1084 = vadd.f32 %v1044, %v1079
    %v1085 = vadd.f32 %v1045, %v1082
    %s1086 = scalar_lea.vmem [#allocation5], 512
    %v1087 = vld [vmem:[%s1086] sm:$0xff]
    %v1088 = vld [vmem:[%s1086 + $0x8] sm:$0xff]
    %v1089 = vld [vmem:[%s1086 + $0x10] sm:$0xff]
    %v1090 = vld [vmem:[%s1086 + $0x18] sm:$0xff]
    %v1091 = vld [vmem:[%s1086 + $0x20] sm:$0xff]
    %v1092 = vld [vmem:[%s1086 + $0x28] sm:$0xff]
    %v1093 = vld [vmem:[%s1086 + $0x30] sm:$0xff]
    %v1094 = vld [vmem:[%s1086 + $0x38] sm:$0xff]
    %v1096 = vsel %vm764, %v749, 0
    %v1099 = vsel %vm764, %v752, 0
    %1101 = vmatpush.msra.mxu0 0.0
    %1102 = vmatpush.msra.mxu0 0.0
    %1103 = vmatpush.msra.mxu0 0.0
    %1104 = vmatpush.msra.mxu0 0.0
    %1105 = vmatpush.msra.mxu0 0.0
    %1106 = vmatpush.msra.mxu0 0.0
    %1107 = vmatpush.msra.mxu0 0.0
    %1108 = vmatpush.msra.mxu0 0.0
    %1109 = vmatpush.msra.mxu0 %v1094
    %1110 = vmatpush.msra.mxu0 %v1093
    %1111 = vmatpush.msra.mxu0 %v1092
    %1112 = vmatpush.msra.mxu0 %v1091
    %1113 = vmatpush.msra.mxu0 %v1090
    %1114 = vmatpush.msra.mxu0 %v1089
    %1115 = vmatpush.msra.mxu0 %v1088
    %1116 = vmatpush.msra.mxu0 %v1087
    %1117 = vmatmul.f32.gmra.mxu0 %v1096
    %v1118 = vpop.f32.mrf.mxu0
    %v1119 = vadd.f32 0.0, %v1118
    %1120 = vmatmul.f32.gmra.mxu0 %v1099
    %v1121 = vpop.f32.mrf.mxu0
    %v1122 = vadd.f32 0.0, %v1121
    %1123 = vdwg.mxu0
    %v1124 = vadd.f32 %v1084, %v1119
    %v1125 = vadd.f32 %v1085, %v1122
    %v1126 = vld [vmem:[%s8] sm:$0xff]
    %v1127 = vld [vmem:[%s8 + $0x8] sm:$0xff]
    %v1128 = vld [vmem:[%s8 + $0x10] sm:$0xff]
    %v1129 = vld [vmem:[%s8 + $0x18] sm:$0xff]
    %v1130 = vld [vmem:[%s8 + $0x20] sm:$0xff]
    %v1131 = vld [vmem:[%s8 + $0x28] sm:$0xff]
    %v1132 = vld [vmem:[%s8 + $0x30] sm:$0xff]
    %v1133 = vld [vmem:[%s8 + $0x38] sm:$0xff]
    %v1135 = vsel %vm764, %v1124, 0
    %v1138 = vsel %vm764, %v1125, 0
    %1140 = vmatpush.msra.mxu0 0.0
    %1141 = vmatpush.msra.mxu0 0.0
    %1142 = vmatpush.msra.mxu0 0.0
    %1143 = vmatpush.msra.mxu0 0.0
    %1144 = vmatpush.msra.mxu0 0.0
    %1145 = vmatpush.msra.mxu0 0.0
    %1146 = vmatpush.msra.mxu0 0.0
    %1147 = vmatpush.msra.mxu0 0.0
    %1148 = vmatpush.msra.mxu0 %v1133
    %1149 = vmatpush.msra.mxu0 %v1132
    %1150 = vmatpush.msra.mxu0 %v1131
    %1151 = vmatpush.msra.mxu0 %v1130
    %1152 = vmatpush.msra.mxu0 %v1129
    %1153 = vmatpush.msra.mxu0 %v1128
    %1154 = vmatpush.msra.mxu0 %v1127
    %1155 = vmatpush.msra.mxu0 %v1126
    %1156 = vmatmul.f32.gmra.mxu0 %v1135
    %v1157 = vpop.f32.mrf.mxu0
    %v1158 = vadd.f32 0.0, %v1157
    %1159 = vmatmul.f32.gmra.mxu0 %v1138
    %v1160 = vpop.f32.mrf.mxu0
    %v1161 = vadd.f32 0.0, %v1160
    %1162 = vdwg.mxu0
    %1165 = vrot.lane.b32.xlu0 %v1158, 112
    %v1166 = vpop.permute.xlu0 %1165
    %1167 = vrot.lane.b32.xlu0 %v1161, 112
    %v1168 = vpop.permute.xlu0 %1167
    %v1171 = vmax.f32 %v1158, %v1166
    %v1172 = vmax.f32 %v1161, %v1168
    %1175 = vrot.lane.b32.xlu0 %v1171, 96
    %v1176 = vpop.permute.xlu0 %1175
    %1177 = vrot.lane.b32.xlu0 %v1172, 96
    %v1178 = vpop.permute.xlu0 %1177
    %v1181 = vmax.f32 %v1171, %v1176
    %v1182 = vmax.f32 %v1172, %v1178
    %v1183 = vmax.f32 %v1181, 0.0
    %v1184 = vmax.f32 %v1182, 0.0
    %v1185 = vld [vmem:[%s9] sm:$0xff]
    %v1186 = vld [vmem:[%s9 + $0x8] sm:$0xff]
    %v1187 = vld [vmem:[%s9 + $0x10] sm:$0xff]
    %v1188 = vld [vmem:[%s9 + $0x18] sm:$0xff]
    %v1189 = vld [vmem:[%s9 + $0x20] sm:$0xff]
    %v1190 = vld [vmem:[%s9 + $0x28] sm:$0xff]
    %v1191 = vld [vmem:[%s9 + $0x30] sm:$0xff]
    %v1192 = vld [vmem:[%s9 + $0x38] sm:$0xff]
    %v1193 = vld [vmem:[%s9 + $0x40] sm:$0xff]
    %v1194 = vld [vmem:[%s9 + $0x48] sm:$0xff]
    %v1195 = vld [vmem:[%s9 + $0x50] sm:$0xff]
    %v1196 = vld [vmem:[%s9 + $0x58] sm:$0xff]
    %v1197 = vld [vmem:[%s9 + $0x60] sm:$0xff]
    %v1198 = vld [vmem:[%s9 + $0x68] sm:$0xff]
    %v1199 = vld [vmem:[%s9 + $0x70] sm:$0xff]
    %v1200 = vld [vmem:[%s9 + $0x78] sm:$0xff]
    %v1201 = vld [vmem:[%s9 + $0x80] sm:$0xff]
    %v1202 = vld [vmem:[%s9 + $0x88] sm:$0xff]
    %v1204 = vsel %vm628, %v1185, 0
    %v1207 = vsel %vm628, %v1186, 0
    %v1210 = vsel %vm628, %v1187, 0
    %v1213 = vsel %vm628, %v1188, 0
    %v1216 = vsel %vm628, %v1189, 0
    %v1219 = vsel %vm628, %v1190, 0
    %v1222 = vsel %vm628, %v1191, 0
    %v1225 = vsel %vm628, %v1192, 0
    %v1228 = vsel %vm628, %v1193, 0
    %v1231 = vsel %vm628, %v1194, 0
    %v1234 = vsel %vm628, %v1195, 0
    %v1237 = vsel %vm628, %v1196, 0
    %v1240 = vsel %vm628, %v1197, 0
    %v1243 = vsel %vm628, %v1198, 0
    %v1246 = vsel %vm628, %v1199, 0
    %v1249 = vsel %vm628, %v1200, 0
    %v1252 = vsel %vm628, %v1201, 0
    %v1255 = vsel %vm628, %v1202, 0
    %1257 = vmatpush.msra.mxu0 0.0
    %1258 = vmatpush.msra.mxu0 0.0
    %1259 = vmatpush.msra.mxu0 0.0
    %1260 = vmatpush.msra.mxu0 0.0
    %1261 = vmatpush.msra.mxu0 0.0
    %1262 = vmatpush.msra.mxu0 0.0
    %1263 = vmatpush.msra.mxu0 0.0
    %1264 = vmatpush.msra.mxu0 0.0
    %1265 = vmatpush.msra.mxu0 0.0
    %1266 = vmatpush.msra.mxu0 0.0
    %1267 = vmatpush.msra.mxu0 0.0
    %1268 = vmatpush.msra.mxu0 0.0
    %1269 = vmatpush.msra.mxu0 0.0
    %1270 = vmatpush.msra.mxu0 0.0
    %1271 = vmatpush.msra.mxu0 %v1184
    %1272 = vmatpush.msra.mxu0 %v1183
    %1273 = vmatmul.f32.gmra.mxu0 %v1204
    %v1274 = vpop.f32.mrf.mxu0
    %v1275 = vadd.f32 0.0, %v1274
    %1276 = vmatmul.f32.gmra.mxu0 %v1207
    %v1277 = vpop.f32.mrf.mxu0
    %v1278 = vadd.f32 0.0, %v1277
    %1279 = vmatmul.f32.gmra.mxu0 %v1210
    %v1280 = vpop.f32.mrf.mxu0
    %v1281 = vadd.f32 0.0, %v1280
    %1282 = vmatmul.f32.gmra.mxu0 %v1213
    %v1283 = vpop.f32.mrf.mxu0
    %v1284 = vadd.f32 0.0, %v1283
    %1285 = vmatmul.f32.gmra.mxu0 %v1216
    %v1286 = vpop.f32.mrf.mxu0
    %v1287 = vadd.f32 0.0, %v1286
    %1288 = vmatmul.f32.gmra.mxu0 %v1219
    %v1289 = vpop.f32.mrf.mxu0
    %v1290 = vadd.f32 0.0, %v1289
    %1291 = vmatmul.f32.gmra.mxu0 %v1222
    %v1292 = vpop.f32.mrf.mxu0
    %v1293 = vadd.f32 0.0, %v1292
    %1294 = vmatmul.f32.gmra.mxu0 %v1225
    %v1295 = vpop.f32.mrf.mxu0
    %v1296 = vadd.f32 0.0, %v1295
    %1297 = vmatmul.f32.gmra.mxu0 %v1228
    %v1298 = vpop.f32.mrf.mxu0
    %v1299 = vadd.f32 0.0, %v1298
    %1300 = vmatmul.f32.gmra.mxu0 %v1231
    %v1301 = vpop.f32.mrf.mxu0
    %v1302 = vadd.f32 0.0, %v1301
    %1303 = vmatmul.f32.gmra.mxu0 %v1234
    %v1304 = vpop.f32.mrf.mxu0
    %v1305 = vadd.f32 0.0, %v1304
    %1306 = vmatmul.f32.gmra.mxu0 %v1237
    %v1307 = vpop.f32.mrf.mxu0
    %v1308 = vadd.f32 0.0, %v1307
    %1309 = vmatmul.f32.gmra.mxu0 %v1240
    %v1310 = vpop.f32.mrf.mxu0
    %v1311 = vadd.f32 0.0, %v1310
    %1312 = vmatmul.f32.gmra.mxu0 %v1243
    %v1313 = vpop.f32.mrf.mxu0
    %v1314 = vadd.f32 0.0, %v1313
    %1315 = vmatmul.f32.gmra.mxu0 %v1246
    %v1316 = vpop.f32.mrf.mxu0
    %v1317 = vadd.f32 0.0, %v1316
    %1318 = vmatmul.f32.gmra.mxu0 %v1249
    %v1319 = vpop.f32.mrf.mxu0
    %v1320 = vadd.f32 0.0, %v1319
    %1321 = vmatmul.f32.gmra.mxu0 %v1252
    %v1322 = vpop.f32.mrf.mxu0
    %v1323 = vadd.f32 0.0, %v1322
    %1324 = vmatmul.f32.gmra.mxu0 %v1255
    %v1325 = vpop.f32.mrf.mxu0
    %v1326 = vadd.f32 0.0, %v1325
    %1327 = vdwg.mxu0
    %v1328 = vld [vmem:[%s11] sm:$0xff]
    %v1329 = vld [vmem:[%s11 + $0x8] sm:$0xff]
    %v1330 = vld [vmem:[%s10] sm:$0xff]
    %v1331 = vld [vmem:[%s10 + $0x8] sm:$0xff]
    %v1333 = vsel %vm628, %v1275, 0
    %v1336 = vsel %vm628, %v1278, 0
    %1338 = vmatpush.msra.mxu0 0.0
    %1339 = vmatpush.msra.mxu0 0.0
    %1340 = vmatpush.msra.mxu0 0.0
    %1341 = vmatpush.msra.mxu0 0.0
    %1342 = vmatpush.msra.mxu0 0.0
    %1343 = vmatpush.msra.mxu0 0.0
    %1344 = vmatpush.msra.mxu0 0.0
    %1345 = vmatpush.msra.mxu0 0.0
    %1346 = vmatpush.msra.mxu0 0.0
    %1347 = vmatpush.msra.mxu0 0.0
    %1348 = vmatpush.msra.mxu0 0.0
    %1349 = vmatpush.msra.mxu0 0.0
    %1350 = vmatpush.msra.mxu0 0.0
    %1351 = vmatpush.msra.mxu0 0.0
    %1352 = vmatpush.msra.mxu0 %v1331
    %1353 = vmatpush.msra.mxu0 %v1330
    %1354 = vmatmul.f32.gmra.mxu0 %v1333
    %v1355 = vpop.f32.mrf.mxu0
    %v1356 = vadd.f32 0.0, %v1355
    %1357 = vmatmul.f32.gmra.mxu0 %v1336
    %v1358 = vpop.f32.mrf.mxu0
    %v1359 = vadd.f32 0.0, %v1358
    %1360 = vdwg.mxu0
    %1362 = vset.pattern.permute.xlu0 0
    %1363 = vperm.xlu0 %1362, %v1328
    %v1364 = vpop.permute.xlu0 %1363
    %1367 = vset.pattern.permute.xlu0 0
    %1368 = vperm.xlu0 %1367, %v1329
    %v1369 = vpop.permute.xlu0 %1368
    %v1371 = vadd.f32 %v1364, %v1356
    %v1372 = vadd.f32 %v1369, %v1359
    %s1373 = scalar_lea.vmem %s10, 16
    %v1374 = vld [vmem:[%s1373] sm:$0xff]
    %v1375 = vld [vmem:[%s1373 + $0x8] sm:$0xff]
    %v1377 = vsel %vm628, %v1281, 0
    %v1380 = vsel %vm628, %v1284, 0
    %1382 = vmatpush.msra.mxu0 0.0
    %1383 = vmatpush.msra.mxu0 0.0
    %1384 = vmatpush.msra.mxu0 0.0
    %1385 = vmatpush.msra.mxu0 0.0
    %1386 = vmatpush.msra.mxu0 0.0
    %1387 = vmatpush.msra.mxu0 0.0
    %1388 = vmatpush.msra.mxu0 0.0
    %1389 = vmatpush.msra.mxu0 0.0
    %1390 = vmatpush.msra.mxu0 0.0
    %1391 = vmatpush.msra.mxu0 0.0
    %1392 = vmatpush.msra.mxu0 0.0
    %1393 = vmatpush.msra.mxu0 0.0
    %1394 = vmatpush.msra.mxu0 0.0
    %1395 = vmatpush.msra.mxu0 0.0
    %1396 = vmatpush.msra.mxu0 %v1375
    %1397 = vmatpush.msra.mxu0 %v1374
    %1398 = vmatmul.f32.gmra.mxu0 %v1377
    %v1399 = vpop.f32.mrf.mxu0
    %v1400 = vadd.f32 0.0, %v1399
    %1401 = vmatmul.f32.gmra.mxu0 %v1380
    %v1402 = vpop.f32.mrf.mxu0
    %v1403 = vadd.f32 0.0, %v1402
    %1404 = vdwg.mxu0
    %v1405 = vadd.f32 %v1371, %v1400
    %v1406 = vadd.f32 %v1372, %v1403
    %s1407 = scalar_lea.vmem %s10, 32
    %v1408 = vld [vmem:[%s1407] sm:$0xff]
    %v1409 = vld [vmem:[%s1407 + $0x8] sm:$0xff]
    %v1411 = vsel %vm628, %v1287, 0
    %v1414 = vsel %vm628, %v1290, 0
    %1416 = vmatpush.msra.mxu0 0.0
    %1417 = vmatpush.msra.mxu0 0.0
    %1418 = vmatpush.msra.mxu0 0.0
    %1419 = vmatpush.msra.mxu0 0.0
    %1420 = vmatpush.msra.mxu0 0.0
    %1421 = vmatpush.msra.mxu0 0.0
    %1422 = vmatpush.msra.mxu0 0.0
    %1423 = vmatpush.msra.mxu0 0.0
    %1424 = vmatpush.msra.mxu0 0.0
    %1425 = vmatpush.msra.mxu0 0.0
    %1426 = vmatpush.msra.mxu0 0.0
    %1427 = vmatpush.msra.mxu0 0.0
    %1428 = vmatpush.msra.mxu0 0.0
    %1429 = vmatpush.msra.mxu0 0.0
    %1430 = vmatpush.msra.mxu0 %v1409
    %1431 = vmatpush.msra.mxu0 %v1408
    %1432 = vmatmul.f32.gmra.mxu0 %v1411
    %v1433 = vpop.f32.mrf.mxu0
    %v1434 = vadd.f32 0.0, %v1433
    %1435 = vmatmul.f32.gmra.mxu0 %v1414
    %v1436 = vpop.f32.mrf.mxu0
    %v1437 = vadd.f32 0.0, %v1436
    %1438 = vdwg.mxu0
    %v1439 = vadd.f32 %v1405, %v1434
    %v1440 = vadd.f32 %v1406, %v1437
    %s1441 = scalar_lea.vmem %s10, 48
    %v1442 = vld [vmem:[%s1441] sm:$0xff]
    %v1443 = vld [vmem:[%s1441 + $0x8] sm:$0xff]
    %v1445 = vsel %vm628, %v1293, 0
    %v1448 = vsel %vm628, %v1296, 0
    %1450 = vmatpush.msra.mxu0 0.0
    %1451 = vmatpush.msra.mxu0 0.0
    %1452 = vmatpush.msra.mxu0 0.0
    %1453 = vmatpush.msra.mxu0 0.0
    %1454 = vmatpush.msra.mxu0 0.0
    %1455 = vmatpush.msra.mxu0 0.0
    %1456 = vmatpush.msra.mxu0 0.0
    %1457 = vmatpush.msra.mxu0 0.0
    %1458 = vmatpush.msra.mxu0 0.0
    %1459 = vmatpush.msra.mxu0 0.0
    %1460 = vmatpush.msra.mxu0 0.0
    %1461 = vmatpush.msra.mxu0 0.0
    %1462 = vmatpush.msra.mxu0 0.0
    %1463 = vmatpush.msra.mxu0 0.0
    %1464 = vmatpush.msra.mxu0 %v1443
    %1465 = vmatpush.msra.mxu0 %v1442
    %1466 = vmatmul.f32.gmra.mxu0 %v1445
    %v1467 = vpop.f32.mrf.mxu0
    %v1468 = vadd.f32 0.0, %v1467
    %1469 = vmatmul.f32.gmra.mxu0 %v1448
    %v1470 = vpop.f32.mrf.mxu0
    %v1471 = vadd.f32 0.0, %v1470
    %1472 = vdwg.mxu0
    %v1473 = vadd.f32 %v1439, %v1468
    %v1474 = vadd.f32 %v1440, %v1471
    %s1475 = scalar_lea.vmem %s10, 64
    %v1476 = vld [vmem:[%s1475] sm:$0xff]
    %v1477 = vld [vmem:[%s1475 + $0x8] sm:$0xff]
    %v1479 = vsel %vm628, %v1299, 0
    %v1482 = vsel %vm628, %v1302, 0
    %1484 = vmatpush.msra.mxu0 0.0
    %1485 = vmatpush.msra.mxu0 0.0
    %1486 = vmatpush.msra.mxu0 0.0
    %1487 = vmatpush.msra.mxu0 0.0
    %1488 = vmatpush.msra.mxu0 0.0
    %1489 = vmatpush.msra.mxu0 0.0
    %1490 = vmatpush.msra.mxu0 0.0
    %1491 = vmatpush.msra.mxu0 0.0
    %1492 = vmatpush.msra.mxu0 0.0
    %1493 = vmatpush.msra.mxu0 0.0
    %1494 = vmatpush.msra.mxu0 0.0
    %1495 = vmatpush.msra.mxu0 0.0
    %1496 = vmatpush.msra.mxu0 0.0
    %1497 = vmatpush.msra.mxu0 0.0
    %1498 = vmatpush.msra.mxu0 %v1477
    %1499 = vmatpush.msra.mxu0 %v1476
    %1500 = vmatmul.f32.gmra.mxu0 %v1479
    %v1501 = vpop.f32.mrf.mxu0
    %v1502 = vadd.f32 0.0, %v1501
    %1503 = vmatmul.f32.gmra.mxu0 %v1482
    %v1504 = vpop.f32.mrf.mxu0
    %v1505 = vadd.f32 0.0, %v1504
    %1506 = vdwg.mxu0
    %v1507 = vadd.f32 %v1473, %v1502
    %v1508 = vadd.f32 %v1474, %v1505
    %s1509 = scalar_lea.vmem %s10, 80
    %v1510 = vld [vmem:[%s1509] sm:$0xff]
    %v1511 = vld [vmem:[%s1509 + $0x8] sm:$0xff]
    %v1513 = vsel %vm628, %v1305, 0
    %v1516 = vsel %vm628, %v1308, 0
    %1518 = vmatpush.msra.mxu0 0.0
    %1519 = vmatpush.msra.mxu0 0.0
    %1520 = vmatpush.msra.mxu0 0.0
    %1521 = vmatpush.msra.mxu0 0.0
    %1522 = vmatpush.msra.mxu0 0.0
    %1523 = vmatpush.msra.mxu0 0.0
    %1524 = vmatpush.msra.mxu0 0.0
    %1525 = vmatpush.msra.mxu0 0.0
    %1526 = vmatpush.msra.mxu0 0.0
    %1527 = vmatpush.msra.mxu0 0.0
    %1528 = vmatpush.msra.mxu0 0.0
    %1529 = vmatpush.msra.mxu0 0.0
    %1530 = vmatpush.msra.mxu0 0.0
    %1531 = vmatpush.msra.mxu0 0.0
    %1532 = vmatpush.msra.mxu0 %v1511
    %1533 = vmatpush.msra.mxu0 %v1510
    %1534 = vmatmul.f32.gmra.mxu0 %v1513
    %v1535 = vpop.f32.mrf.mxu0
    %v1536 = vadd.f32 0.0, %v1535
    %1537 = vmatmul.f32.gmra.mxu0 %v1516
    %v1538 = vpop.f32.mrf.mxu0
    %v1539 = vadd.f32 0.0, %v1538
    %1540 = vdwg.mxu0
    %v1541 = vadd.f32 %v1507, %v1536
    %v1542 = vadd.f32 %v1508, %v1539
    %s1543 = scalar_lea.vmem %s10, 96
    %v1544 = vld [vmem:[%s1543] sm:$0xff]
    %v1545 = vld [vmem:[%s1543 + $0x8] sm:$0xff]
    %v1547 = vsel %vm628, %v1311, 0
    %v1550 = vsel %vm628, %v1314, 0
    %1552 = vmatpush.msra.mxu0 0.0
    %1553 = vmatpush.msra.mxu0 0.0
    %1554 = vmatpush.msra.mxu0 0.0
    %1555 = vmatpush.msra.mxu0 0.0
    %1556 = vmatpush.msra.mxu0 0.0
    %1557 = vmatpush.msra.mxu0 0.0
    %1558 = vmatpush.msra.mxu0 0.0
    %1559 = vmatpush.msra.mxu0 0.0
    %1560 = vmatpush.msra.mxu0 0.0
    %1561 = vmatpush.msra.mxu0 0.0
    %1562 = vmatpush.msra.mxu0 0.0
    %1563 = vmatpush.msra.mxu0 0.0
    %1564 = vmatpush.msra.mxu0 0.0
    %1565 = vmatpush.msra.mxu0 0.0
    %1566 = vmatpush.msra.mxu0 %v1545
    %1567 = vmatpush.msra.mxu0 %v1544
    %1568 = vmatmul.f32.gmra.mxu0 %v1547
    %v1569 = vpop.f32.mrf.mxu0
    %v1570 = vadd.f32 0.0, %v1569
    %1571 = vmatmul.f32.gmra.mxu0 %v1550
    %v1572 = vpop.f32.mrf.mxu0
    %v1573 = vadd.f32 0.0, %v1572
    %1574 = vdwg.mxu0
    %v1575 = vadd.f32 %v1541, %v1570
    %v1576 = vadd.f32 %v1542, %v1573
    %s1577 = scalar_lea.vmem %s10, 112
    %v1578 = vld [vmem:[%s1577] sm:$0xff]
    %v1579 = vld [vmem:[%s1577 + $0x8] sm:$0xff]
    %v1581 = vsel %vm628, %v1317, 0
    %v1584 = vsel %vm628, %v1320, 0
    %1586 = vmatpush.msra.mxu0 0.0
    %1587 = vmatpush.msra.mxu0 0.0
    %1588 = vmatpush.msra.mxu0 0.0
    %1589 = vmatpush.msra.mxu0 0.0
    %1590 = vmatpush.msra.mxu0 0.0
    %1591 = vmatpush.msra.mxu0 0.0
    %1592 = vmatpush.msra.mxu0 0.0
    %1593 = vmatpush.msra.mxu0 0.0
    %1594 = vmatpush.msra.mxu0 0.0
    %1595 = vmatpush.msra.mxu0 0.0
    %1596 = vmatpush.msra.mxu0 0.0
    %1597 = vmatpush.msra.mxu0 0.0
    %1598 = vmatpush.msra.mxu0 0.0
    %1599 = vmatpush.msra.mxu0 0.0
    %1600 = vmatpush.msra.mxu0 %v1579
    %1601 = vmatpush.msra.mxu0 %v1578
    %1602 = vmatmul.f32.gmra.mxu0 %v1581
    %v1603 = vpop.f32.mrf.mxu0
    %v1604 = vadd.f32 0.0, %v1603
    %1605 = vmatmul.f32.gmra.mxu0 %v1584
    %v1606 = vpop.f32.mrf.mxu0
    %v1607 = vadd.f32 0.0, %v1606
    %1608 = vdwg.mxu0
    %v1609 = vadd.f32 %v1575, %v1604
    %v1610 = vadd.f32 %v1576, %v1607
    %s1611 = scalar_lea.vmem %s10, 128
    %v1612 = vld [vmem:[%s1611] sm:$0xff]
    %v1613 = vld [vmem:[%s1611 + $0x8] sm:$0xff]
    %v1615 = vsel %vm628, %v1323, 0
    %v1618 = vsel %vm628, %v1326, 0
    %1620 = vmatpush.msra.mxu0 0.0
    %1621 = vmatpush.msra.mxu0 0.0
    %1622 = vmatpush.msra.mxu0 0.0
    %1623 = vmatpush.msra.mxu0 0.0
    %1624 = vmatpush.msra.mxu0 0.0
    %1625 = vmatpush.msra.mxu0 0.0
    %1626 = vmatpush.msra.mxu0 0.0
    %1627 = vmatpush.msra.mxu0 0.0
    %1628 = vmatpush.msra.mxu0 0.0
    %1629 = vmatpush.msra.mxu0 0.0
    %1630 = vmatpush.msra.mxu0 0.0
    %1631 = vmatpush.msra.mxu0 0.0
    %1632 = vmatpush.msra.mxu0 0.0
    %1633 = vmatpush.msra.mxu0 0.0
    %1634 = vmatpush.msra.mxu0 %v1613
    %1635 = vmatpush.msra.mxu0 %v1612
    %1636 = vmatmul.f32.gmra.mxu0 %v1615
    %v1637 = vpop.f32.mrf.mxu0
    %v1638 = vadd.f32 0.0, %v1637
    %1639 = vmatmul.f32.gmra.mxu0 %v1618
    %v1640 = vpop.f32.mrf.mxu0
    %v1641 = vadd.f32 0.0, %v1640
    %1642 = vdwg.mxu0
    %v1643 = vadd.f32 %v1609, %v1638
    %v1644 = vadd.f32 %v1610, %v1641
    %v1645 = vld [vmem:[%s12] sm:$0xff]
    %v1646 = vld [vmem:[%s12 + $0x8] sm:$0xff]
    %v1648 = vsel %vm628, %v1643, 0
    %v1651 = vsel %vm628, %v1644, 0
    %1653 = vmatpush.msra.mxu0 0.0
    %1654 = vmatpush.msra.mxu0 0.0
    %1655 = vmatpush.msra.mxu0 0.0
    %1656 = vmatpush.msra.mxu0 0.0
    %1657 = vmatpush.msra.mxu0 0.0
    %1658 = vmatpush.msra.mxu0 0.0
    %1659 = vmatpush.msra.mxu0 0.0
    %1660 = vmatpush.msra.mxu0 0.0
    %1661 = vmatpush.msra.mxu0 0.0
    %1662 = vmatpush.msra.mxu0 0.0
    %1663 = vmatpush.msra.mxu0 0.0
    %1664 = vmatpush.msra.mxu0 0.0
    %1665 = vmatpush.msra.mxu0 0.0
    %1666 = vmatpush.msra.mxu0 0.0
    %1667 = vmatpush.msra.mxu0 %v1646
    %1668 = vmatpush.msra.mxu0 %v1645
    %1669 = vmatmul.f32.gmra.mxu0 %v1648
    %v1670 = vpop.f32.mrf.mxu0
    %v1671 = vadd.f32 0.0, %v1670
    %1672 = vmatmul.f32.gmra.mxu0 %v1651
    %v1673 = vpop.f32.mrf.mxu0
    %v1674 = vadd.f32 0.0, %v1673
    %1675 = vdwg.mxu0
    %1678 = vrot.lane.b32.xlu0 %v1671, 124
    %v1679 = vpop.permute.xlu0 %1678
    %1680 = vrot.lane.b32.xlu0 %v1674, 124
    %v1681 = vpop.permute.xlu0 %1680
    %v1684 = vmax.f32 %v1671, %v1679
    %v1685 = vmax.f32 %v1674, %v1681
    %1688 = vrot.lane.b32.xlu0 %v1684, 120
    %v1689 = vpop.permute.xlu0 %1688
    %1690 = vrot.lane.b32.xlu0 %v1685, 120
    %v1691 = vpop.permute.xlu0 %1690
    %v1694 = vmax.f32 %v1684, %v1689
    %v1695 = vmax.f32 %v1685, %v1691
    %v1696 = vmax.f32 %v1694, 0.0
    %v1697 = vmax.f32 %v1695, 0.0
    %v1698 = vld [vmem:[%s14] sm:$0x1]
    %v1699 = vld [vmem:[%s13] sm:$0xf]
    %vm1700 = vcmask 31744
    %v1702 = vsel %vm1700, %v1696, 0
    %v1705 = vsel %vm341, %v1699, 0
    %1707 = vmatpush.msra.mxu0 0.0
    %1708 = vmatpush.msra.mxu0 0.0
    %1709 = vmatpush.msra.mxu0 0.0
    %1710 = vmatpush.msra.mxu0 0.0
    %1711 = vmatpush.msra.mxu0 0.0
    %1712 = vmatpush.msra.mxu0 0.0
    %1713 = vmatpush.msra.mxu0 0.0
    %1714 = vmatpush.msra.mxu0 0.0
    %1715 = vmatpush.msra.mxu0 0.0
    %1716 = vmatpush.msra.mxu0 0.0
    %1717 = vmatpush.msra.mxu0 0.0
    %1718 = vmatpush.msra.mxu0 0.0
    %1719 = vmatpush.msra.mxu0 0.0
    %1720 = vmatpush.msra.mxu0 0.0
    %1721 = vmatpush.msra.mxu0 0.0
    %1722 = vmatpush.msra.mxu0 %v1705
    %1723 = vmatmul.f32.gmra.mxu0 %v1702
    %v1724 = vpop.f32.mrf.mxu0
    %v1725 = vadd.f32 0.0, %v1724
    %1726 = vdwg.mxu0
    %v1728 = vperm.slane %v1698, 0
    %v1730 = vadd.f32 %v1728, %v1725
    %s1731 = scalar_lea.vmem %s13, 4
    %v1732 = vld [vmem:[%s1731] sm:$0xf]
    %v1733 = vrot.slane %v1696, 2
    %v1734 = vsel %vm1700, %v1733, 0
    %v1737 = vsel %vm341, %v1732, 0
    %1739 = vmatpush.msra.mxu0 0.0
    %1740 = vmatpush.msra.mxu0 0.0
    %1741 = vmatpush.msra.mxu0 0.0
    %1742 = vmatpush.msra.mxu0 0.0
    %1743 = vmatpush.msra.mxu0 0.0
    %1744 = vmatpush.msra.mxu0 0.0
    %1745 = vmatpush.msra.mxu0 0.0
    %1746 = vmatpush.msra.mxu0 0.0
    %1747 = vmatpush.msra.mxu0 0.0
    %1748 = vmatpush.msra.mxu0 0.0
    %1749 = vmatpush.msra.mxu0 0.0
    %1750 = vmatpush.msra.mxu0 0.0
    %1751 = vmatpush.msra.mxu0 0.0
    %1752 = vmatpush.msra.mxu0 0.0
    %1753 = vmatpush.msra.mxu0 0.0
    %1754 = vmatpush.msra.mxu0 %v1737
    %1755 = vmatmul.f32.gmra.mxu0 %v1734
    %v1756 = vpop.f32.mrf.mxu0
    %v1757 = vadd.f32 0.0, %v1756
    %1758 = vdwg.mxu0
    %v1759 = vadd.f32 %v1730, %v1757
    %s1760 = scalar_lea.vmem %s13, 8
    %v1761 = vld [vmem:[%s1760] sm:$0xf]
    %v1762 = vrot.slane %v1696, 4
    %v1763 = vsel %vm1700, %v1762, 0
    %v1766 = vsel %vm341, %v1761, 0
    %1768 = vmatpush.msra.mxu0 0.0
    %1769 = vmatpush.msra.mxu0 0.0
    %1770 = vmatpush.msra.mxu0 0.0
    %1771 = vmatpush.msra.mxu0 0.0
    %1772 = vmatpush.msra.mxu0 0.0
    %1773 = vmatpush.msra.mxu0 0.0
    %1774 = vmatpush.msra.mxu0 0.0
    %1775 = vmatpush.msra.mxu0 0.0
    %1776 = vmatpush.msra.mxu0 0.0
    %1777 = vmatpush.msra.mxu0 0.0
    %1778 = vmatpush.msra.mxu0 0.0
    %1779 = vmatpush.msra.mxu0 0.0
    %1780 = vmatpush.msra.mxu0 0.0
    %1781 = vmatpush.msra.mxu0 0.0
    %1782 = vmatpush.msra.mxu0 0.0
    %1783 = vmatpush.msra.mxu0 %v1766
    %1784 = vmatmul.f32.gmra.mxu0 %v1763
    %v1785 = vpop.f32.mrf.mxu0
    %v1786 = vadd.f32 0.0, %v1785
    %1787 = vdwg.mxu0
    %v1788 = vadd.f32 %v1759, %v1786
    %s1789 = scalar_lea.vmem %s13, 12
    %v1790 = vld [vmem:[%s1789] sm:$0xf]
    %v1791 = vrot.slane %v1696, 6
    %v1792 = vsel %vm1700, %v1791, 0
    %v1795 = vsel %vm341, %v1790, 0
    %1797 = vmatpush.msra.mxu0 0.0
    %1798 = vmatpush.msra.mxu0 0.0
    %1799 = vmatpush.msra.mxu0 0.0
    %1800 = vmatpush.msra.mxu0 0.0
    %1801 = vmatpush.msra.mxu0 0.0
    %1802 = vmatpush.msra.mxu0 0.0
    %1803 = vmatpush.msra.mxu0 0.0
    %1804 = vmatpush.msra.mxu0 0.0
    %1805 = vmatpush.msra.mxu0 0.0
    %1806 = vmatpush.msra.mxu0 0.0
    %1807 = vmatpush.msra.mxu0 0.0
    %1808 = vmatpush.msra.mxu0 0.0
    %1809 = vmatpush.msra.mxu0 0.0
    %1810 = vmatpush.msra.mxu0 0.0
    %1811 = vmatpush.msra.mxu0 0.0
    %1812 = vmatpush.msra.mxu0 %v1795
    %1813 = vmatmul.f32.gmra.mxu0 %v1792
    %v1814 = vpop.f32.mrf.mxu0
    %v1815 = vadd.f32 0.0, %v1814
    %1816 = vdwg.mxu0
    %v1817 = vadd.f32 %v1788, %v1815
    %s1818 = scalar_lea.vmem %s13, 16
    %v1819 = vld [vmem:[%s1818] sm:$0xf]
    %v1821 = vsel %vm1700, %v1697, 0
    %v1824 = vsel %vm341, %v1819, 0
    %1826 = vmatpush.msra.mxu0 0.0
    %1827 = vmatpush.msra.mxu0 0.0
    %1828 = vmatpush.msra.mxu0 0.0
    %1829 = vmatpush.msra.mxu0 0.0
    %1830 = vmatpush.msra.mxu0 0.0
    %1831 = vmatpush.msra.mxu0 0.0
    %1832 = vmatpush.msra.mxu0 0.0
    %1833 = vmatpush.msra.mxu0 0.0
    %1834 = vmatpush.msra.mxu0 0.0
    %1835 = vmatpush.msra.mxu0 0.0
    %1836 = vmatpush.msra.mxu0 0.0
    %1837 = vmatpush.msra.mxu0 0.0
    %1838 = vmatpush.msra.mxu0 0.0
    %1839 = vmatpush.msra.mxu0 0.0
    %1840 = vmatpush.msra.mxu0 0.0
    %1841 = vmatpush.msra.mxu0 %v1824
    %1842 = vmatmul.f32.gmra.mxu0 %v1821
    %v1843 = vpop.f32.mrf.mxu0
    %v1844 = vadd.f32 0.0, %v1843
    %1845 = vdwg.mxu0
    %v1846 = vadd.f32 %v1817, %v1844
    %s1847 = scalar_lea.vmem %s13, 20
    %v1848 = vld [vmem:[%s1847] sm:$0xf]
    %v1849 = vrot.slane %v1697, 2
    %v1850 = vsel %vm1700, %v1849, 0
    %v1853 = vsel %vm341, %v1848, 0
    %1855 = vmatpush.msra.mxu0 0.0
    %1856 = vmatpush.msra.mxu0 0.0
    %1857 = vmatpush.msra.mxu0 0.0
    %1858 = vmatpush.msra.mxu0 0.0
    %1859 = vmatpush.msra.mxu0 0.0
    %1860 = vmatpush.msra.mxu0 0.0
    %1861 = vmatpush.msra.mxu0 0.0
    %1862 = vmatpush.msra.mxu0 0.0
    %1863 = vmatpush.msra.mxu0 0.0
    %1864 = vmatpush.msra.mxu0 0.0
    %1865 = vmatpush.msra.mxu0 0.0
    %1866 = vmatpush.msra.mxu0 0.0
    %1867 = vmatpush.msra.mxu0 0.0
    %1868 = vmatpush.msra.mxu0 0.0
    %1869 = vmatpush.msra.mxu0 0.0
    %1870 = vmatpush.msra.mxu0 %v1853
    %1871 = vmatmul.f32.gmra.mxu0 %v1850
    %v1872 = vpop.f32.mrf.mxu0
    %v1873 = vadd.f32 0.0, %v1872
    %1874 = vdwg.mxu0
    %v1875 = vadd.f32 %v1846, %v1873
    %s1876 = scalar_lea.vmem %s13, 24
    %v1877 = vld [vmem:[%s1876] sm:$0xf]
    %v1878 = vrot.slane %v1697, 4
    %v1879 = vsel %vm1700, %v1878, 0
    %v1882 = vsel %vm341, %v1877, 0
    %1884 = vmatpush.msra.mxu0 0.0
    %1885 = vmatpush.msra.mxu0 0.0
    %1886 = vmatpush.msra.mxu0 0.0
    %1887 = vmatpush.msra.mxu0 0.0
    %1888 = vmatpush.msra.mxu0 0.0
    %1889 = vmatpush.msra.mxu0 0.0
    %1890 = vmatpush.msra.mxu0 0.0
    %1891 = vmatpush.msra.mxu0 0.0
    %1892 = vmatpush.msra.mxu0 0.0
    %1893 = vmatpush.msra.mxu0 0.0
    %1894 = vmatpush.msra.mxu0 0.0
    %1895 = vmatpush.msra.mxu0 0.0
    %1896 = vmatpush.msra.mxu0 0.0
    %1897 = vmatpush.msra.mxu0 0.0
    %1898 = vmatpush.msra.mxu0 0.0
    %1899 = vmatpush.msra.mxu0 %v1882
    %1900 = vmatmul.f32.gmra.mxu0 %v1879
    %v1901 = vpop.f32.mrf.mxu0
    %v1902 = vadd.f32 0.0, %v1901
    %1903 = vdwg.mxu0
    %v1904 = vadd.f32 %v1875, %v1902
    %s1905 = scalar_lea.vmem %s13, 28
    %v1906 = vld [vmem:[%s1905] sm:$0xf]
    %v1907 = vrot.slane %v1697, 6
    %v1908 = vsel %vm1700, %v1907, 0
    %v1911 = vsel %vm341, %v1906, 0
    %1913 = vmatpush.msra.mxu0 0.0
    %1914 = vmatpush.msra.mxu0 0.0
    %1915 = vmatpush.msra.mxu0 0.0
    %1916 = vmatpush.msra.mxu0 0.0
    %1917 = vmatpush.msra.mxu0 0.0
    %1918 = vmatpush.msra.mxu0 0.0
    %1919 = vmatpush.msra.mxu0 0.0
    %1920 = vmatpush.msra.mxu0 0.0
    %1921 = vmatpush.msra.mxu0 0.0
    %1922 = vmatpush.msra.mxu0 0.0
    %1923 = vmatpush.msra.mxu0 0.0
    %1924 = vmatpush.msra.mxu0 0.0
    %1925 = vmatpush.msra.mxu0 0.0
    %1926 = vmatpush.msra.mxu0 0.0
    %1927 = vmatpush.msra.mxu0 0.0
    %1928 = vmatpush.msra.mxu0 %v1911
    %1929 = vmatmul.f32.gmra.mxu0 %v1908
    %v1930 = vpop.f32.mrf.mxu0
    %v1931 = vadd.f32 0.0, %v1930
    %1932 = vdwg.mxu0
    %v1933 = vadd.f32 %v1904, %v1931
    %v1934 = vmax.f32 %v1933, 0.0
    %v1935 = vld [vmem:[#allocation7] sm:$0xff]
    %v1936 = vld [vmem:[#allocation7 + $0x8] sm:$0xff]
    %v1937 = vld [vmem:[#allocation7 + $0x10] sm:$0xff]
    %v1938 = vld [vmem:[#allocation7 + $0x18] sm:$0xff]
    %v1939 = vld [vmem:[#allocation7 + $0x20] sm:$0xff]
    %v1940 = vld [vmem:[#allocation7 + $0x28] sm:$0xff]
    %v1941 = vld [vmem:[#allocation7 + $0x30] sm:$0xff]
    %v1942 = vld [vmem:[#allocation7 + $0x38] sm:$0xff]
    %v1943 = vld [vmem:[#allocation7 + $0x40] sm:$0xff]
    %v1944 = vld [vmem:[#allocation7 + $0x48] sm:$0xff]
    %v1945 = vld [vmem:[#allocation7 + $0x50] sm:$0xff]
    %v1946 = vld [vmem:[#allocation7 + $0x58] sm:$0xff]
    %v1947 = vld [vmem:[#allocation7 + $0x60] sm:$0xff]
    %v1948 = vld [vmem:[#allocation7 + $0x68] sm:$0xff]
    %v1949 = vld [vmem:[#allocation7 + $0x70] sm:$0xff]
    %v1950 = vld [vmem:[#allocation7 + $0x78] sm:$0xff]
    %v1951 = vld [vmem:[#allocation7 + $0x80] sm:$0xff]
    %v1952 = vld [vmem:[#allocation7 + $0x88] sm:$0xff]
    %v1953 = vld [vmem:[#allocation7 + $0x90] sm:$0xff]
    %v1954 = vld [vmem:[#allocation7 + $0x98] sm:$0xff]
    %v1955 = vld [vmem:[#allocation7 + $0xa0] sm:$0xff]
    %v1956 = vld [vmem:[#allocation7 + $0xa8] sm:$0xff]
    %v1957 = vld [vmem:[#allocation7 + $0xb0] sm:$0xff]
    %v1958 = vld [vmem:[#allocation7 + $0xb8] sm:$0xff]
    %v1959 = vld [vmem:[#allocation7 + $0xc0] sm:$0xff]
    %v1960 = vld [vmem:[#allocation7 + $0xc8] sm:$0xff]
    %v1961 = vld [vmem:[#allocation7 + $0xd0] sm:$0xff]
    %v1962 = vld [vmem:[#allocation7 + $0xd8] sm:$0xff]
    %v1963 = vld [vmem:[#allocation7 + $0xe0] sm:$0xff]
    %v1964 = vld [vmem:[#allocation7 + $0xe8] sm:$0xff]
    %v1965 = vld [vmem:[#allocation7 + $0xf0] sm:$0xff]
    %v1966 = vld [vmem:[#allocation7 + $0xf8] sm:$0xff]
    %v1967 = vld [vmem:[#allocation7 + $0x100] sm:$0xff]
    %v1968 = vld [vmem:[#allocation7 + $0x108] sm:$0xff]
    %v1969 = vld [vmem:[#allocation7 + $0x110] sm:$0xff]
    %v1970 = vld [vmem:[#allocation7 + $0x118] sm:$0xff]
    %v1971 = vld [vmem:[#allocation7 + $0x120] sm:$0xff]
    %v1972 = vld [vmem:[#allocation7 + $0x128] sm:$0xff]
    %v1973 = vld [vmem:[#allocation7 + $0x130] sm:$0xff]
    %v1974 = vld [vmem:[#allocation7 + $0x138] sm:$0xff]
    %v1975 = vld [vmem:[#allocation7 + $0x140] sm:$0xff]
    %v1976 = vld [vmem:[#allocation7 + $0x148] sm:$0xff]
    %v1977 = vld [vmem:[#allocation7 + $0x150] sm:$0xff]
    %v1978 = vld [vmem:[#allocation7 + $0x158] sm:$0xff]
    %v1979 = vld [vmem:[#allocation7 + $0x160] sm:$0xff]
    %v1980 = vld [vmem:[#allocation7 + $0x168] sm:$0xff]
    %v1981 = vld [vmem:[#allocation7 + $0x170] sm:$0xff]
    %v1982 = vld [vmem:[#allocation7 + $0x178] sm:$0xff]
    %v1983 = vld [vmem:[#allocation7 + $0x180] sm:$0xff]
    %v1984 = vld [vmem:[#allocation7 + $0x188] sm:$0xff]
    %v1985 = vld [vmem:[#allocation7 + $0x190] sm:$0xff]
    %v1986 = vld [vmem:[#allocation7 + $0x198] sm:$0xff]
    %v1987 = vld [vmem:[#allocation7 + $0x1a0] sm:$0xff]
    %v1988 = vld [vmem:[#allocation7 + $0x1a8] sm:$0xff]
    %v1989 = vld [vmem:[#allocation7 + $0x1b0] sm:$0xff]
    %v1990 = vld [vmem:[#allocation7 + $0x1b8] sm:$0xff]
    %v1991 = vld [vmem:[#allocation7 + $0x1c0] sm:$0xff]
    %v1992 = vld [vmem:[#allocation7 + $0x1c8] sm:$0xff]
    %v1993 = vld [vmem:[#allocation7 + $0x1d0] sm:$0xff]
    %v1994 = vld [vmem:[#allocation7 + $0x1d8] sm:$0xff]
    %v1995 = vld [vmem:[#allocation7 + $0x1e0] sm:$0xff]
    %v1996 = vld [vmem:[#allocation7 + $0x1e8] sm:$0xff]
    %v1997 = vld [vmem:[#allocation7 + $0x1f0] sm:$0xff]
    %v1998 = vld [vmem:[#allocation7 + $0x1f8] sm:$0xff]
    %v1999 = vld [vmem:[%s16] sm:$0xf]
    %v2001 = vperm.slane %v1999, 0
    %v2002 = vperm.slane %v1999, 1
    %v2003 = vperm.slane %v1999, 2
    %v2004 = vperm.slane %v1999, 3
    %2009 = vmatpush.msra.mxu0 %v1995
    %2010 = vmatpush.msra.mxu0 %v1991
    %2011 = vmatpush.msra.mxu0 %v1987
    %2012 = vmatpush.msra.mxu0 %v1983
    %2013 = vmatpush.msra.mxu0 %v1979
    %2014 = vmatpush.msra.mxu0 %v1975
    %2015 = vmatpush.msra.mxu0 %v1971
    %2016 = vmatpush.msra.mxu0 %v1967
    %2017 = vmatpush.msra.mxu0 %v1963
    %2018 = vmatpush.msra.mxu0 %v1959
    %2019 = vmatpush.msra.mxu0 %v1955
    %2020 = vmatpush.msra.mxu0 %v1951
    %2021 = vmatpush.msra.mxu0 %v1947
    %2022 = vmatpush.msra.mxu0 %v1943
    %2023 = vmatpush.msra.mxu0 %v1939
    %2024 = vmatpush.msra.mxu0 %v1935
    %2025 = vmatmul.f32.gmra.mxu0 %v1934
    %v2026 = vpop.f32.mrf.mxu0
    %v2027 = vadd.f32 %v2001, %v2026
    %2028 = vdwg.mxu0
    %2029 = vmatpush.msra.mxu0 %v1996
    %2030 = vmatpush.msra.mxu0 %v1992
    %2031 = vmatpush.msra.mxu0 %v1988
    %2032 = vmatpush.msra.mxu0 %v1984
    %2033 = vmatpush.msra.mxu0 %v1980
    %2034 = vmatpush.msra.mxu0 %v1976
    %2035 = vmatpush.msra.mxu0 %v1972
    %2036 = vmatpush.msra.mxu0 %v1968
    %2037 = vmatpush.msra.mxu0 %v1964
    %2038 = vmatpush.msra.mxu0 %v1960
    %2039 = vmatpush.msra.mxu0 %v1956
    %2040 = vmatpush.msra.mxu0 %v1952
    %2041 = vmatpush.msra.mxu0 %v1948
    %2042 = vmatpush.msra.mxu0 %v1944
    %2043 = vmatpush.msra.mxu0 %v1940
    %2044 = vmatpush.msra.mxu0 %v1936
    %2045 = vmatmul.f32.gmra.mxu0 %v1934
    %v2046 = vpop.f32.mrf.mxu0
    %v2047 = vadd.f32 %v2002, %v2046
    %2048 = vdwg.mxu0
    %2049 = vmatpush.msra.mxu0 %v1997
    %2050 = vmatpush.msra.mxu0 %v1993
    %2051 = vmatpush.msra.mxu0 %v1989
    %2052 = vmatpush.msra.mxu0 %v1985
    %2053 = vmatpush.msra.mxu0 %v1981
    %2054 = vmatpush.msra.mxu0 %v1977
    %2055 = vmatpush.msra.mxu0 %v1973
    %2056 = vmatpush.msra.mxu0 %v1969
    %2057 = vmatpush.msra.mxu0 %v1965
    %2058 = vmatpush.msra.mxu0 %v1961
    %2059 = vmatpush.msra.mxu0 %v1957
    %2060 = vmatpush.msra.mxu0 %v1953
    %2061 = vmatpush.msra.mxu0 %v1949
    %2062 = vmatpush.msra.mxu0 %v1945
    %2063 = vmatpush.msra.mxu0 %v1941
    %2064 = vmatpush.msra.mxu0 %v1937
    %2065 = vmatmul.f32.gmra.mxu0 %v1934
    %v2066 = vpop.f32.mrf.mxu0
    %v2067 = vadd.f32 %v2003, %v2066
    %2068 = vdwg.mxu0
    %2069 = vmatpush.msra.mxu0 %v1998
    %2070 = vmatpush.msra.mxu0 %v1994
    %2071 = vmatpush.msra.mxu0 %v1990
    %2072 = vmatpush.msra.mxu0 %v1986
    %2073 = vmatpush.msra.mxu0 %v1982
    %2074 = vmatpush.msra.mxu0 %v1978
    %2075 = vmatpush.msra.mxu0 %v1974
    %2076 = vmatpush.msra.mxu0 %v1970
    %2077 = vmatpush.msra.mxu0 %v1966
    %2078 = vmatpush.msra.mxu0 %v1962
    %2079 = vmatpush.msra.mxu0 %v1958
    %2080 = vmatpush.msra.mxu0 %v1954
    %2081 = vmatpush.msra.mxu0 %v1950
    %2082 = vmatpush.msra.mxu0 %v1946
    %2083 = vmatpush.msra.mxu0 %v1942
    %2084 = vmatpush.msra.mxu0 %v1938
    %2085 = vmatmul.f32.gmra.mxu0 %v1934
    %v2086 = vpop.f32.mrf.mxu0
    %v2087 = vadd.f32 %v2004, %v2086
    %2088 = vdwg.mxu0
    %v2089 = vmax.f32 %v2027, 0.0
    %v2090 = vmax.f32 %v2047, 0.0
    %v2091 = vmax.f32 %v2067, 0.0
    %v2092 = vmax.f32 %v2087, 0.0
    %v2093 = vld [vmem:[#allocation8] sm:$0xff]
    %v2094 = vld [vmem:[#allocation8 + $0x8] sm:$0xff]
    %v2095 = vld [vmem:[#allocation8 + $0x10] sm:$0xff]
    %v2096 = vld [vmem:[#allocation8 + $0x18] sm:$0xff]
    %v2097 = vld [vmem:[#allocation8 + $0x20] sm:$0xff]
    %v2098 = vld [vmem:[#allocation8 + $0x28] sm:$0xff]
    %v2099 = vld [vmem:[#allocation8 + $0x30] sm:$0xff]
    %v2100 = vld [vmem:[#allocation8 + $0x38] sm:$0xff]
    %v2101 = vld [vmem:[#allocation8 + $0x40] sm:$0xff]
    %v2102 = vld [vmem:[#allocation8 + $0x48] sm:$0xff]
    %v2103 = vld [vmem:[#allocation8 + $0x50] sm:$0xff]
    %v2104 = vld [vmem:[#allocation8 + $0x58] sm:$0xff]
    %v2105 = vld [vmem:[#allocation8 + $0x60] sm:$0xff]
    %v2106 = vld [vmem:[#allocation8 + $0x68] sm:$0xff]
    %v2107 = vld [vmem:[#allocation8 + $0x70] sm:$0xff]
    %v2108 = vld [vmem:[#allocation8 + $0x78] sm:$0xff]
    %v2109 = vld [vmem:[#allocation8 + $0x80] sm:$0xff]
    %v2110 = vld [vmem:[#allocation8 + $0x88] sm:$0xff]
    %v2111 = vld [vmem:[#allocation8 + $0x90] sm:$0xff]
    %v2112 = vld [vmem:[#allocation8 + $0x98] sm:$0xff]
    %v2113 = vld [vmem:[#allocation8 + $0xa0] sm:$0xff]
    %v2114 = vld [vmem:[#allocation8 + $0xa8] sm:$0xff]
    %v2115 = vld [vmem:[#allocation8 + $0xb0] sm:$0xff]
    %v2116 = vld [vmem:[#allocation8 + $0xb8] sm:$0xff]
    %v2117 = vld [vmem:[#allocation8 + $0xc0] sm:$0xff]
    %v2118 = vld [vmem:[#allocation8 + $0xc8] sm:$0xff]
    %v2119 = vld [vmem:[#allocation8 + $0xd0] sm:$0xff]
    %v2120 = vld [vmem:[#allocation8 + $0xd8] sm:$0xff]
    %v2121 = vld [vmem:[#allocation8 + $0xe0] sm:$0xff]
    %v2122 = vld [vmem:[#allocation8 + $0xe8] sm:$0xff]
    %v2123 = vld [vmem:[#allocation8 + $0xf0] sm:$0xff]
    %v2124 = vld [vmem:[#allocation8 + $0xf8] sm:$0xff]
    %v2125 = vld [vmem:[#allocation8 + $0x100] sm:$0xff]
    %v2126 = vld [vmem:[#allocation8 + $0x108] sm:$0xff]
    %v2127 = vld [vmem:[#allocation8 + $0x110] sm:$0xff]
    %v2128 = vld [vmem:[#allocation8 + $0x118] sm:$0xff]
    %v2129 = vld [vmem:[#allocation8 + $0x120] sm:$0xff]
    %v2130 = vld [vmem:[#allocation8 + $0x128] sm:$0xff]
    %v2131 = vld [vmem:[#allocation8 + $0x130] sm:$0xff]
    %v2132 = vld [vmem:[#allocation8 + $0x138] sm:$0xff]
    %v2133 = vld [vmem:[#allocation8 + $0x140] sm:$0xff]
    %v2134 = vld [vmem:[#allocation8 + $0x148] sm:$0xff]
    %v2135 = vld [vmem:[#allocation8 + $0x150] sm:$0xff]
    %v2136 = vld [vmem:[#allocation8 + $0x158] sm:$0xff]
    %v2137 = vld [vmem:[#allocation8 + $0x160] sm:$0xff]
    %v2138 = vld [vmem:[#allocation8 + $0x168] sm:$0xff]
    %v2139 = vld [vmem:[#allocation8 + $0x170] sm:$0xff]
    %v2140 = vld [vmem:[#allocation8 + $0x178] sm:$0xff]
    %v2141 = vld [vmem:[#allocation8 + $0x180] sm:$0xff]
    %v2142 = vld [vmem:[#allocation8 + $0x188] sm:$0xff]
    %v2143 = vld [vmem:[#allocation8 + $0x190] sm:$0xff]
    %v2144 = vld [vmem:[#allocation8 + $0x198] sm:$0xff]
    %v2145 = vld [vmem:[#allocation8 + $0x1a0] sm:$0xff]
    %v2146 = vld [vmem:[#allocation8 + $0x1a8] sm:$0xff]
    %v2147 = vld [vmem:[#allocation8 + $0x1b0] sm:$0xff]
    %v2148 = vld [vmem:[#allocation8 + $0x1b8] sm:$0xff]
    %v2149 = vld [vmem:[#allocation8 + $0x1c0] sm:$0xff]
    %v2150 = vld [vmem:[#allocation8 + $0x1c8] sm:$0xff]
    %v2151 = vld [vmem:[#allocation8 + $0x1d0] sm:$0xff]
    %v2152 = vld [vmem:[#allocation8 + $0x1d8] sm:$0xff]
    %v2153 = vld [vmem:[#allocation8 + $0x1e0] sm:$0xff]
    %v2154 = vld [vmem:[#allocation8 + $0x1e8] sm:$0xff]
    %v2155 = vld [vmem:[#allocation8 + $0x1f0] sm:$0xff]
    %v2156 = vld [vmem:[#allocation8 + $0x1f8] sm:$0xff]
    %v2157 = vld [vmem:[#allocation8 + $0x200] sm:$0xff]
    %v2158 = vld [vmem:[#allocation8 + $0x208] sm:$0xff]
    %v2159 = vld [vmem:[#allocation8 + $0x210] sm:$0xff]
    %v2160 = vld [vmem:[#allocation8 + $0x218] sm:$0xff]
    %v2161 = vld [vmem:[#allocation8 + $0x220] sm:$0xff]
    %v2162 = vld [vmem:[#allocation8 + $0x228] sm:$0xff]
    %v2163 = vld [vmem:[#allocation8 + $0x230] sm:$0xff]
    %v2164 = vld [vmem:[#allocation8 + $0x238] sm:$0xff]
    %v2165 = vld [vmem:[#allocation8 + $0x240] sm:$0xff]
    %v2166 = vld [vmem:[#allocation8 + $0x248] sm:$0xff]
    %v2167 = vld [vmem:[#allocation8 + $0x250] sm:$0xff]
    %v2168 = vld [vmem:[#allocation8 + $0x258] sm:$0xff]
    %v2169 = vld [vmem:[#allocation8 + $0x260] sm:$0xff]
    %v2170 = vld [vmem:[#allocation8 + $0x268] sm:$0xff]
    %v2171 = vld [vmem:[#allocation8 + $0x270] sm:$0xff]
    %v2172 = vld [vmem:[#allocation8 + $0x278] sm:$0xff]
    %v2173 = vld [vmem:[#allocation8 + $0x280] sm:$0xff]
    %v2174 = vld [vmem:[#allocation8 + $0x288] sm:$0xff]
    %v2175 = vld [vmem:[#allocation8 + $0x290] sm:$0xff]
    %v2176 = vld [vmem:[#allocation8 + $0x298] sm:$0xff]
    %v2177 = vld [vmem:[#allocation8 + $0x2a0] sm:$0xff]
    %v2178 = vld [vmem:[#allocation8 + $0x2a8] sm:$0xff]
    %v2179 = vld [vmem:[#allocation8 + $0x2b0] sm:$0xff]
    %v2180 = vld [vmem:[#allocation8 + $0x2b8] sm:$0xff]
    %v2181 = vld [vmem:[#allocation8 + $0x2c0] sm:$0xff]
    %v2182 = vld [vmem:[#allocation8 + $0x2c8] sm:$0xff]
    %v2183 = vld [vmem:[#allocation8 + $0x2d0] sm:$0xff]
    %v2184 = vld [vmem:[#allocation8 + $0x2d8] sm:$0xff]
    %v2185 = vld [vmem:[#allocation8 + $0x2e0] sm:$0xff]
    %v2186 = vld [vmem:[#allocation8 + $0x2e8] sm:$0xff]
    %v2187 = vld [vmem:[#allocation8 + $0x2f0] sm:$0xff]
    %v2188 = vld [vmem:[#allocation8 + $0x2f8] sm:$0xff]
    %v2189 = vld [vmem:[#allocation8 + $0x300] sm:$0xff]
    %v2190 = vld [vmem:[#allocation8 + $0x308] sm:$0xff]
    %v2191 = vld [vmem:[#allocation8 + $0x310] sm:$0xff]
    %v2192 = vld [vmem:[#allocation8 + $0x318] sm:$0xff]
    %v2193 = vld [vmem:[#allocation8 + $0x320] sm:$0xff]
    %v2194 = vld [vmem:[#allocation8 + $0x328] sm:$0xff]
    %v2195 = vld [vmem:[#allocation8 + $0x330] sm:$0xff]
    %v2196 = vld [vmem:[#allocation8 + $0x338] sm:$0xff]
    %v2197 = vld [vmem:[#allocation8 + $0x340] sm:$0xff]
    %v2198 = vld [vmem:[#allocation8 + $0x348] sm:$0xff]
    %v2199 = vld [vmem:[#allocation8 + $0x350] sm:$0xff]
    %v2200 = vld [vmem:[#allocation8 + $0x358] sm:$0xff]
    %v2201 = vld [vmem:[#allocation8 + $0x360] sm:$0xff]
    %v2202 = vld [vmem:[#allocation8 + $0x368] sm:$0xff]
    %v2203 = vld [vmem:[#allocation8 + $0x370] sm:$0xff]
    %v2204 = vld [vmem:[#allocation8 + $0x378] sm:$0xff]
    %v2205 = vld [vmem:[#allocation8 + $0x380] sm:$0xff]
    %v2206 = vld [vmem:[#allocation8 + $0x388] sm:$0xff]
    %v2207 = vld [vmem:[#allocation8 + $0x390] sm:$0xff]
    %v2208 = vld [vmem:[#allocation8 + $0x398] sm:$0xff]
    %v2209 = vld [vmem:[#allocation8 + $0x3a0] sm:$0xff]
    %v2210 = vld [vmem:[#allocation8 + $0x3a8] sm:$0xff]
    %v2211 = vld [vmem:[#allocation8 + $0x3b0] sm:$0xff]
    %v2212 = vld [vmem:[#allocation8 + $0x3b8] sm:$0xff]
    %v2213 = vld [vmem:[#allocation8 + $0x3c0] sm:$0xff]
    %v2214 = vld [vmem:[#allocation8 + $0x3c8] sm:$0xff]
    %v2215 = vld [vmem:[#allocation8 + $0x3d0] sm:$0xff]
    %v2216 = vld [vmem:[#allocation8 + $0x3d8] sm:$0xff]
    %v2217 = vld [vmem:[#allocation8 + $0x3e0] sm:$0xff]
    %v2218 = vld [vmem:[#allocation8 + $0x3e8] sm:$0xff]
    %v2219 = vld [vmem:[#allocation8 + $0x3f0] sm:$0xff]
    %v2220 = vld [vmem:[#allocation8 + $0x3f8] sm:$0xff]
    %v2221 = vld [vmem:[%s18] sm:$0x3]
    %v2223 = vperm.slane %v2221, 0
    %v2224 = vperm.slane %v2221, 1
    %2227 = vmatpush.msra.mxu0 %v2123
    %2228 = vmatpush.msra.mxu0 %v2121
    %2229 = vmatpush.msra.mxu0 %v2119
    %2230 = vmatpush.msra.mxu0 %v2117
    %2231 = vmatpush.msra.mxu0 %v2115
    %2232 = vmatpush.msra.mxu0 %v2113
    %2233 = vmatpush.msra.mxu0 %v2111
    %2234 = vmatpush.msra.mxu0 %v2109
    %2235 = vmatpush.msra.mxu0 %v2107
    %2236 = vmatpush.msra.mxu0 %v2105
    %2237 = vmatpush.msra.mxu0 %v2103
    %2238 = vmatpush.msra.mxu0 %v2101
    %2239 = vmatpush.msra.mxu0 %v2099
    %2240 = vmatpush.msra.mxu0 %v2097
    %2241 = vmatpush.msra.mxu0 %v2095
    %2242 = vmatpush.msra.mxu0 %v2093
    %2243 = vmatmul.f32.gmra.mxu0 %v2089
    %v2244 = vpop.f32.mrf.mxu0
    %v2245 = vadd.f32 %v2223, %v2244
    %2246 = vdwg.mxu0
    %2247 = vmatpush.msra.mxu0 %v2155
    %2248 = vmatpush.msra.mxu0 %v2153
    %2249 = vmatpush.msra.mxu0 %v2151
    %2250 = vmatpush.msra.mxu0 %v2149
    %2251 = vmatpush.msra.mxu0 %v2147
    %2252 = vmatpush.msra.mxu0 %v2145
    %2253 = vmatpush.msra.mxu0 %v2143
    %2254 = vmatpush.msra.mxu0 %v2141
    %2255 = vmatpush.msra.mxu0 %v2139
    %2256 = vmatpush.msra.mxu0 %v2137
    %2257 = vmatpush.msra.mxu0 %v2135
    %2258 = vmatpush.msra.mxu0 %v2133
    %2259 = vmatpush.msra.mxu0 %v2131
    %2260 = vmatpush.msra.mxu0 %v2129
    %2261 = vmatpush.msra.mxu0 %v2127
    %2262 = vmatpush.msra.mxu0 %v2125
    %2263 = vmatmul.f32.gmra.mxu0 %v2090
    %v2264 = vpop.f32.mrf.mxu0
    %v2265 = vadd.f32 %v2245, %v2264
    %2266 = vdwg.mxu0
    %2267 = vmatpush.msra.mxu0 %v2187
    %2268 = vmatpush.msra.mxu0 %v2185
    %2269 = vmatpush.msra.mxu0 %v2183
    %2270 = vmatpush.msra.mxu0 %v2181
    %2271 = vmatpush.msra.mxu0 %v2179
    %2272 = vmatpush.msra.mxu0 %v2177
    %2273 = vmatpush.msra.mxu0 %v2175
    %2274 = vmatpush.msra.mxu0 %v2173
    %2275 = vmatpush.msra.mxu0 %v2171
    %2276 = vmatpush.msra.mxu0 %v2169
    %2277 = vmatpush.msra.mxu0 %v2167
    %2278 = vmatpush.msra.mxu0 %v2165
    %2279 = vmatpush.msra.mxu0 %v2163
    %2280 = vmatpush.msra.mxu0 %v2161
    %2281 = vmatpush.msra.mxu0 %v2159
    %2282 = vmatpush.msra.mxu0 %v2157
    %2283 = vmatmul.f32.gmra.mxu0 %v2091
    %v2284 = vpop.f32.mrf.mxu0
    %v2285 = vadd.f32 %v2265, %v2284
    %2286 = vdwg.mxu0
    %2287 = vmatpush.msra.mxu0 %v2219
    %2288 = vmatpush.msra.mxu0 %v2217
    %2289 = vmatpush.msra.mxu0 %v2215
    %2290 = vmatpush.msra.mxu0 %v2213
    %2291 = vmatpush.msra.mxu0 %v2211
    %2292 = vmatpush.msra.mxu0 %v2209
    %2293 = vmatpush.msra.mxu0 %v2207
    %2294 = vmatpush.msra.mxu0 %v2205
    %2295 = vmatpush.msra.mxu0 %v2203
    %2296 = vmatpush.msra.mxu0 %v2201
    %2297 = vmatpush.msra.mxu0 %v2199
    %2298 = vmatpush.msra.mxu0 %v2197
    %2299 = vmatpush.msra.mxu0 %v2195
    %2300 = vmatpush.msra.mxu0 %v2193
    %2301 = vmatpush.msra.mxu0 %v2191
    %2302 = vmatpush.msra.mxu0 %v2189
    %2303 = vmatmul.f32.gmra.mxu0 %v2092
    %v2304 = vpop.f32.mrf.mxu0
    %v2305 = vadd.f32 %v2285, %v2304
    %2306 = vdwg.mxu0
    %2307 = vmatpush.msra.mxu0 %v2124
    %2308 = vmatpush.msra.mxu0 %v2122
    %2309 = vmatpush.msra.mxu0 %v2120
    %2310 = vmatpush.msra.mxu0 %v2118
    %2311 = vmatpush.msra.mxu0 %v2116
    %2312 = vmatpush.msra.mxu0 %v2114
    %2313 = vmatpush.msra.mxu0 %v2112
    %2314 = vmatpush.msra.mxu0 %v2110
    %2315 = vmatpush.msra.mxu0 %v2108
    %2316 = vmatpush.msra.mxu0 %v2106
    %2317 = vmatpush.msra.mxu0 %v2104
    %2318 = vmatpush.msra.mxu0 %v2102
    %2319 = vmatpush.msra.mxu0 %v2100
    %2320 = vmatpush.msra.mxu0 %v2098
    %2321 = vmatpush.msra.mxu0 %v2096
    %2322 = vmatpush.msra.mxu0 %v2094
    %2323 = vmatmul.f32.gmra.mxu0 %v2089
    %v2324 = vpop.f32.mrf.mxu0
    %v2325 = vadd.f32 %v2224, %v2324
    %2326 = vdwg.mxu0
    %2327 = vmatpush.msra.mxu0 %v2156
    %2328 = vmatpush.msra.mxu0 %v2154
    %2329 = vmatpush.msra.mxu0 %v2152
    %2330 = vmatpush.msra.mxu0 %v2150
    %2331 = vmatpush.msra.mxu0 %v2148
    %2332 = vmatpush.msra.mxu0 %v2146
    %2333 = vmatpush.msra.mxu0 %v2144
    %2334 = vmatpush.msra.mxu0 %v2142
    %2335 = vmatpush.msra.mxu0 %v2140
    %2336 = vmatpush.msra.mxu0 %v2138
    %2337 = vmatpush.msra.mxu0 %v2136
    %2338 = vmatpush.msra.mxu0 %v2134
    %2339 = vmatpush.msra.mxu0 %v2132
    %2340 = vmatpush.msra.mxu0 %v2130
    %2341 = vmatpush.msra.mxu0 %v2128
    %2342 = vmatpush.msra.mxu0 %v2126
    %2343 = vmatmul.f32.gmra.mxu0 %v2090
    %v2344 = vpop.f32.mrf.mxu0
    %v2345 = vadd.f32 %v2325, %v2344
    %2346 = vdwg.mxu0
    %2347 = vmatpush.msra.mxu0 %v2188
    %2348 = vmatpush.msra.mxu0 %v2186
    %2349 = vmatpush.msra.mxu0 %v2184
    %2350 = vmatpush.msra.mxu0 %v2182
    %2351 = vmatpush.msra.mxu0 %v2180
    %2352 = vmatpush.msra.mxu0 %v2178
    %2353 = vmatpush.msra.mxu0 %v2176
    %2354 = vmatpush.msra.mxu0 %v2174
    %2355 = vmatpush.msra.mxu0 %v2172
    %2356 = vmatpush.msra.mxu0 %v2170
    %2357 = vmatpush.msra.mxu0 %v2168
    %2358 = vmatpush.msra.mxu0 %v2166
    %2359 = vmatpush.msra.mxu0 %v2164
    %2360 = vmatpush.msra.mxu0 %v2162
    %2361 = vmatpush.msra.mxu0 %v2160
    %2362 = vmatpush.msra.mxu0 %v2158
    %2363 = vmatmul.f32.gmra.mxu0 %v2091
    %v2364 = vpop.f32.mrf.mxu0
    %v2365 = vadd.f32 %v2345, %v2364
    %2366 = vdwg.mxu0
    %2367 = vmatpush.msra.mxu0 %v2220
    %2368 = vmatpush.msra.mxu0 %v2218
    %2369 = vmatpush.msra.mxu0 %v2216
    %2370 = vmatpush.msra.mxu0 %v2214
    %2371 = vmatpush.msra.mxu0 %v2212
    %2372 = vmatpush.msra.mxu0 %v2210
    %2373 = vmatpush.msra.mxu0 %v2208
    %2374 = vmatpush.msra.mxu0 %v2206
    %2375 = vmatpush.msra.mxu0 %v2204
    %2376 = vmatpush.msra.mxu0 %v2202
    %2377 = vmatpush.msra.mxu0 %v2200
    %2378 = vmatpush.msra.mxu0 %v2198
    %2379 = vmatpush.msra.mxu0 %v2196
    %2380 = vmatpush.msra.mxu0 %v2194
    %2381 = vmatpush.msra.mxu0 %v2192
    %2382 = vmatpush.msra.mxu0 %v2190
    %2383 = vmatmul.f32.gmra.mxu0 %v2092
    %v2384 = vpop.f32.mrf.mxu0
    %v2385 = vadd.f32 %v2365, %v2384
    %2386 = vdwg.mxu0
    %v2387 = vsub.f32 0.0, %v2305
    %v2388 = vsub.f32 0.0, %v2385
    %v2389 = vmul.f32 %v2387, 1.442695
    %v2390 = vpow.pop %v2389
    %v2391 = vmul.f32 %v2388, 1.442695
    %v2392 = vpow.pop %v2391
    %v2393 = vadd.f32 %v2390, 1.0
    %v2394 = vadd.f32 %v2392, 1.0
    %v2395 = vrcp.pop %v2393
    %v2396 = vmul.f32 %v2393, %v2395
    %v2397 = vsub.f32 1.0, %v2396
    %v2398 = vmul.f32 %v2395, %v2397
    %v2399 = vadd.f32 %v2395, %v2398
    %vm2400 = vweird.f32 %v2393
    %vm2401 = vweird.f32 %v2395
    %vm2402 = vmor %vm2400, %vm2401
    %v2403 = vsel %vm2402, %v2395, %v2399
    %v2404 = vand.u32 2147483647, %v2393
    %vm2405 = vcmp.eq.f32.partialorder %v2404, 8.507059e+37
    %v2406 = vand.u32 %v2393, 2147483648
    %v2407 = vor.u32 1.1754944e-38, %v2406
    %v2408 = vsel %vm2405, %v2407, %v2403
    %v2409 = vrcp.pop %v2394
    %v2410 = vmul.f32 %v2394, %v2409
    %v2411 = vsub.f32 1.0, %v2410
    %v2412 = vmul.f32 %v2409, %v2411
    %v2413 = vadd.f32 %v2409, %v2412
    %vm2414 = vweird.f32 %v2394
    %vm2415 = vweird.f32 %v2409
    %vm2416 = vmor %vm2414, %vm2415
    %v2417 = vsel %vm2416, %v2409, %v2413
    %v2418 = vand.u32 2147483647, %v2394
    %vm2419 = vcmp.eq.f32.partialorder %v2418, 8.507059e+37
    %v2420 = vand.u32 %v2394, 2147483648
    %v2421 = vor.u32 1.1754944e-38, %v2420
    %v2422 = vsel %vm2419, %v2421, %v2417
    %v2425 = vrot.slane %v2422, 6
    %v2426 = vsel %vm338, %v2408, %v2425
    %2428 = vst [vmem:[#allocation10] sm:$0xf] %v2426
    // Predicated region
    $region94: #{tpu_custom_call.1} parent=1 // pred_check
      _
    $region95: #{tpu_custom_call.1} parent=1 // pred_check_branch
      %2430 = sbr.rel (0) target = $region97
    $region96: #{tpu_custom_call.1} parent=1 // pred_region
      %2432 = vsyncadd [#allocation4], 0
      %s2434 = sshll.u32 [#allocation10], 4
      %s2435 = int_to_ptr.vmem [resolvable:$true] %s2434
      %s2436 = sshll.u32 %s19, 4
      %s2437 = int_to_ptr.hbm [resolvable:$true] %s2436
      %2439 = dma.vmem_to_hbm [thread:$0]  %s2435, 64, %s2437, [#allocation4]
    $region97: #{tpu_custom_call.1} parent=1 // pred_fallthru
      _
    // Predicated region
    $region98: #{tpu_custom_call.1} parent=1 // pred_check
      _
    $region99: #{tpu_custom_call.1} parent=1 // pred_check_branch
      %2441 = sbr.rel (0) target = $region101
    $region100: #{tpu_custom_call.1} parent=1 // pred_region
      %2443 = dma.done [#allocation4], 64
    $region101: #{tpu_custom_call.1} parent=1 // pred_fallthru
      _
    %2444 = vsyncpa [#allocation3], 1
    %2445 = vsyncpa [#allocation6], 1
    %2446 = vsyncpa [#allocation9], 1
    %2447 = vsyncpa [#allocation4], 1

</llo_original>
